<compile_context>
chip_gen: v7x
topology: tpu7x:2x2x1
jax: 0.10.0
libtpu: 0.0.40
codegen_flags: <defaults>
</compile_context>

<pallas_src>
import jax
import jax.numpy as jnp
from jax.experimental import pallas as pl
from jax.experimental.pallas import tpu as pltpu

N_IN = 512
N_HID = 512
N_OUT = 256


def triplet_kernel(x1_ref, x2_ref, x3_ref, w1_ref, b1_ref, w2_ref, b2_ref,
                   o1_ref, o2_ref, o3_ref):
    tm = o1_ref.shape[0]

    # Stack the three triplet tiles into one (3*tm, 512) bf16 LHS so the shared
    # weights are pushed through the MXU once per grid step instead of 3x.
    x = jnp.concatenate([x1_ref[...], x2_ref[...], x3_ref[...]], axis=0)

    # fc1: bf16 MXU matmul, f32 accumulation; bias + relu on the f32 accumulator.
    h = jnp.dot(x, w1_ref[...], preferred_element_type=jnp.float32)
    h = jnp.maximum(h + b1_ref[...], 0.0).astype(jnp.bfloat16)
    # dropout(p=0.4) -> identity (inference-mode forward)

    # fc3: bf16 MXU matmul, f32 accumulation.
    out = jnp.dot(h, w2_ref[...], preferred_element_type=jnp.float32)
    out = (out + b2_ref[...]).astype(o1_ref.dtype)

    o1_ref[...] = out[0 * tm:1 * tm]
    o2_ref[...] = out[1 * tm:2 * tm]
    o3_ref[...] = out[2 * tm:3 * tm]


def _choose_batch_tile(b_pad):
    """b_pad is a multiple of 128.  Prefer >= 2 grid steps (so v7x megacore can
    shard the batch axis over both TensorCores) and cap the tile at 1024 rows
    so the double-buffered working set of the fused M=3*tm matmul stays well
    inside v7x's 64 MiB VMEM (trivially fine on v5e/v6e's 128 MiB)."""
    for tm in (1024, 512, 256, 128):
        if b_pad % tm == 0 and b_pad // tm >= 2:
            return tm
    return 128  # b_pad == 128: single grid step


def triplet_net_forward(x1, x2, x3, params):
    """TripletNet.forward: (B,512)x3 -> (B,256)x3 in one fused pallas_call."""
    w1, b1, w2, b2 = params
    B = x1.shape[0]

    # Stream activations in bf16 (producer would emit bf16 in a real pipeline);
    # fp32 master weights are cast once here for the MXU operands.
    x1 = x1.astype(jnp.bfloat16)
    x2 = x2.astype(jnp.bfloat16)
    x3 = x3.astype(jnp.bfloat16)
    w1b = w1.astype(jnp.bfloat16)
    w2b = w2.astype(jnp.bfloat16)

    # Pad the batch to a multiple of 128: MXU/layout-aligned tiles, no
    # full-array fallback block, predictable VMEM use.
    b_pad = max(128, ((B + 127) // 128) * 128)
    if b_pad != B:
        pad = ((0, b_pad - B), (0, 0))
        x1, x2, x3 = (jnp.pad(v, pad) for v in (x1, x2, x3))

    tm = _choose_batch_tile(b_pad)
    grid = (b_pad // tm,)

    x_spec = pl.BlockSpec((tm, N_IN), lambda i: (i, 0))
    o_spec = pl.BlockSpec((tm, N_OUT), lambda i: (i, 0))

    def const_spec(shape):
        # Constant index_map -> weights/biases stay VMEM-resident across all
        # batch tiles.  (Single-buffering them would save ~0.75 MiB; left
        # default-buffered since the working set is well inside budget.)
        return pl.BlockSpec(shape, lambda i: (0, 0))

    flops = 2 * 3 * b_pad * (N_IN * N_HID + N_HID * N_OUT)
    bytes_accessed = (3 * b_pad * N_IN * 2                      # bf16 x1..x3 in
                      + 3 * b_pad * N_OUT * 2                   # bf16 o1..o3 out
                      + (N_IN * N_HID + N_HID * N_OUT) * 2      # bf16 weights
                      + (N_HID + N_OUT) * 4)                    # f32 biases

    o1, o2, o3 = pl.pallas_call(
        triplet_kernel,
        out_shape=tuple(jax.ShapeDtypeStruct((b_pad, N_OUT), jnp.bfloat16)
                        for _ in range(3)),
        grid=grid,
        in_specs=[
            x_spec, x_spec, x_spec,
            const_spec((N_IN, N_HID)),     # w1 (bf16), resident
            const_spec((1, N_HID)),        # b1 (f32)
            const_spec((N_HID, N_OUT)),    # w2 (bf16), resident
            const_spec((1, N_OUT)),        # b2 (f32)
        ],
        out_specs=(o_spec, o_spec, o_spec),
        compiler_params=pltpu.CompilerParams(
            dimension_semantics=("parallel",),
            vmem_limit_bytes=48 * 1024 * 1024),
        cost_estimate=pl.CostEstimate(flops=flops, transcendentals=0,
                                      bytes_accessed=bytes_accessed),
    )(x1, x2, x3, w1b, b1, w2b, b2)

    if b_pad != B:
        o1, o2, o3 = o1[:B], o2[:B], o3[:B]
    return o1, o2, o3


def init_params(key):
    """Kaiming-ish init; fp32 master weights stored (in_features, out_features)."""
    k1, k2 = jax.random.split(key, 2)
    w1 = jax.random.normal(k1, (N_IN, N_HID), jnp.float32) * (2.0 / N_IN) ** 0.5
    b1 = jnp.zeros((1, N_HID), jnp.float32)
    w2 = jax.random.normal(k2, (N_HID, N_OUT), jnp.float32) * (2.0 / N_HID) ** 0.5
    b2 = jnp.zeros((1, N_OUT), jnp.float32)
    return w1, b1, w2, b2


def reference_forward(x1, x2, x3, params):
    """Pure-JAX reference using the same bf16-operand / f32-accum recipe."""
    w1, b1, w2, b2 = params
    w1b = w1.astype(jnp.bfloat16)
    w2b = w2.astype(jnp.bfloat16)

    def emb(x):
        h = jnp.dot(x.astype(jnp.bfloat16), w1b,
                    preferred_element_type=jnp.float32) + b1
        h = jnp.maximum(h, 0.0)
        return jnp.dot(h.astype(jnp.bfloat16), w2b,
                       preferred_element_type=jnp.float32) + b2

    return emb(x1), emb(x2), emb(x3)


if __name__ == "__main__":
    key = jax.random.PRNGKey(0)
    kp, kx1, kx2, kx3 = jax.random.split(key, 4)
    params = init_params(kp)

    B = 2  # small batch per triplet element
    x1 = jax.random.normal(kx1, (B, N_IN), jnp.float32)
    x2 = jax.random.normal(kx2, (B, N_IN), jnp.float32)
    x3 = jax.random.normal(kx3, (B, N_IN), jnp.float32)

    o1, o2, o3 = triplet_net_forward(x1, x2, x3, params)
    jax.block_until_ready((o1, o2, o3))

    r1, r2, r3 = reference_forward(x1, x2, x3, params)
    assert o1.shape == (B, N_OUT) and o2.shape == (B, N_OUT) and o3.shape == (B, N_OUT)
    assert o1.dtype == jnp.bfloat16
    assert jnp.allclose(o1.astype(jnp.float32), r1, atol=5e-2, rtol=5e-2)
    assert jnp.allclose(o2.astype(jnp.float32), r2, atol=5e-2, rtol=5e-2)
    assert jnp.allclose(o3.astype(jnp.float32), r3, atol=5e-2, rtol=5e-2)

    print("KERNEL_OK")
</pallas_src>

<mosaic_0001>
module attributes {stable_mosaic.version = 11 : i64} {
  func.func @triplet_kernel(%arg0: i32, %arg1: memref<128x512xbf16, #tpu.memory_space<vmem>>, %arg2: memref<128x512xbf16, #tpu.memory_space<vmem>>, %arg3: memref<128x512xbf16, #tpu.memory_space<vmem>>, %arg4: memref<512x512xbf16, #tpu.memory_space<vmem>>, %arg5: memref<1x512xf32, #tpu.memory_space<vmem>>, %arg6: memref<512x256xbf16, #tpu.memory_space<vmem>>, %arg7: memref<1x256xf32, #tpu.memory_space<vmem>>, %arg8: memref<128x256xbf16, #tpu.memory_space<vmem>>, %arg9: memref<128x256xbf16, #tpu.memory_space<vmem>>, %arg10: memref<128x256xbf16, #tpu.memory_space<vmem>>) attributes {dimension_semantics = [#tpu.dimension_semantics<parallel>], iteration_bounds = array<i64: 1>, scalar_prefetch = 0 : i64, scratch_operands = 0 : i64, tpu.core_type = #tpu.core_type<tc>, window_params = [{transform_indices = @transform_0, window_bounds = array<i64: 128, 512>}, {transform_indices = @transform_1, window_bounds = array<i64: 128, 512>}, {transform_indices = @transform_2, window_bounds = array<i64: 128, 512>}, {pipeline_mode = #tpu.pipeline_mode<synchronous>, transform_indices = @transform_3, window_bounds = array<i64: 512, 512>}, {pipeline_mode = #tpu.pipeline_mode<synchronous>, transform_indices = @transform_4, window_bounds = array<i64: 1, 512>}, {pipeline_mode = #tpu.pipeline_mode<synchronous>, transform_indices = @transform_5, window_bounds = array<i64: 512, 256>}, {pipeline_mode = #tpu.pipeline_mode<synchronous>, transform_indices = @transform_6, window_bounds = array<i64: 1, 256>}, {transform_indices = @transform_7, window_bounds = array<i64: 128, 256>}, {transform_indices = @transform_8, window_bounds = array<i64: 128, 256>}, {transform_indices = @transform_9, window_bounds = array<i64: 128, 256>}]} {
    %c0 = arith.constant 0 : index
    %c0_0 = arith.constant 0 : index
    %0 = vector.load %arg1[%c0, %c0_0] : memref<128x512xbf16, #tpu.memory_space<vmem>>, vector<128x512xbf16>
    %c0_1 = arith.constant 0 : index
    %c0_2 = arith.constant 0 : index
    %1 = vector.load %arg2[%c0_1, %c0_2] : memref<128x512xbf16, #tpu.memory_space<vmem>>, vector<128x512xbf16>
    %c0_3 = arith.constant 0 : index
    %c0_4 = arith.constant 0 : index
    %2 = vector.load %arg3[%c0_3, %c0_4] : memref<128x512xbf16, #tpu.memory_space<vmem>>, vector<128x512xbf16>
    %3 = tpu.concatenate %0, %1, %2 in 0 : vector<128x512xbf16>, vector<128x512xbf16>, vector<128x512xbf16> -> vector<384x512xbf16>
    %c0_5 = arith.constant 0 : index
    %c0_6 = arith.constant 0 : index
    %4 = vector.load %arg4[%c0_5, %c0_6] : memref<512x512xbf16, #tpu.memory_space<vmem>>, vector<512x512xbf16>
    %cst = arith.constant dense<0.000000e+00> : vector<384x512xf32>
    %5 = tpu.matmul %3, %4, %cst {dimension_numbers = #tpu.dot_dimension_numbers<[1], [0], [0], [1], [0, 0, 1, 1], [], []>} : vector<384x512xbf16>, vector<512x512xbf16>, vector<384x512xf32> -> vector<384x512xf32>
    %c0_7 = arith.constant 0 : index
    %c0_8 = arith.constant 0 : index
    %6 = vector.load %arg5[%c0_7, %c0_8] : memref<1x512xf32, #tpu.memory_space<vmem>>, vector<1x512xf32>
    %7 = vector.broadcast %6 : vector<1x512xf32> to vector<384x512xf32>
    %8 = arith.addf %5, %7 : vector<384x512xf32>
    %cst_9 = arith.constant 0.000000e+00 : f32
    %9 = vector.broadcast %cst_9 : f32 to vector<384x512xf32>
    %10 = arith.maximumf %8, %9 : vector<384x512xf32>
    %11 = arith.truncf %10 : vector<384x512xf32> to vector<384x512xbf16>
    %c0_10 = arith.constant 0 : index
    %c0_11 = arith.constant 0 : index
    %12 = vector.load %arg6[%c0_10, %c0_11] : memref<512x256xbf16, #tpu.memory_space<vmem>>, vector<512x256xbf16>
    %cst_12 = arith.constant dense<0.000000e+00> : vector<384x256xf32>
    %13 = tpu.matmul %11, %12, %cst_12 {dimension_numbers = #tpu.dot_dimension_numbers<[1], [0], [0], [1], [0, 0, 1, 1], [], []>} : vector<384x512xbf16>, vector<512x256xbf16>, vector<384x256xf32> -> vector<384x256xf32>
    %c0_13 = arith.constant 0 : index
    %c0_14 = arith.constant 0 : index
    %14 = vector.load %arg7[%c0_13, %c0_14] : memref<1x256xf32, #tpu.memory_space<vmem>>, vector<1x256xf32>
    %15 = vector.broadcast %14 : vector<1x256xf32> to vector<384x256xf32>
    %16 = arith.addf %13, %15 : vector<384x256xf32>
    %17 = arith.truncf %16 : vector<384x256xf32> to vector<384x256xbf16>
    %18 = vector.extract_strided_slice %17 {offsets = [0, 0], sizes = [128, 256], strides = [1, 1]} : vector<384x256xbf16> to vector<128x256xbf16>
    %c0_15 = arith.constant 0 : index
    %c0_16 = arith.constant 0 : index
    %19 = vector.load %arg8[%c0_15, %c0_16] : memref<128x256xbf16, #tpu.memory_space<vmem>>, vector<128x256xbf16>
    tpu.vector_store %arg8[%c0_15, %c0_16], %18 {strides = array<i32>} : memref<128x256xbf16, #tpu.memory_space<vmem>>, vector<128x256xbf16>,
    %20 = vector.extract_strided_slice %17 {offsets = [128, 0], sizes = [128, 256], strides = [1, 1]} : vector<384x256xbf16> to vector<128x256xbf16>
    %c0_17 = arith.constant 0 : index
    %c0_18 = arith.constant 0 : index
    %21 = vector.load %arg9[%c0_17, %c0_18] : memref<128x256xbf16, #tpu.memory_space<vmem>>, vector<128x256xbf16>
    tpu.vector_store %arg9[%c0_17, %c0_18], %20 {strides = array<i32>} : memref<128x256xbf16, #tpu.memory_space<vmem>>, vector<128x256xbf16>,
    %22 = vector.extract_strided_slice %17 {offsets = [256, 0], sizes = [128, 256], strides = [1, 1]} : vector<384x256xbf16> to vector<128x256xbf16>
    %c0_19 = arith.constant 0 : index
    %c0_20 = arith.constant 0 : index
    %23 = vector.load %arg10[%c0_19, %c0_20] : memref<128x256xbf16, #tpu.memory_space<vmem>>, vector<128x256xbf16>
    tpu.vector_store %arg10[%c0_19, %c0_20], %22 {strides = array<i32>} : memref<128x256xbf16, #tpu.memory_space<vmem>>, vector<128x256xbf16>,
    return
  }
  func.func @transform_0(%arg0: i32) -> (i32, i32) {
    %c0_i32 = arith.constant 0 : i32
    %c0_i32_0 = arith.constant 0 : i32
    return %arg0, %c0_i32 : i32, i32
  }
  func.func @transform_1(%arg0: i32) -> (i32, i32) {
    %c0_i32 = arith.constant 0 : i32
    %c0_i32_0 = arith.constant 0 : i32
    return %arg0, %c0_i32 : i32, i32
  }
  func.func @transform_2(%arg0: i32) -> (i32, i32) {
    %c0_i32 = arith.constant 0 : i32
    %c0_i32_0 = arith.constant 0 : i32
    return %arg0, %c0_i32 : i32, i32
  }
  func.func @transform_3(%arg0: i32) -> (i32, i32) {
    %c0_i32 = arith.constant 0 : i32
    %c0_i32_0 = arith.constant 0 : i32
    %c0_i32_1 = arith.constant 0 : i32
    return %c0_i32, %c0_i32_0 : i32, i32
  }
  func.func @transform_4(%arg0: i32) -> (i32, i32) {
    %c0_i32 = arith.constant 0 : i32
    %c0_i32_0 = arith.constant 0 : i32
    %c0_i32_1 = arith.constant 0 : i32
    return %c0_i32, %c0_i32_0 : i32, i32
  }
  func.func @transform_5(%arg0: i32) -> (i32, i32) {
    %c0_i32 = arith.constant 0 : i32
    %c0_i32_0 = arith.constant 0 : i32
    %c0_i32_1 = arith.constant 0 : i32
    return %c0_i32, %c0_i32_0 : i32, i32
  }
  func.func @transform_6(%arg0: i32) -> (i32, i32) {
    %c0_i32 = arith.constant 0 : i32
    %c0_i32_0 = arith.constant 0 : i32
    %c0_i32_1 = arith.constant 0 : i32
    return %c0_i32, %c0_i32_0 : i32, i32
  }
  func.func @transform_7(%arg0: i32) -> (i32, i32) {
    %c0_i32 = arith.constant 0 : i32
    %c0_i32_0 = arith.constant 0 : i32
    return %arg0, %c0_i32 : i32, i32
  }
  func.func @transform_8(%arg0: i32) -> (i32, i32) {
    %c0_i32 = arith.constant 0 : i32
    %c0_i32_0 = arith.constant 0 : i32
    return %arg0, %c0_i32 : i32, i32
  }
  func.func @transform_9(%arg0: i32) -> (i32, i32) {
    %c0_i32 = arith.constant 0 : i32
    %c0_i32_0 = arith.constant 0 : i32
    return %arg0, %c0_i32 : i32, i32
  }
}

</mosaic_0001>

<llo_original>
// kernel: tpu_custom_call.1
$region0: #{tpu_custom_call.1}
  #allocation0 [shape = 'u32[]', space=smem, size = 0x4, offset = 0x4, fixed_abs, tag = 'smem constant byte address 0x4 - core index']
  #allocation1 [shape = 'u32[144,128]{1,0:T(1,128)}', space=vmem, size = 0x12000, scoped, tag = 'internal scratch']
  %s0 = inlined_call_operand.hbm [shape: bf16[128,512], index: 0, kind: input, shape index: {}]
  %s1 = inlined_call_operand.hbm [shape: bf16[128,512], index: 1, kind: input, shape index: {}]
  %s2 = inlined_call_operand.hbm [shape: bf16[128,512], index: 2, kind: input, shape index: {}]
  %s3 = inlined_call_operand.hbm [shape: bf16[512,512], index: 3, kind: input, shape index: {}]
  %s4 = inlined_call_operand.vmem [shape: f32[1,512], index: 4, kind: input, shape index: {}]
  %s5 = inlined_call_operand.hbm [shape: bf16[512,256], index: 5, kind: input, shape index: {}]
  %s6 = inlined_call_operand.vmem [shape: f32[1,256], index: 6, kind: input, shape index: {}]
  %s7 = inlined_call_operand.hbm [shape: bf16[128,256], index: 7, kind: output, shape index: {0}]
  %s8 = inlined_call_operand.hbm [shape: bf16[128,256], index: 8, kind: output, shape index: {1}]
  %s9 = inlined_call_operand.hbm [shape: bf16[128,256], index: 9, kind: output, shape index: {2}]
  %10 = xla_tuple %s7, %s8, %s9
  %s11 = sld [smem:[#allocation0]]
  $region74: #{tpu_custom_call.1} parent=0
    _
  %s13 = ssub.s32 1, %s11
  %s14 = scalar_select 0, %s13, %s11
  $region1: #{tpu_custom_call.1} parent=0
    #allocation2 [shape = 'u8[131072]{0}', space=vmem, size = 0x20000, scoped, tag = 'input window, operand 0, single buffered']
    #allocation3 [shape = 's32[1]{0}', space=sflag, size = 0x4, scoped, tag = 'scoped memory for tpu_custom_call.1']
    #allocation4 [shape = 's32[1]{0}', space=sflag, size = 0x4, scoped, tag = 'scoped memory for tpu_custom_call.1']
    #allocation5 [shape = 'u8[131072]{0}', space=vmem, size = 0x20000, scoped, tag = 'input window, operand 1, single buffered']
    #allocation6 [shape = 's32[1]{0}', space=sflag, size = 0x4, scoped, tag = 'scoped memory for tpu_custom_call.1']
    #allocation7 [shape = 'u8[131072]{0}', space=vmem, size = 0x20000, scoped, tag = 'input window, operand 2, single buffered']
    #allocation8 [shape = 'u8[524288]{0}', space=vmem, size = 0x80000, scoped, tag = 'input window, operand 3, single buffered']
    #allocation9 [shape = 's32[1]{0}', space=sflag, size = 0x4, scoped, tag = 'scoped memory for tpu_custom_call.1']
    #allocation10 [shape = 'u8[262144]{0}', space=vmem, size = 0x40000, scoped, tag = 'input window, operand 5, single buffered']
    #allocation11 [shape = 'u8[65536]{0}', space=vmem, size = 0x10000, scoped, tag = 'output window, operand 0, single buffered']
    #allocation12 [shape = 'u8[65536]{0}', space=vmem, size = 0x10000, scoped, tag = 'output window, operand 1, single buffered']
    #allocation13 [shape = 's32[1]{0}', space=sflag, size = 0x4, scoped, tag = 'scoped memory for tpu_custom_call.1']
    #allocation14 [shape = 'u8[65536]{0}', space=vmem, size = 0x10000, scoped, tag = 'output window, operand 2, single buffered']
    %15 = vsyncpa [#allocation3], 0
    %16 = vsyncpa [#allocation6], 0
    %17 = vsyncpa [#allocation9], 0
    %18 = vsyncpa [#allocation4], 0
    %19 = vsyncpa [#allocation13], 0
    // Predicated region
    $region2: #{tpu_custom_call.1} parent=1 // pred_check
      _
    $region3: #{tpu_custom_call.1} parent=1 // pred_check_branch
      %21 = sbr.rel (0) target = $region5
    $region4: #{tpu_custom_call.1} parent=1 // pred_region
      %s23 = ssub.s32 4096, 4096
      %24 = vsyncadd [#allocation3], %s23
      %s25 = sshll.u32 [#allocation2], 4
      %s26 = int_to_ptr.vmem [resolvable:$true] %s25
      %31 = dma.hbm_to_vmem [thread:$0]  %s0, 4096, %s26, [#allocation3], 256, 256, 16
    $region5: #{tpu_custom_call.1} parent=1 // pred_fallthru
      _
    // Predicated region
    $region6: #{tpu_custom_call.1} parent=1 // pred_check
      _
    $region7: #{tpu_custom_call.1} parent=1 // pred_check_branch
      %33 = sbr.rel (0) target = $region9
    $region8: #{tpu_custom_call.1} parent=1 // pred_region
      %s35 = ssub.s32 4096, 4096
      %36 = vsyncadd [#allocation6], %s35
      %s37 = sshll.u32 [#allocation5], 4
      %s38 = int_to_ptr.vmem [resolvable:$true] %s37
      %43 = dma.hbm_to_vmem [thread:$0]  %s1, 4096, %s38, [#allocation6], 256, 256, 16
    $region9: #{tpu_custom_call.1} parent=1 // pred_fallthru
      _
    // Predicated region
    $region10: #{tpu_custom_call.1} parent=1 // pred_check
      _
    $region11: #{tpu_custom_call.1} parent=1 // pred_check_branch
      %45 = sbr.rel (0) target = $region13
    $region12: #{tpu_custom_call.1} parent=1 // pred_region
      %s47 = ssub.s32 4096, 4096
      %48 = vsyncadd [#allocation6], %s47
      %s49 = sshll.u32 [#allocation7], 4
      %s50 = int_to_ptr.vmem [resolvable:$true] %s49
      %55 = dma.hbm_to_vmem [thread:$0]  %s2, 4096, %s50, [#allocation6], 256, 256, 16
    $region13: #{tpu_custom_call.1} parent=1 // pred_fallthru
      _
    // Predicated region
    $region14: #{tpu_custom_call.1} parent=1 // pred_check
      _
    $region15: #{tpu_custom_call.1} parent=1 // pred_check_branch
      %57 = sbr.rel (0) target = $region17
    $region16: #{tpu_custom_call.1} parent=1 // pred_region
      %s59 = ssub.s32 16384, 16384
      %60 = vsyncadd [#allocation9], %s59
      %s61 = sshll.u32 [#allocation8], 4
      %s62 = int_to_ptr.vmem [resolvable:$true] %s61
      %67 = dma.hbm_to_vmem [thread:$0]  %s3, 16384, %s62, [#allocation9], 256, 256, 16
    $region17: #{tpu_custom_call.1} parent=1 // pred_fallthru
      _
    // Predicated region
    $region18: #{tpu_custom_call.1} parent=1 // pred_check
      _
    $region19: #{tpu_custom_call.1} parent=1 // pred_check_branch
      %69 = sbr.rel (0) target = $region21
    $region20: #{tpu_custom_call.1} parent=1 // pred_region
      _
    $region21: #{tpu_custom_call.1} parent=1 // pred_fallthru
      _
    // Predicated region
    $region22: #{tpu_custom_call.1} parent=1 // pred_check
      _
    $region23: #{tpu_custom_call.1} parent=1 // pred_check_branch
      %71 = sbr.rel (0) target = $region25
    $region24: #{tpu_custom_call.1} parent=1 // pred_region
      %s73 = ssub.s32 8192, 8192
      %74 = vsyncadd [#allocation9], %s73
      %s75 = sshll.u32 [#allocation10], 4
      %s76 = int_to_ptr.vmem [resolvable:$true] %s75
      %81 = dma.hbm_to_vmem [thread:$0]  %s5, 8192, %s76, [#allocation9], 128, 128, 8
    $region25: #{tpu_custom_call.1} parent=1 // pred_fallthru
      _
    // Predicated region
    $region26: #{tpu_custom_call.1} parent=1 // pred_check
      _
    $region27: #{tpu_custom_call.1} parent=1 // pred_check_branch
      %83 = sbr.rel (0) target = $region29
    $region28: #{tpu_custom_call.1} parent=1 // pred_region
      _
    $region29: #{tpu_custom_call.1} parent=1 // pred_fallthru
      _
    // Predicated region
    $region30: #{tpu_custom_call.1} parent=1 // pred_check
      _
    $region31: #{tpu_custom_call.1} parent=1 // pred_check_branch
      %85 = sbr.rel (0) target = $region33
    $region32: #{tpu_custom_call.1} parent=1 // pred_region
      %86 = dma.done [#allocation3], 4096
    $region33: #{tpu_custom_call.1} parent=1 // pred_fallthru
      _
    // Predicated region
    $region34: #{tpu_custom_call.1} parent=1 // pred_check
      _
    $region35: #{tpu_custom_call.1} parent=1 // pred_check_branch
      %88 = sbr.rel (0) target = $region37
    $region36: #{tpu_custom_call.1} parent=1 // pred_region
      %89 = dma.done [#allocation6], 4096
    $region37: #{tpu_custom_call.1} parent=1 // pred_fallthru
      _
    // Predicated region
    $region38: #{tpu_custom_call.1} parent=1 // pred_check
      _
    $region39: #{tpu_custom_call.1} parent=1 // pred_check_branch
      %91 = sbr.rel (0) target = $region41
    $region40: #{tpu_custom_call.1} parent=1 // pred_region
      %92 = dma.done [#allocation6], 4096
    $region41: #{tpu_custom_call.1} parent=1 // pred_fallthru
      _
    // Predicated region
    $region42: #{tpu_custom_call.1} parent=1 // pred_check
      _
    $region43: #{tpu_custom_call.1} parent=1 // pred_check_branch
      %94 = sbr.rel (0) target = $region45
    $region44: #{tpu_custom_call.1} parent=1 // pred_region
      %95 = dma.done [#allocation9], 16384
    $region45: #{tpu_custom_call.1} parent=1 // pred_fallthru
      _
    // Predicated region
    $region46: #{tpu_custom_call.1} parent=1 // pred_check
      _
    $region47: #{tpu_custom_call.1} parent=1 // pred_check_branch
      %97 = sbr.rel (0) target = $region49
    $region48: #{tpu_custom_call.1} parent=1 // pred_region
      %98 = dma.done [#allocation9], 8192
    $region49: #{tpu_custom_call.1} parent=1 // pred_fallthru
      _
    %v99 = vld [vmem:[#allocation2] sm:$0xff]
    %v100 = vld [vmem:[#allocation2 + $0x8] sm:$0xff]
    %v101 = vld [vmem:[#allocation2 + $0x10] sm:$0xff]
    %v102 = vld [vmem:[#allocation2 + $0x18] sm:$0xff]
    %v103 = vld [vmem:[#allocation2 + $0x20] sm:$0xff]
    %v104 = vld [vmem:[#allocation2 + $0x28] sm:$0xff]
    %v105 = vld [vmem:[#allocation2 + $0x30] sm:$0xff]
    %v106 = vld [vmem:[#allocation2 + $0x38] sm:$0xff]
    %v107 = vld [vmem:[#allocation2 + $0x40] sm:$0xff]
    %v108 = vld [vmem:[#allocation2 + $0x48] sm:$0xff]
    %v109 = vld [vmem:[#allocation2 + $0x50] sm:$0xff]
    %v110 = vld [vmem:[#allocation2 + $0x58] sm:$0xff]
    %v111 = vld [vmem:[#allocation2 + $0x60] sm:$0xff]
    %v112 = vld [vmem:[#allocation2 + $0x68] sm:$0xff]
    %v113 = vld [vmem:[#allocation2 + $0x70] sm:$0xff]
    %v114 = vld [vmem:[#allocation2 + $0x78] sm:$0xff]
    %v115 = vld [vmem:[#allocation2 + $0x80] sm:$0xff]
    %v116 = vld [vmem:[#allocation2 + $0x88] sm:$0xff]
    %v117 = vld [vmem:[#allocation2 + $0x90] sm:$0xff]
    %v118 = vld [vmem:[#allocation2 + $0x98] sm:$0xff]
    %v119 = vld [vmem:[#allocation2 + $0xa0] sm:$0xff]
    %v120 = vld [vmem:[#allocation2 + $0xa8] sm:$0xff]
    %v121 = vld [vmem:[#allocation2 + $0xb0] sm:$0xff]
    %v122 = vld [vmem:[#allocation2 + $0xb8] sm:$0xff]
    %v123 = vld [vmem:[#allocation2 + $0xc0] sm:$0xff]
    %v124 = vld [vmem:[#allocation2 + $0xc8] sm:$0xff]
    %v125 = vld [vmem:[#allocation2 + $0xd0] sm:$0xff]
    %v126 = vld [vmem:[#allocation2 + $0xd8] sm:$0xff]
    %v127 = vld [vmem:[#allocation2 + $0xe0] sm:$0xff]
    %v128 = vld [vmem:[#allocation2 + $0xe8] sm:$0xff]
    %v129 = vld [vmem:[#allocation2 + $0xf0] sm:$0xff]
    %v130 = vld [vmem:[#allocation2 + $0xf8] sm:$0xff]
    %v131 = vld [vmem:[#allocation5] sm:$0xff]
    %v132 = vld [vmem:[#allocation5 + $0x8] sm:$0xff]
    %v133 = vld [vmem:[#allocation5 + $0x10] sm:$0xff]
    %v134 = vld [vmem:[#allocation5 + $0x18] sm:$0xff]
    %v135 = vld [vmem:[#allocation5 + $0x20] sm:$0xff]
    %v136 = vld [vmem:[#allocation5 + $0x28] sm:$0xff]
    %v137 = vld [vmem:[#allocation5 + $0x30] sm:$0xff]
    %v138 = vld [vmem:[#allocation5 + $0x38] sm:$0xff]
    %v139 = vld [vmem:[#allocation5 + $0x40] sm:$0xff]
    %v140 = vld [vmem:[#allocation5 + $0x48] sm:$0xff]
    %v141 = vld [vmem:[#allocation5 + $0x50] sm:$0xff]
    %v142 = vld [vmem:[#allocation5 + $0x58] sm:$0xff]
    %v143 = vld [vmem:[#allocation5 + $0x60] sm:$0xff]
    %v144 = vld [vmem:[#allocation5 + $0x68] sm:$0xff]
    %v145 = vld [vmem:[#allocation5 + $0x70] sm:$0xff]
    %v146 = vld [vmem:[#allocation5 + $0x78] sm:$0xff]
    %v147 = vld [vmem:[#allocation5 + $0x80] sm:$0xff]
    %v148 = vld [vmem:[#allocation5 + $0x88] sm:$0xff]
    %v149 = vld [vmem:[#allocation5 + $0x90] sm:$0xff]
    %v150 = vld [vmem:[#allocation5 + $0x98] sm:$0xff]
    %v151 = vld [vmem:[#allocation5 + $0xa0] sm:$0xff]
    %v152 = vld [vmem:[#allocation5 + $0xa8] sm:$0xff]
    %v153 = vld [vmem:[#allocation5 + $0xb0] sm:$0xff]
    %v154 = vld [vmem:[#allocation5 + $0xb8] sm:$0xff]
    %v155 = vld [vmem:[#allocation5 + $0xc0] sm:$0xff]
    %v156 = vld [vmem:[#allocation5 + $0xc8] sm:$0xff]
    %v157 = vld [vmem:[#allocation5 + $0xd0] sm:$0xff]
    %v158 = vld [vmem:[#allocation5 + $0xd8] sm:$0xff]
    %v159 = vld [vmem:[#allocation5 + $0xe0] sm:$0xff]
    %v160 = vld [vmem:[#allocation5 + $0xe8] sm:$0xff]
    %v161 = vld [vmem:[#allocation5 + $0xf0] sm:$0xff]
    %v162 = vld [vmem:[#allocation5 + $0xf8] sm:$0xff]
    %v163 = vld [vmem:[#allocation7] sm:$0xff]
    %v164 = vld [vmem:[#allocation7 + $0x8] sm:$0xff]
    %v165 = vld [vmem:[#allocation7 + $0x10] sm:$0xff]
    %v166 = vld [vmem:[#allocation7 + $0x18] sm:$0xff]
    %v167 = vld [vmem:[#allocation7 + $0x20] sm:$0xff]
    %v168 = vld [vmem:[#allocation7 + $0x28] sm:$0xff]
    %v169 = vld [vmem:[#allocation7 + $0x30] sm:$0xff]
    %v170 = vld [vmem:[#allocation7 + $0x38] sm:$0xff]
    %v171 = vld [vmem:[#allocation7 + $0x40] sm:$0xff]
    %v172 = vld [vmem:[#allocation7 + $0x48] sm:$0xff]
    %v173 = vld [vmem:[#allocation7 + $0x50] sm:$0xff]
    %v174 = vld [vmem:[#allocation7 + $0x58] sm:$0xff]
    %v175 = vld [vmem:[#allocation7 + $0x60] sm:$0xff]
    %v176 = vld [vmem:[#allocation7 + $0x68] sm:$0xff]
    %v177 = vld [vmem:[#allocation7 + $0x70] sm:$0xff]
    %v178 = vld [vmem:[#allocation7 + $0x78] sm:$0xff]
    %v179 = vld [vmem:[#allocation7 + $0x80] sm:$0xff]
    %v180 = vld [vmem:[#allocation7 + $0x88] sm:$0xff]
    %v181 = vld [vmem:[#allocation7 + $0x90] sm:$0xff]
    %v182 = vld [vmem:[#allocation7 + $0x98] sm:$0xff]
    %v183 = vld [vmem:[#allocation7 + $0xa0] sm:$0xff]
    %v184 = vld [vmem:[#allocation7 + $0xa8] sm:$0xff]
    %v185 = vld [vmem:[#allocation7 + $0xb0] sm:$0xff]
    %v186 = vld [vmem:[#allocation7 + $0xb8] sm:$0xff]
    %v187 = vld [vmem:[#allocation7 + $0xc0] sm:$0xff]
    %v188 = vld [vmem:[#allocation7 + $0xc8] sm:$0xff]
    %v189 = vld [vmem:[#allocation7 + $0xd0] sm:$0xff]
    %v190 = vld [vmem:[#allocation7 + $0xd8] sm:$0xff]
    %v191 = vld [vmem:[#allocation7 + $0xe0] sm:$0xff]
    %v192 = vld [vmem:[#allocation7 + $0xe8] sm:$0xff]
    %v193 = vld [vmem:[#allocation7 + $0xf0] sm:$0xff]
    %v194 = vld [vmem:[#allocation7 + $0xf8] sm:$0xff]
    %v227 = vunpack.c.l.b16 %v99
    %v228 = vunpack.c.h.b16 %v99
    %v229 = vunpack.c.l.b16 %v100
    %v230 = vunpack.c.h.b16 %v100
    %v231 = vunpack.c.l.b16 %v101
    %v232 = vunpack.c.h.b16 %v101
    %v233 = vunpack.c.l.b16 %v102
    %v234 = vunpack.c.h.b16 %v102
    %v235 = vunpack.c.l.b16 %v103
    %v236 = vunpack.c.h.b16 %v103
    %v237 = vunpack.c.l.b16 %v104
    %v238 = vunpack.c.h.b16 %v104
    %v239 = vunpack.c.l.b16 %v105
    %v240 = vunpack.c.h.b16 %v105
    %v241 = vunpack.c.l.b16 %v106
    %v242 = vunpack.c.h.b16 %v106
    %v243 = vunpack.c.l.b16 %v107
    %v244 = vunpack.c.h.b16 %v107
    %v245 = vunpack.c.l.b16 %v108
    %v246 = vunpack.c.h.b16 %v108
    %v247 = vunpack.c.l.b16 %v109
    %v248 = vunpack.c.h.b16 %v109
    %v249 = vunpack.c.l.b16 %v110
    %v250 = vunpack.c.h.b16 %v110
    %v251 = vunpack.c.l.b16 %v111
    %v252 = vunpack.c.h.b16 %v111
    %v253 = vunpack.c.l.b16 %v112
    %v254 = vunpack.c.h.b16 %v112
    %v255 = vunpack.c.l.b16 %v113
    %v256 = vunpack.c.h.b16 %v113
    %v257 = vunpack.c.l.b16 %v114
    %v258 = vunpack.c.h.b16 %v114
    %v259 = vunpack.c.l.b16 %v115
    %v260 = vunpack.c.h.b16 %v115
    %v261 = vunpack.c.l.b16 %v116
    %v262 = vunpack.c.h.b16 %v116
    %v263 = vunpack.c.l.b16 %v117
    %v264 = vunpack.c.h.b16 %v117
    %v265 = vunpack.c.l.b16 %v118
    %v266 = vunpack.c.h.b16 %v118
    %v267 = vunpack.c.l.b16 %v119
    %v268 = vunpack.c.h.b16 %v119
    %v269 = vunpack.c.l.b16 %v120
    %v270 = vunpack.c.h.b16 %v120
    %v271 = vunpack.c.l.b16 %v121
    %v272 = vunpack.c.h.b16 %v121
    %v273 = vunpack.c.l.b16 %v122
    %v274 = vunpack.c.h.b16 %v122
    %v275 = vunpack.c.l.b16 %v123
    %v276 = vunpack.c.h.b16 %v123
    %v277 = vunpack.c.l.b16 %v124
    %v278 = vunpack.c.h.b16 %v124
    %v279 = vunpack.c.l.b16 %v125
    %v280 = vunpack.c.h.b16 %v125
    %v281 = vunpack.c.l.b16 %v126
    %v282 = vunpack.c.h.b16 %v126
    %v283 = vunpack.c.l.b16 %v127
    %v284 = vunpack.c.h.b16 %v127
    %v285 = vunpack.c.l.b16 %v128
    %v286 = vunpack.c.h.b16 %v128
    %v287 = vunpack.c.l.b16 %v129
    %v288 = vunpack.c.h.b16 %v129
    %v289 = vunpack.c.l.b16 %v130
    %v290 = vunpack.c.h.b16 %v130
    %v291 = vpack.c.b16 %v231, %v227
    %v292 = vpack.c.b16 %v232, %v228
    %v293 = vpack.c.b16 %v233, %v229
    %v294 = vpack.c.b16 %v234, %v230
    %v295 = vpack.c.b16 %v239, %v235
    %v296 = vpack.c.b16 %v240, %v236
    %v297 = vpack.c.b16 %v241, %v237
    %v298 = vpack.c.b16 %v242, %v238
    %v299 = vpack.c.b16 %v247, %v243
    %v300 = vpack.c.b16 %v248, %v244
    %v301 = vpack.c.b16 %v249, %v245
    %v302 = vpack.c.b16 %v250, %v246
    %v303 = vpack.c.b16 %v255, %v251
    %v304 = vpack.c.b16 %v256, %v252
    %v305 = vpack.c.b16 %v257, %v253
    %v306 = vpack.c.b16 %v258, %v254
    %v307 = vpack.c.b16 %v263, %v259
    %v308 = vpack.c.b16 %v264, %v260
    %v309 = vpack.c.b16 %v265, %v261
    %v310 = vpack.c.b16 %v266, %v262
    %v311 = vpack.c.b16 %v271, %v267
    %v312 = vpack.c.b16 %v272, %v268
    %v313 = vpack.c.b16 %v273, %v269
    %v314 = vpack.c.b16 %v274, %v270
    %v315 = vpack.c.b16 %v279, %v275
    %v316 = vpack.c.b16 %v280, %v276
    %v317 = vpack.c.b16 %v281, %v277
    %v318 = vpack.c.b16 %v282, %v278
    %v319 = vpack.c.b16 %v287, %v283
    %v320 = vpack.c.b16 %v288, %v284
    %v321 = vpack.c.b16 %v289, %v285
    %v322 = vpack.c.b16 %v290, %v286
    %v387 = vunpack.c.l.b16 %v131
    %v388 = vunpack.c.h.b16 %v131
    %v389 = vunpack.c.l.b16 %v132
    %v390 = vunpack.c.h.b16 %v132
    %v391 = vunpack.c.l.b16 %v133
    %v392 = vunpack.c.h.b16 %v133
    %v393 = vunpack.c.l.b16 %v134
    %v394 = vunpack.c.h.b16 %v134
    %v395 = vunpack.c.l.b16 %v135
    %v396 = vunpack.c.h.b16 %v135
    %v397 = vunpack.c.l.b16 %v136
    %v398 = vunpack.c.h.b16 %v136
    %v399 = vunpack.c.l.b16 %v137
    %v400 = vunpack.c.h.b16 %v137
    %v401 = vunpack.c.l.b16 %v138
    %v402 = vunpack.c.h.b16 %v138
    %v403 = vunpack.c.l.b16 %v139
    %v404 = vunpack.c.h.b16 %v139
    %v405 = vunpack.c.l.b16 %v140
    %v406 = vunpack.c.h.b16 %v140
    %v407 = vunpack.c.l.b16 %v141
    %v408 = vunpack.c.h.b16 %v141
    %v409 = vunpack.c.l.b16 %v142
    %v410 = vunpack.c.h.b16 %v142
    %v411 = vunpack.c.l.b16 %v143
    %v412 = vunpack.c.h.b16 %v143
    %v413 = vunpack.c.l.b16 %v144
    %v414 = vunpack.c.h.b16 %v144
    %v415 = vunpack.c.l.b16 %v145
    %v416 = vunpack.c.h.b16 %v145
    %v417 = vunpack.c.l.b16 %v146
    %v418 = vunpack.c.h.b16 %v146
    %v419 = vunpack.c.l.b16 %v147
    %v420 = vunpack.c.h.b16 %v147
    %v421 = vunpack.c.l.b16 %v148
    %v422 = vunpack.c.h.b16 %v148
    %v423 = vunpack.c.l.b16 %v149
    %v424 = vunpack.c.h.b16 %v149
    %v425 = vunpack.c.l.b16 %v150
    %v426 = vunpack.c.h.b16 %v150
    %v427 = vunpack.c.l.b16 %v151
    %v428 = vunpack.c.h.b16 %v151
    %v429 = vunpack.c.l.b16 %v152
    %v430 = vunpack.c.h.b16 %v152
    %v431 = vunpack.c.l.b16 %v153
    %v432 = vunpack.c.h.b16 %v153
    %v433 = vunpack.c.l.b16 %v154
    %v434 = vunpack.c.h.b16 %v154
    %v435 = vunpack.c.l.b16 %v155
    %v436 = vunpack.c.h.b16 %v155
    %v437 = vunpack.c.l.b16 %v156
    %v438 = vunpack.c.h.b16 %v156
    %v439 = vunpack.c.l.b16 %v157
    %v440 = vunpack.c.h.b16 %v157
    %v441 = vunpack.c.l.b16 %v158
    %v442 = vunpack.c.h.b16 %v158
    %v443 = vunpack.c.l.b16 %v159
    %v444 = vunpack.c.h.b16 %v159
    %v445 = vunpack.c.l.b16 %v160
    %v446 = vunpack.c.h.b16 %v160
    %v447 = vunpack.c.l.b16 %v161
    %v448 = vunpack.c.h.b16 %v161
    %v449 = vunpack.c.l.b16 %v162
    %v450 = vunpack.c.h.b16 %v162
    %v451 = vpack.c.b16 %v391, %v387
    %v452 = vpack.c.b16 %v392, %v388
    %v453 = vpack.c.b16 %v393, %v389
    %v454 = vpack.c.b16 %v394, %v390
    %v455 = vpack.c.b16 %v399, %v395
    %v456 = vpack.c.b16 %v400, %v396
    %v457 = vpack.c.b16 %v401, %v397
    %v458 = vpack.c.b16 %v402, %v398
    %v459 = vpack.c.b16 %v407, %v403
    %v460 = vpack.c.b16 %v408, %v404
    %v461 = vpack.c.b16 %v409, %v405
    %v462 = vpack.c.b16 %v410, %v406
    %v463 = vpack.c.b16 %v415, %v411
    %v464 = vpack.c.b16 %v416, %v412
    %v465 = vpack.c.b16 %v417, %v413
    %v466 = vpack.c.b16 %v418, %v414
    %v467 = vpack.c.b16 %v423, %v419
    %v468 = vpack.c.b16 %v424, %v420
    %v469 = vpack.c.b16 %v425, %v421
    %v470 = vpack.c.b16 %v426, %v422
    %v471 = vpack.c.b16 %v431, %v427
    %v472 = vpack.c.b16 %v432, %v428
    %v473 = vpack.c.b16 %v433, %v429
    %v474 = vpack.c.b16 %v434, %v430
    %v475 = vpack.c.b16 %v439, %v435
    %v476 = vpack.c.b16 %v440, %v436
    %v477 = vpack.c.b16 %v441, %v437
    %v478 = vpack.c.b16 %v442, %v438
    %v479 = vpack.c.b16 %v447, %v443
    %v480 = vpack.c.b16 %v448, %v444
    %v481 = vpack.c.b16 %v449, %v445
    %v482 = vpack.c.b16 %v450, %v446
    %v547 = vunpack.c.l.b16 %v163
    %v548 = vunpack.c.h.b16 %v163
    %v549 = vunpack.c.l.b16 %v164
    %v550 = vunpack.c.h.b16 %v164
    %v551 = vunpack.c.l.b16 %v165
    %v552 = vunpack.c.h.b16 %v165
    %v553 = vunpack.c.l.b16 %v166
    %v554 = vunpack.c.h.b16 %v166
    %v555 = vunpack.c.l.b16 %v167
    %v556 = vunpack.c.h.b16 %v167
    %v557 = vunpack.c.l.b16 %v168
    %v558 = vunpack.c.h.b16 %v168
    %v559 = vunpack.c.l.b16 %v169
    %v560 = vunpack.c.h.b16 %v169
    %v561 = vunpack.c.l.b16 %v170
    %v562 = vunpack.c.h.b16 %v170
    %v563 = vunpack.c.l.b16 %v171
    %v564 = vunpack.c.h.b16 %v171
    %v565 = vunpack.c.l.b16 %v172
    %v566 = vunpack.c.h.b16 %v172
    %v567 = vunpack.c.l.b16 %v173
    %v568 = vunpack.c.h.b16 %v173
    %v569 = vunpack.c.l.b16 %v174
    %v570 = vunpack.c.h.b16 %v174
    %v571 = vunpack.c.l.b16 %v175
    %v572 = vunpack.c.h.b16 %v175
    %v573 = vunpack.c.l.b16 %v176
    %v574 = vunpack.c.h.b16 %v176
    %v575 = vunpack.c.l.b16 %v177
    %v576 = vunpack.c.h.b16 %v177
    %v577 = vunpack.c.l.b16 %v178
    %v578 = vunpack.c.h.b16 %v178
    %v579 = vunpack.c.l.b16 %v179
    %v580 = vunpack.c.h.b16 %v179
    %v581 = vunpack.c.l.b16 %v180
    %v582 = vunpack.c.h.b16 %v180
    %v583 = vunpack.c.l.b16 %v181
    %v584 = vunpack.c.h.b16 %v181
    %v585 = vunpack.c.l.b16 %v182
    %v586 = vunpack.c.h.b16 %v182
    %v587 = vunpack.c.l.b16 %v183
    %v588 = vunpack.c.h.b16 %v183
    %v589 = vunpack.c.l.b16 %v184
    %v590 = vunpack.c.h.b16 %v184
    %v591 = vunpack.c.l.b16 %v185
    %v592 = vunpack.c.h.b16 %v185
    %v593 = vunpack.c.l.b16 %v186
    %v594 = vunpack.c.h.b16 %v186
    %v595 = vunpack.c.l.b16 %v187
    %v596 = vunpack.c.h.b16 %v187
    %v597 = vunpack.c.l.b16 %v188
    %v598 = vunpack.c.h.b16 %v188
    %v599 = vunpack.c.l.b16 %v189
    %v600 = vunpack.c.h.b16 %v189
    %v601 = vunpack.c.l.b16 %v190
    %v602 = vunpack.c.h.b16 %v190
    %v603 = vunpack.c.l.b16 %v191
    %v604 = vunpack.c.h.b16 %v191
    %v605 = vunpack.c.l.b16 %v192
    %v606 = vunpack.c.h.b16 %v192
    %v607 = vunpack.c.l.b16 %v193
    %v608 = vunpack.c.h.b16 %v193
    %v609 = vunpack.c.l.b16 %v194
    %v610 = vunpack.c.h.b16 %v194
    %v611 = vpack.c.b16 %v551, %v547
    %v612 = vpack.c.b16 %v552, %v548
    %v613 = vpack.c.b16 %v553, %v549
    %v614 = vpack.c.b16 %v554, %v550
    %v615 = vpack.c.b16 %v559, %v555
    %v616 = vpack.c.b16 %v560, %v556
    %v617 = vpack.c.b16 %v561, %v557
    %v618 = vpack.c.b16 %v562, %v558
    %v619 = vpack.c.b16 %v567, %v563
    %v620 = vpack.c.b16 %v568, %v564
    %v621 = vpack.c.b16 %v569, %v565
    %v622 = vpack.c.b16 %v570, %v566
    %v623 = vpack.c.b16 %v575, %v571
    %v624 = vpack.c.b16 %v576, %v572
    %v625 = vpack.c.b16 %v577, %v573
    %v626 = vpack.c.b16 %v578, %v574
    %v627 = vpack.c.b16 %v583, %v579
    %v628 = vpack.c.b16 %v584, %v580
    %v629 = vpack.c.b16 %v585, %v581
    %v630 = vpack.c.b16 %v586, %v582
    %v631 = vpack.c.b16 %v591, %v587
    %v632 = vpack.c.b16 %v592, %v588
    %v633 = vpack.c.b16 %v593, %v589
    %v634 = vpack.c.b16 %v594, %v590
    %v635 = vpack.c.b16 %v599, %v595
    %v636 = vpack.c.b16 %v600, %v596
    %v637 = vpack.c.b16 %v601, %v597
    %v638 = vpack.c.b16 %v602, %v598
    %v639 = vpack.c.b16 %v607, %v603
    %v640 = vpack.c.b16 %v608, %v604
    %v641 = vpack.c.b16 %v609, %v605
    %v642 = vpack.c.b16 %v610, %v606
    %v675 = vld [vmem:[#allocation8] sm:$0xff]
    %v676 = vld [vmem:[#allocation8 + $0x8] sm:$0xff]
    %v677 = vld [vmem:[#allocation8 + $0x10] sm:$0xff]
    %v678 = vld [vmem:[#allocation8 + $0x18] sm:$0xff]
    %v679 = vld [vmem:[#allocation8 + $0x20] sm:$0xff]
    %v680 = vld [vmem:[#allocation8 + $0x28] sm:$0xff]
    %v681 = vld [vmem:[#allocation8 + $0x30] sm:$0xff]
    %v682 = vld [vmem:[#allocation8 + $0x38] sm:$0xff]
    %v683 = vld [vmem:[#allocation8 + $0x40] sm:$0xff]
    %v684 = vld [vmem:[#allocation8 + $0x48] sm:$0xff]
    %v685 = vld [vmem:[#allocation8 + $0x50] sm:$0xff]
    %v686 = vld [vmem:[#allocation8 + $0x58] sm:$0xff]
    %v687 = vld [vmem:[#allocation8 + $0x60] sm:$0xff]
    %v688 = vld [vmem:[#allocation8 + $0x68] sm:$0xff]
    %v689 = vld [vmem:[#allocation8 + $0x70] sm:$0xff]
    %v690 = vld [vmem:[#allocation8 + $0x78] sm:$0xff]
    %v691 = vld [vmem:[#allocation8 + $0x80] sm:$0xff]
    %v692 = vld [vmem:[#allocation8 + $0x88] sm:$0xff]
    %v693 = vld [vmem:[#allocation8 + $0x90] sm:$0xff]
    %v694 = vld [vmem:[#allocation8 + $0x98] sm:$0xff]
    %v695 = vld [vmem:[#allocation8 + $0xa0] sm:$0xff]
    %v696 = vld [vmem:[#allocation8 + $0xa8] sm:$0xff]
    %v697 = vld [vmem:[#allocation8 + $0xb0] sm:$0xff]
    %v698 = vld [vmem:[#allocation8 + $0xb8] sm:$0xff]
    %v699 = vld [vmem:[#allocation8 + $0xc0] sm:$0xff]
    %v700 = vld [vmem:[#allocation8 + $0xc8] sm:$0xff]
    %v701 = vld [vmem:[#allocation8 + $0xd0] sm:$0xff]
    %v702 = vld [vmem:[#allocation8 + $0xd8] sm:$0xff]
    %v703 = vld [vmem:[#allocation8 + $0xe0] sm:$0xff]
    %v704 = vld [vmem:[#allocation8 + $0xe8] sm:$0xff]
    %v705 = vld [vmem:[#allocation8 + $0xf0] sm:$0xff]
    %v706 = vld [vmem:[#allocation8 + $0xf8] sm:$0xff]
    %v707 = vld [vmem:[#allocation8 + $0x100] sm:$0xff]
    %v708 = vld [vmem:[#allocation8 + $0x108] sm:$0xff]
    %v709 = vld [vmem:[#allocation8 + $0x110] sm:$0xff]
    %v710 = vld [vmem:[#allocation8 + $0x118] sm:$0xff]
    %v711 = vld [vmem:[#allocation8 + $0x120] sm:$0xff]
    %v712 = vld [vmem:[#allocation8 + $0x128] sm:$0xff]
    %v713 = vld [vmem:[#allocation8 + $0x130] sm:$0xff]
    %v714 = vld [vmem:[#allocation8 + $0x138] sm:$0xff]
    %v715 = vld [vmem:[#allocation8 + $0x140] sm:$0xff]
    %v716 = vld [vmem:[#allocation8 + $0x148] sm:$0xff]
    %v717 = vld [vmem:[#allocation8 + $0x150] sm:$0xff]
    %v718 = vld [vmem:[#allocation8 + $0x158] sm:$0xff]
    %v719 = vld [vmem:[#allocation8 + $0x160] sm:$0xff]
    %v720 = vld [vmem:[#allocation8 + $0x168] sm:$0xff]
    %v721 = vld [vmem:[#allocation8 + $0x170] sm:$0xff]
    %v722 = vld [vmem:[#allocation8 + $0x178] sm:$0xff]
    %v723 = vld [vmem:[#allocation8 + $0x180] sm:$0xff]
    %v724 = vld [vmem:[#allocation8 + $0x188] sm:$0xff]
    %v725 = vld [vmem:[#allocation8 + $0x190] sm:$0xff]
    %v726 = vld [vmem:[#allocation8 + $0x198] sm:$0xff]
    %v727 = vld [vmem:[#allocation8 + $0x1a0] sm:$0xff]
    %v728 = vld [vmem:[#allocation8 + $0x1a8] sm:$0xff]
    %v729 = vld [vmem:[#allocation8 + $0x1b0] sm:$0xff]
    %v730 = vld [vmem:[#allocation8 + $0x1b8] sm:$0xff]
    %v731 = vld [vmem:[#allocation8 + $0x1c0] sm:$0xff]
    %v732 = vld [vmem:[#allocation8 + $0x1c8] sm:$0xff]
    %v733 = vld [vmem:[#allocation8 + $0x1d0] sm:$0xff]
    %v734 = vld [vmem:[#allocation8 + $0x1d8] sm:$0xff]
    %v735 = vld [vmem:[#allocation8 + $0x1e0] sm:$0xff]
    %v736 = vld [vmem:[#allocation8 + $0x1e8] sm:$0xff]
    %v737 = vld [vmem:[#allocation8 + $0x1f0] sm:$0xff]
    %v738 = vld [vmem:[#allocation8 + $0x1f8] sm:$0xff]
    %v739 = vld [vmem:[#allocation8 + $0x200] sm:$0xff]
    %v740 = vld [vmem:[#allocation8 + $0x208] sm:$0xff]
    %v741 = vld [vmem:[#allocation8 + $0x210] sm:$0xff]
    %v742 = vld [vmem:[#allocation8 + $0x218] sm:$0xff]
    %v743 = vld [vmem:[#allocation8 + $0x220] sm:$0xff]
    %v744 = vld [vmem:[#allocation8 + $0x228] sm:$0xff]
    %v745 = vld [vmem:[#allocation8 + $0x230] sm:$0xff]
    %v746 = vld [vmem:[#allocation8 + $0x238] sm:$0xff]
    %v747 = vld [vmem:[#allocation8 + $0x240] sm:$0xff]
    %v748 = vld [vmem:[#allocation8 + $0x248] sm:$0xff]
    %v749 = vld [vmem:[#allocation8 + $0x250] sm:$0xff]
    %v750 = vld [vmem:[#allocation8 + $0x258] sm:$0xff]
    %v751 = vld [vmem:[#allocation8 + $0x260] sm:$0xff]
    %v752 = vld [vmem:[#allocation8 + $0x268] sm:$0xff]
    %v753 = vld [vmem:[#allocation8 + $0x270] sm:$0xff]
    %v754 = vld [vmem:[#allocation8 + $0x278] sm:$0xff]
    %v755 = vld [vmem:[#allocation8 + $0x280] sm:$0xff]
    %v756 = vld [vmem:[#allocation8 + $0x288] sm:$0xff]
    %v757 = vld [vmem:[#allocation8 + $0x290] sm:$0xff]
    %v758 = vld [vmem:[#allocation8 + $0x298] sm:$0xff]
    %v759 = vld [vmem:[#allocation8 + $0x2a0] sm:$0xff]
    %v760 = vld [vmem:[#allocation8 + $0x2a8] sm:$0xff]
    %v761 = vld [vmem:[#allocation8 + $0x2b0] sm:$0xff]
    %v762 = vld [vmem:[#allocation8 + $0x2b8] sm:$0xff]
    %v763 = vld [vmem:[#allocation8 + $0x2c0] sm:$0xff]
    %v764 = vld [vmem:[#allocation8 + $0x2c8] sm:$0xff]
    %v765 = vld [vmem:[#allocation8 + $0x2d0] sm:$0xff]
    %v766 = vld [vmem:[#allocation8 + $0x2d8] sm:$0xff]
    %v767 = vld [vmem:[#allocation8 + $0x2e0] sm:$0xff]
    %v768 = vld [vmem:[#allocation8 + $0x2e8] sm:$0xff]
    %v769 = vld [vmem:[#allocation8 + $0x2f0] sm:$0xff]
    %v770 = vld [vmem:[#allocation8 + $0x2f8] sm:$0xff]
    %v771 = vld [vmem:[#allocation8 + $0x300] sm:$0xff]
    %v772 = vld [vmem:[#allocation8 + $0x308] sm:$0xff]
    %v773 = vld [vmem:[#allocation8 + $0x310] sm:$0xff]
    %v774 = vld [vmem:[#allocation8 + $0x318] sm:$0xff]
    %v775 = vld [vmem:[#allocation8 + $0x320] sm:$0xff]
    %v776 = vld [vmem:[#allocation8 + $0x328] sm:$0xff]
    %v777 = vld [vmem:[#allocation8 + $0x330] sm:$0xff]
    %v778 = vld [vmem:[#allocation8 + $0x338] sm:$0xff]
    %v779 = vld [vmem:[#allocation8 + $0x340] sm:$0xff]
    %v780 = vld [vmem:[#allocation8 + $0x348] sm:$0xff]
    %v781 = vld [vmem:[#allocation8 + $0x350] sm:$0xff]
    %v782 = vld [vmem:[#allocation8 + $0x358] sm:$0xff]
    %v783 = vld [vmem:[#allocation8 + $0x360] sm:$0xff]
    %v784 = vld [vmem:[#allocation8 + $0x368] sm:$0xff]
    %v785 = vld [vmem:[#allocation8 + $0x370] sm:$0xff]
    %v786 = vld [vmem:[#allocation8 + $0x378] sm:$0xff]
    %v787 = vld [vmem:[#allocation8 + $0x380] sm:$0xff]
    %v788 = vld [vmem:[#allocation8 + $0x388] sm:$0xff]
    %v789 = vld [vmem:[#allocation8 + $0x390] sm:$0xff]
    %v790 = vld [vmem:[#allocation8 + $0x398] sm:$0xff]
    %v791 = vld [vmem:[#allocation8 + $0x3a0] sm:$0xff]
    %v792 = vld [vmem:[#allocation8 + $0x3a8] sm:$0xff]
    %v793 = vld [vmem:[#allocation8 + $0x3b0] sm:$0xff]
    %v794 = vld [vmem:[#allocation8 + $0x3b8] sm:$0xff]
    %v795 = vld [vmem:[#allocation8 + $0x3c0] sm:$0xff]
    %v796 = vld [vmem:[#allocation8 + $0x3c8] sm:$0xff]
    %v797 = vld [vmem:[#allocation8 + $0x3d0] sm:$0xff]
    %v798 = vld [vmem:[#allocation8 + $0x3d8] sm:$0xff]
    %v799 = vld [vmem:[#allocation8 + $0x3e0] sm:$0xff]
    %v800 = vld [vmem:[#allocation8 + $0x3e8] sm:$0xff]
    %v801 = vld [vmem:[#allocation8 + $0x3f0] sm:$0xff]
    %v802 = vld [vmem:[#allocation8 + $0x3f8] sm:$0xff]
    %v803 = vld [vmem:[%s4] sm:$0xf]
    %v805 = vlaneseq
    %v806 = vshrl.u32 %v805, 7
    %v807 = vsub.s32 0, %v806
    %v808 = vrot.slane %v803, %v807
    %v809 = vlaneseq
    %v810 = vshrl.u32 %v809, 7
    %v811 = vsub.s32 1, %v810
    %v812 = vrot.slane %v803, %v811
    %v813 = vlaneseq
    %v814 = vshrl.u32 %v813, 7
    %v815 = vsub.s32 2, %v814
    %v816 = vrot.slane %v803, %v815
    %v817 = vlaneseq
    %v818 = vshrl.u32 %v817, 7
    %v819 = vsub.s32 3, %v818
    %v820 = vrot.slane %v803, %v819
    %v953 = vunpack.c.l.b16 %v675
    %v954 = vunpack.c.h.b16 %v675
    %v955 = vunpack.c.l.b16 %v676
    %v956 = vunpack.c.h.b16 %v676
    %v957 = vunpack.c.l.b16 %v677
    %v958 = vunpack.c.h.b16 %v677
    %v959 = vunpack.c.l.b16 %v678
    %v960 = vunpack.c.h.b16 %v678
    %v961 = vunpack.c.l.b16 %v679
    %v962 = vunpack.c.h.b16 %v679
    %v963 = vunpack.c.l.b16 %v680
    %v964 = vunpack.c.h.b16 %v680
    %v965 = vunpack.c.l.b16 %v681
    %v966 = vunpack.c.h.b16 %v681
    %v967 = vunpack.c.l.b16 %v682
    %v968 = vunpack.c.h.b16 %v682
    %v969 = vunpack.c.l.b16 %v683
    %v970 = vunpack.c.h.b16 %v683
    %v971 = vunpack.c.l.b16 %v684
    %v972 = vunpack.c.h.b16 %v684
    %v973 = vunpack.c.l.b16 %v685
    %v974 = vunpack.c.h.b16 %v685
    %v975 = vunpack.c.l.b16 %v686
    %v976 = vunpack.c.h.b16 %v686
    %v977 = vunpack.c.l.b16 %v687
    %v978 = vunpack.c.h.b16 %v687
    %v979 = vunpack.c.l.b16 %v688
    %v980 = vunpack.c.h.b16 %v688
    %v981 = vunpack.c.l.b16 %v689
    %v982 = vunpack.c.h.b16 %v689
    %v983 = vunpack.c.l.b16 %v690
    %v984 = vunpack.c.h.b16 %v690
    %v985 = vunpack.c.l.b16 %v691
    %v986 = vunpack.c.h.b16 %v691
    %v987 = vunpack.c.l.b16 %v692
    %v988 = vunpack.c.h.b16 %v692
    %v989 = vunpack.c.l.b16 %v693
    %v990 = vunpack.c.h.b16 %v693
    %v991 = vunpack.c.l.b16 %v694
    %v992 = vunpack.c.h.b16 %v694
    %v993 = vunpack.c.l.b16 %v695
    %v994 = vunpack.c.h.b16 %v695
    %v995 = vunpack.c.l.b16 %v696
    %v996 = vunpack.c.h.b16 %v696
    %v997 = vunpack.c.l.b16 %v697
    %v998 = vunpack.c.h.b16 %v697
    %v999 = vunpack.c.l.b16 %v698
    %v1000 = vunpack.c.h.b16 %v698
    %v1001 = vunpack.c.l.b16 %v699
    %v1002 = vunpack.c.h.b16 %v699
    %v1003 = vunpack.c.l.b16 %v700
    %v1004 = vunpack.c.h.b16 %v700
    %v1005 = vunpack.c.l.b16 %v701
    %v1006 = vunpack.c.h.b16 %v701
    %v1007 = vunpack.c.l.b16 %v702
    %v1008 = vunpack.c.h.b16 %v702
    %v1009 = vunpack.c.l.b16 %v703
    %v1010 = vunpack.c.h.b16 %v703
    %v1011 = vunpack.c.l.b16 %v704
    %v1012 = vunpack.c.h.b16 %v704
    %v1013 = vunpack.c.l.b16 %v705
    %v1014 = vunpack.c.h.b16 %v705
    %v1015 = vunpack.c.l.b16 %v706
    %v1016 = vunpack.c.h.b16 %v706
    %v1017 = vunpack.c.l.b16 %v707
    %v1018 = vunpack.c.h.b16 %v707
    %v1019 = vunpack.c.l.b16 %v708
    %v1020 = vunpack.c.h.b16 %v708
    %v1021 = vunpack.c.l.b16 %v709
    %v1022 = vunpack.c.h.b16 %v709
    %v1023 = vunpack.c.l.b16 %v710
    %v1024 = vunpack.c.h.b16 %v710
    %v1025 = vunpack.c.l.b16 %v711
    %v1026 = vunpack.c.h.b16 %v711
    %v1027 = vunpack.c.l.b16 %v712
    %v1028 = vunpack.c.h.b16 %v712
    %v1029 = vunpack.c.l.b16 %v713
    %v1030 = vunpack.c.h.b16 %v713
    %v1031 = vunpack.c.l.b16 %v714
    %v1032 = vunpack.c.h.b16 %v714
    %v1033 = vunpack.c.l.b16 %v715
    %v1034 = vunpack.c.h.b16 %v715
    %v1035 = vunpack.c.l.b16 %v716
    %v1036 = vunpack.c.h.b16 %v716
    %v1037 = vunpack.c.l.b16 %v717
    %v1038 = vunpack.c.h.b16 %v717
    %v1039 = vunpack.c.l.b16 %v718
    %v1040 = vunpack.c.h.b16 %v718
    %v1041 = vunpack.c.l.b16 %v719
    %v1042 = vunpack.c.h.b16 %v719
    %v1043 = vunpack.c.l.b16 %v720
    %v1044 = vunpack.c.h.b16 %v720
    %v1045 = vunpack.c.l.b16 %v721
    %v1046 = vunpack.c.h.b16 %v721
    %v1047 = vunpack.c.l.b16 %v722
    %v1048 = vunpack.c.h.b16 %v722
    %v1049 = vunpack.c.l.b16 %v723
    %v1050 = vunpack.c.h.b16 %v723
    %v1051 = vunpack.c.l.b16 %v724
    %v1052 = vunpack.c.h.b16 %v724
    %v1053 = vunpack.c.l.b16 %v725
    %v1054 = vunpack.c.h.b16 %v725
    %v1055 = vunpack.c.l.b16 %v726
    %v1056 = vunpack.c.h.b16 %v726
    %v1057 = vunpack.c.l.b16 %v727
    %v1058 = vunpack.c.h.b16 %v727
    %v1059 = vunpack.c.l.b16 %v728
    %v1060 = vunpack.c.h.b16 %v728
    %v1061 = vunpack.c.l.b16 %v729
    %v1062 = vunpack.c.h.b16 %v729
    %v1063 = vunpack.c.l.b16 %v730
    %v1064 = vunpack.c.h.b16 %v730
    %v1065 = vunpack.c.l.b16 %v731
    %v1066 = vunpack.c.h.b16 %v731
    %v1067 = vunpack.c.l.b16 %v732
    %v1068 = vunpack.c.h.b16 %v732
    %v1069 = vunpack.c.l.b16 %v733
    %v1070 = vunpack.c.h.b16 %v733
    %v1071 = vunpack.c.l.b16 %v734
    %v1072 = vunpack.c.h.b16 %v734
    %v1073 = vunpack.c.l.b16 %v735
    %v1074 = vunpack.c.h.b16 %v735
    %v1075 = vunpack.c.l.b16 %v736
    %v1076 = vunpack.c.h.b16 %v736
    %v1077 = vunpack.c.l.b16 %v737
    %v1078 = vunpack.c.h.b16 %v737
    %v1079 = vunpack.c.l.b16 %v738
    %v1080 = vunpack.c.h.b16 %v738
    %v1081 = vunpack.c.l.b16 %v739
    %v1082 = vunpack.c.h.b16 %v739
    %v1083 = vunpack.c.l.b16 %v740
    %v1084 = vunpack.c.h.b16 %v740
    %v1085 = vunpack.c.l.b16 %v741
    %v1086 = vunpack.c.h.b16 %v741
    %v1087 = vunpack.c.l.b16 %v742
    %v1088 = vunpack.c.h.b16 %v742
    %v1089 = vunpack.c.l.b16 %v743
    %v1090 = vunpack.c.h.b16 %v743
    %v1091 = vunpack.c.l.b16 %v744
    %v1092 = vunpack.c.h.b16 %v744
    %v1093 = vunpack.c.l.b16 %v745
    %v1094 = vunpack.c.h.b16 %v745
    %v1095 = vunpack.c.l.b16 %v746
    %v1096 = vunpack.c.h.b16 %v746
    %v1097 = vunpack.c.l.b16 %v747
    %v1098 = vunpack.c.h.b16 %v747
    %v1099 = vunpack.c.l.b16 %v748
    %v1100 = vunpack.c.h.b16 %v748
    %v1101 = vunpack.c.l.b16 %v749
    %v1102 = vunpack.c.h.b16 %v749
    %v1103 = vunpack.c.l.b16 %v750
    %v1104 = vunpack.c.h.b16 %v750
    %v1105 = vunpack.c.l.b16 %v751
    %v1106 = vunpack.c.h.b16 %v751
    %v1107 = vunpack.c.l.b16 %v752
    %v1108 = vunpack.c.h.b16 %v752
    %v1109 = vunpack.c.l.b16 %v753
    %v1110 = vunpack.c.h.b16 %v753
    %v1111 = vunpack.c.l.b16 %v754
    %v1112 = vunpack.c.h.b16 %v754
    %v1113 = vunpack.c.l.b16 %v755
    %v1114 = vunpack.c.h.b16 %v755
    %v1115 = vunpack.c.l.b16 %v756
    %v1116 = vunpack.c.h.b16 %v756
    %v1117 = vunpack.c.l.b16 %v757
    %v1118 = vunpack.c.h.b16 %v757
    %v1119 = vunpack.c.l.b16 %v758
    %v1120 = vunpack.c.h.b16 %v758
    %v1121 = vunpack.c.l.b16 %v759
    %v1122 = vunpack.c.h.b16 %v759
    %v1123 = vunpack.c.l.b16 %v760
    %v1124 = vunpack.c.h.b16 %v760
    %v1125 = vunpack.c.l.b16 %v761
    %v1126 = vunpack.c.h.b16 %v761
    %v1127 = vunpack.c.l.b16 %v762
    %v1128 = vunpack.c.h.b16 %v762
    %v1129 = vunpack.c.l.b16 %v763
    %v1130 = vunpack.c.h.b16 %v763
    %v1131 = vunpack.c.l.b16 %v764
    %v1132 = vunpack.c.h.b16 %v764
    %v1133 = vunpack.c.l.b16 %v765
    %v1134 = vunpack.c.h.b16 %v765
    %v1135 = vunpack.c.l.b16 %v766
    %v1136 = vunpack.c.h.b16 %v766
    %v1137 = vunpack.c.l.b16 %v767
    %v1138 = vunpack.c.h.b16 %v767
    %v1139 = vunpack.c.l.b16 %v768
    %v1140 = vunpack.c.h.b16 %v768
    %v1141 = vunpack.c.l.b16 %v769
    %v1142 = vunpack.c.h.b16 %v769
    %v1143 = vunpack.c.l.b16 %v770
    %v1144 = vunpack.c.h.b16 %v770
    %v1145 = vunpack.c.l.b16 %v771
    %v1146 = vunpack.c.h.b16 %v771
    %v1147 = vunpack.c.l.b16 %v772
    %v1148 = vunpack.c.h.b16 %v772
    %v1149 = vunpack.c.l.b16 %v773
    %v1150 = vunpack.c.h.b16 %v773
    %v1151 = vunpack.c.l.b16 %v774
    %v1152 = vunpack.c.h.b16 %v774
    %v1153 = vunpack.c.l.b16 %v775
    %v1154 = vunpack.c.h.b16 %v775
    %v1155 = vunpack.c.l.b16 %v776
    %v1156 = vunpack.c.h.b16 %v776
    %v1157 = vunpack.c.l.b16 %v777
    %v1158 = vunpack.c.h.b16 %v777
    %v1159 = vunpack.c.l.b16 %v778
    %v1160 = vunpack.c.h.b16 %v778
    %v1161 = vunpack.c.l.b16 %v779
    %v1162 = vunpack.c.h.b16 %v779
    %v1163 = vunpack.c.l.b16 %v780
    %v1164 = vunpack.c.h.b16 %v780
    %v1165 = vunpack.c.l.b16 %v781
    %v1166 = vunpack.c.h.b16 %v781
    %v1167 = vunpack.c.l.b16 %v782
    %v1168 = vunpack.c.h.b16 %v782
    %v1169 = vunpack.c.l.b16 %v783
    %v1170 = vunpack.c.h.b16 %v783
    %v1171 = vunpack.c.l.b16 %v784
    %v1172 = vunpack.c.h.b16 %v784
    %v1173 = vunpack.c.l.b16 %v785
    %v1174 = vunpack.c.h.b16 %v785
    %v1175 = vunpack.c.l.b16 %v786
    %v1176 = vunpack.c.h.b16 %v786
    %v1177 = vunpack.c.l.b16 %v787
    %v1178 = vunpack.c.h.b16 %v787
    %v1179 = vunpack.c.l.b16 %v788
    %v1180 = vunpack.c.h.b16 %v788
    %v1181 = vunpack.c.l.b16 %v789
    %v1182 = vunpack.c.h.b16 %v789
    %v1183 = vunpack.c.l.b16 %v790
    %v1184 = vunpack.c.h.b16 %v790
    %v1185 = vunpack.c.l.b16 %v791
    %v1186 = vunpack.c.h.b16 %v791
    %v1187 = vunpack.c.l.b16 %v792
    %v1188 = vunpack.c.h.b16 %v792
    %v1189 = vunpack.c.l.b16 %v793
    %v1190 = vunpack.c.h.b16 %v793
    %v1191 = vunpack.c.l.b16 %v794
    %v1192 = vunpack.c.h.b16 %v794
    %v1193 = vunpack.c.l.b16 %v795
    %v1194 = vunpack.c.h.b16 %v795
    %v1195 = vunpack.c.l.b16 %v796
    %v1196 = vunpack.c.h.b16 %v796
    %v1197 = vunpack.c.l.b16 %v797
    %v1198 = vunpack.c.h.b16 %v797
    %v1199 = vunpack.c.l.b16 %v798
    %v1200 = vunpack.c.h.b16 %v798
    %v1201 = vunpack.c.l.b16 %v799
    %v1202 = vunpack.c.h.b16 %v799
    %v1203 = vunpack.c.l.b16 %v800
    %v1204 = vunpack.c.h.b16 %v800
    %v1205 = vunpack.c.l.b16 %v801
    %v1206 = vunpack.c.h.b16 %v801
    %v1207 = vunpack.c.l.b16 %v802
    %v1208 = vunpack.c.h.b16 %v802
    %v1209 = vpack.c.b16 %v957, %v953
    %v1210 = vpack.c.b16 %v958, %v954
    %v1211 = vpack.c.b16 %v959, %v955
    %v1212 = vpack.c.b16 %v960, %v956
    %v1213 = vpack.c.b16 %v965, %v961
    %v1214 = vpack.c.b16 %v966, %v962
    %v1215 = vpack.c.b16 %v967, %v963
    %v1216 = vpack.c.b16 %v968, %v964
    %v1217 = vpack.c.b16 %v973, %v969
    %v1218 = vpack.c.b16 %v974, %v970
    %v1219 = vpack.c.b16 %v975, %v971
    %v1220 = vpack.c.b16 %v976, %v972
    %v1221 = vpack.c.b16 %v981, %v977
    %v1222 = vpack.c.b16 %v982, %v978
    %v1223 = vpack.c.b16 %v983, %v979
    %v1224 = vpack.c.b16 %v984, %v980
    %v1225 = vpack.c.b16 %v989, %v985
    %v1226 = vpack.c.b16 %v990, %v986
    %v1227 = vpack.c.b16 %v991, %v987
    %v1228 = vpack.c.b16 %v992, %v988
    %v1229 = vpack.c.b16 %v997, %v993
    %v1230 = vpack.c.b16 %v998, %v994
    %v1231 = vpack.c.b16 %v999, %v995
    %v1232 = vpack.c.b16 %v1000, %v996
    %v1233 = vpack.c.b16 %v1005, %v1001
    %v1234 = vpack.c.b16 %v1006, %v1002
    %v1235 = vpack.c.b16 %v1007, %v1003
    %v1236 = vpack.c.b16 %v1008, %v1004
    %v1237 = vpack.c.b16 %v1013, %v1009
    %v1238 = vpack.c.b16 %v1014, %v1010
    %v1239 = vpack.c.b16 %v1015, %v1011
    %v1240 = vpack.c.b16 %v1016, %v1012
    %v1241 = vpack.c.b16 %v1021, %v1017
    %v1242 = vpack.c.b16 %v1022, %v1018
    %v1243 = vpack.c.b16 %v1023, %v1019
    %v1244 = vpack.c.b16 %v1024, %v1020
    %v1245 = vpack.c.b16 %v1029, %v1025
    %v1246 = vpack.c.b16 %v1030, %v1026
    %v1247 = vpack.c.b16 %v1031, %v1027
    %v1248 = vpack.c.b16 %v1032, %v1028
    %v1249 = vpack.c.b16 %v1037, %v1033
    %v1250 = vpack.c.b16 %v1038, %v1034
    %v1251 = vpack.c.b16 %v1039, %v1035
    %v1252 = vpack.c.b16 %v1040, %v1036
    %v1253 = vpack.c.b16 %v1045, %v1041
    %v1254 = vpack.c.b16 %v1046, %v1042
    %v1255 = vpack.c.b16 %v1047, %v1043
    %v1256 = vpack.c.b16 %v1048, %v1044
    %v1257 = vpack.c.b16 %v1053, %v1049
    %v1258 = vpack.c.b16 %v1054, %v1050
    %v1259 = vpack.c.b16 %v1055, %v1051
    %v1260 = vpack.c.b16 %v1056, %v1052
    %v1261 = vpack.c.b16 %v1061, %v1057
    %v1262 = vpack.c.b16 %v1062, %v1058
    %v1263 = vpack.c.b16 %v1063, %v1059
    %v1264 = vpack.c.b16 %v1064, %v1060
    %v1265 = vpack.c.b16 %v1069, %v1065
    %v1266 = vpack.c.b16 %v1070, %v1066
    %v1267 = vpack.c.b16 %v1071, %v1067
    %v1268 = vpack.c.b16 %v1072, %v1068
    %v1269 = vpack.c.b16 %v1077, %v1073
    %v1270 = vpack.c.b16 %v1078, %v1074
    %v1271 = vpack.c.b16 %v1079, %v1075
    %v1272 = vpack.c.b16 %v1080, %v1076
    %v1273 = vpack.c.b16 %v1085, %v1081
    %v1274 = vpack.c.b16 %v1086, %v1082
    %v1275 = vpack.c.b16 %v1087, %v1083
    %v1276 = vpack.c.b16 %v1088, %v1084
    %v1277 = vpack.c.b16 %v1093, %v1089
    %v1278 = vpack.c.b16 %v1094, %v1090
    %v1279 = vpack.c.b16 %v1095, %v1091
    %v1280 = vpack.c.b16 %v1096, %v1092
    %v1281 = vpack.c.b16 %v1101, %v1097
    %v1282 = vpack.c.b16 %v1102, %v1098
    %v1283 = vpack.c.b16 %v1103, %v1099
    %v1284 = vpack.c.b16 %v1104, %v1100
    %v1285 = vpack.c.b16 %v1109, %v1105
    %v1286 = vpack.c.b16 %v1110, %v1106
    %v1287 = vpack.c.b16 %v1111, %v1107
    %v1288 = vpack.c.b16 %v1112, %v1108
    %v1289 = vpack.c.b16 %v1117, %v1113
    %v1290 = vpack.c.b16 %v1118, %v1114
    %v1291 = vpack.c.b16 %v1119, %v1115
    %v1292 = vpack.c.b16 %v1120, %v1116
    %v1293 = vpack.c.b16 %v1125, %v1121
    %v1294 = vpack.c.b16 %v1126, %v1122
    %v1295 = vpack.c.b16 %v1127, %v1123
    %v1296 = vpack.c.b16 %v1128, %v1124
    %v1297 = vpack.c.b16 %v1133, %v1129
    %v1298 = vpack.c.b16 %v1134, %v1130
    %v1299 = vpack.c.b16 %v1135, %v1131
    %v1300 = vpack.c.b16 %v1136, %v1132
    %v1301 = vpack.c.b16 %v1141, %v1137
    %v1302 = vpack.c.b16 %v1142, %v1138
    %v1303 = vpack.c.b16 %v1143, %v1139
    %v1304 = vpack.c.b16 %v1144, %v1140
    %v1305 = vpack.c.b16 %v1149, %v1145
    %v1306 = vpack.c.b16 %v1150, %v1146
    %v1307 = vpack.c.b16 %v1151, %v1147
    %v1308 = vpack.c.b16 %v1152, %v1148
    %v1309 = vpack.c.b16 %v1157, %v1153
    %v1310 = vpack.c.b16 %v1158, %v1154
    %v1311 = vpack.c.b16 %v1159, %v1155
    %v1312 = vpack.c.b16 %v1160, %v1156
    %v1313 = vpack.c.b16 %v1165, %v1161
    %v1314 = vpack.c.b16 %v1166, %v1162
    %v1315 = vpack.c.b16 %v1167, %v1163
    %v1316 = vpack.c.b16 %v1168, %v1164
    %v1317 = vpack.c.b16 %v1173, %v1169
    %v1318 = vpack.c.b16 %v1174, %v1170
    %v1319 = vpack.c.b16 %v1175, %v1171
    %v1320 = vpack.c.b16 %v1176, %v1172
    %v1321 = vpack.c.b16 %v1181, %v1177
    %v1322 = vpack.c.b16 %v1182, %v1178
    %v1323 = vpack.c.b16 %v1183, %v1179
    %v1324 = vpack.c.b16 %v1184, %v1180
    %v1325 = vpack.c.b16 %v1189, %v1185
    %v1326 = vpack.c.b16 %v1190, %v1186
    %v1327 = vpack.c.b16 %v1191, %v1187
    %v1328 = vpack.c.b16 %v1192, %v1188
    %v1329 = vpack.c.b16 %v1197, %v1193
    %v1330 = vpack.c.b16 %v1198, %v1194
    %v1331 = vpack.c.b16 %v1199, %v1195
    %v1332 = vpack.c.b16 %v1200, %v1196
    %v1333 = vpack.c.b16 %v1205, %v1201
    %v1334 = vpack.c.b16 %v1206, %v1202
    %v1335 = vpack.c.b16 %v1207, %v1203
    %v1336 = vpack.c.b16 %v1208, %v1204
    %1465 = vmatprep.subr.bf16.mxu0 %v1210
    %1466 = vmatpush1.bf16.msra.mxu0 %v1209
    %1467 = vmatprep.subr.bf16.mxu0 %v1214
    %1468 = vmatpush1.bf16.msra.mxu0 %v1213
    %1469 = vmatprep.subr.bf16.mxu0 %v1218
    %1470 = vmatpush1.bf16.msra.mxu0 %v1217
    %1471 = vmatprep.subr.bf16.mxu0 %v1222
    %1472 = vmatpush1.bf16.msra.mxu0 %v1221
    %1473 = vmatprep.subr.bf16.mxu0 %v1226
    %1474 = vmatpush1.bf16.msra.mxu0 %v1225
    %1475 = vmatprep.subr.bf16.mxu0 %v1230
    %1476 = vmatpush1.bf16.msra.mxu0 %v1229
    %1477 = vmatprep.subr.bf16.mxu0 %v1234
    %1478 = vmatpush1.bf16.msra.mxu0 %v1233
    %1479 = vmatprep.subr.bf16.mxu0 %v1238
    %1480 = vmatpush1.bf16.msra.mxu0 %v1237
    %1481 = vmatprep.subr.bf16.mxu0 %v1242
    %1482 = vmatpush1.bf16.msra.mxu0 %v1241
    %1483 = vmatprep.subr.bf16.mxu0 %v1246
    %1484 = vmatpush1.bf16.msra.mxu0 %v1245
    %1485 = vmatprep.subr.bf16.mxu0 %v1250
    %1486 = vmatpush1.bf16.msra.mxu0 %v1249
    %1487 = vmatprep.subr.bf16.mxu0 %v1254
    %1488 = vmatpush1.bf16.msra.mxu0 %v1253
    %1489 = vmatprep.subr.bf16.mxu0 %v1258
    %1490 = vmatpush1.bf16.msra.mxu0 %v1257
    %1491 = vmatprep.subr.bf16.mxu0 %v1262
    %1492 = vmatpush1.bf16.msra.mxu0 %v1261
    %1493 = vmatprep.subr.bf16.mxu0 %v1266
    %1494 = vmatpush1.bf16.msra.mxu0 %v1265
    %1495 = vmatprep.subr.bf16.mxu0 %v1270
    %1496 = vmatpush1.bf16.msra.mxu0 %v1269
    %1497 = vmatprep.mubr.bf16.mxu0 %v292
    %1498 = vmatmul.mubr.bf16.gmra.mrb[0].mxu0 %v291
    %v1499 = vpop.f32.mrb[0].mxu0
    %v1500 = vadd.f32 %v808, %v1499
    %v1501 = vpop.f32.mrb[0].mxu0
    %v1502 = vadd.f32 %v812, %v1501
    %v1503 = vpop.f32.mrb[0].mxu0
    %v1504 = vadd.f32 %v808, %v1503
    %v1505 = vpop.f32.mrb[0].mxu0
    %v1506 = vadd.f32 %v812, %v1505
    %1507 = vmatprep.mubr.bf16.mxu0 %v296
    %1508 = vmatmul.mubr.bf16.gmra.mrb[0].mxu0 %v295
    %v1509 = vpop.f32.mrb[0].mxu0
    %v1510 = vadd.f32 %v808, %v1509
    %v1511 = vpop.f32.mrb[0].mxu0
    %v1512 = vadd.f32 %v812, %v1511
    %v1513 = vpop.f32.mrb[0].mxu0
    %v1514 = vadd.f32 %v808, %v1513
    %v1515 = vpop.f32.mrb[0].mxu0
    %v1516 = vadd.f32 %v812, %v1515
    %1517 = vmatprep.mubr.bf16.mxu0 %v300
    %1518 = vmatmul.mubr.bf16.gmra.mrb[0].mxu0 %v299
    %v1519 = vpop.f32.mrb[0].mxu0
    %v1520 = vadd.f32 %v808, %v1519
    %v1521 = vpop.f32.mrb[0].mxu0
    %v1522 = vadd.f32 %v812, %v1521
    %v1523 = vpop.f32.mrb[0].mxu0
    %v1524 = vadd.f32 %v808, %v1523
    %v1525 = vpop.f32.mrb[0].mxu0
    %v1526 = vadd.f32 %v812, %v1525
    %1527 = vmatprep.mubr.bf16.mxu0 %v304
    %1528 = vmatmul.mubr.bf16.gmra.mrb[0].mxu0 %v303
    %v1529 = vpop.f32.mrb[0].mxu0
    %v1530 = vadd.f32 %v808, %v1529
    %v1531 = vpop.f32.mrb[0].mxu0
    %v1532 = vadd.f32 %v812, %v1531
    %v1533 = vpop.f32.mrb[0].mxu0
    %v1534 = vadd.f32 %v808, %v1533
    %v1535 = vpop.f32.mrb[0].mxu0
    %v1536 = vadd.f32 %v812, %v1535
    %1537 = vmatprep.mubr.bf16.mxu0 %v308
    %1538 = vmatmul.mubr.bf16.gmra.mrb[0].mxu0 %v307
    %v1539 = vpop.f32.mrb[0].mxu0
    %v1540 = vadd.f32 %v808, %v1539
    %v1541 = vpop.f32.mrb[0].mxu0
    %v1542 = vadd.f32 %v812, %v1541
    %v1543 = vpop.f32.mrb[0].mxu0
    %v1544 = vadd.f32 %v808, %v1543
    %v1545 = vpop.f32.mrb[0].mxu0
    %v1546 = vadd.f32 %v812, %v1545
    %1547 = vmatprep.mubr.bf16.mxu0 %v312
    %1548 = vmatmul.mubr.bf16.gmra.mrb[0].mxu0 %v311
    %v1549 = vpop.f32.mrb[0].mxu0
    %v1550 = vadd.f32 %v808, %v1549
    %v1551 = vpop.f32.mrb[0].mxu0
    %v1552 = vadd.f32 %v812, %v1551
    %v1553 = vpop.f32.mrb[0].mxu0
    %v1554 = vadd.f32 %v808, %v1553
    %v1555 = vpop.f32.mrb[0].mxu0
    %v1556 = vadd.f32 %v812, %v1555
    %1557 = vmatprep.mubr.bf16.mxu0 %v316
    %1558 = vmatmul.mubr.bf16.gmra.mrb[0].mxu0 %v315
    %v1559 = vpop.f32.mrb[0].mxu0
    %v1560 = vadd.f32 %v808, %v1559
    %v1561 = vpop.f32.mrb[0].mxu0
    %v1562 = vadd.f32 %v812, %v1561
    %v1563 = vpop.f32.mrb[0].mxu0
    %v1564 = vadd.f32 %v808, %v1563
    %v1565 = vpop.f32.mrb[0].mxu0
    %v1566 = vadd.f32 %v812, %v1565
    %1567 = vmatprep.mubr.bf16.mxu0 %v320
    %1568 = vmatmul.mubr.bf16.gmra.mrb[0].mxu0 %v319
    %v1569 = vpop.f32.mrb[0].mxu0
    %v1570 = vadd.f32 %v808, %v1569
    %v1571 = vpop.f32.mrb[0].mxu0
    %v1572 = vadd.f32 %v812, %v1571
    %v1573 = vpop.f32.mrb[0].mxu0
    %v1574 = vadd.f32 %v808, %v1573
    %v1575 = vpop.f32.mrb[0].mxu0
    %v1576 = vadd.f32 %v812, %v1575
    %1577 = vmatprep.mubr.bf16.mxu0 %v452
    %1578 = vmatmul.mubr.bf16.gmra.mrb[0].mxu0 %v451
    %v1579 = vpop.f32.mrb[0].mxu0
    %v1580 = vadd.f32 %v808, %v1579
    %v1581 = vpop.f32.mrb[0].mxu0
    %v1582 = vadd.f32 %v812, %v1581
    %v1583 = vpop.f32.mrb[0].mxu0
    %v1584 = vadd.f32 %v808, %v1583
    %v1585 = vpop.f32.mrb[0].mxu0
    %v1586 = vadd.f32 %v812, %v1585
    %1587 = vmatprep.mubr.bf16.mxu0 %v456
    %1588 = vmatmul.mubr.bf16.gmra.mrb[0].mxu0 %v455
    %v1589 = vpop.f32.mrb[0].mxu0
    %v1590 = vadd.f32 %v808, %v1589
    %v1591 = vpop.f32.mrb[0].mxu0
    %v1592 = vadd.f32 %v812, %v1591
    %v1593 = vpop.f32.mrb[0].mxu0
    %v1594 = vadd.f32 %v808, %v1593
    %v1595 = vpop.f32.mrb[0].mxu0
    %v1596 = vadd.f32 %v812, %v1595
    %1597 = vmatprep.mubr.bf16.mxu0 %v460
    %1598 = vmatmul.mubr.bf16.gmra.mrb[0].mxu0 %v459
    %v1599 = vpop.f32.mrb[0].mxu0
    %v1600 = vadd.f32 %v808, %v1599
    %v1601 = vpop.f32.mrb[0].mxu0
    %v1602 = vadd.f32 %v812, %v1601
    %v1603 = vpop.f32.mrb[0].mxu0
    %v1604 = vadd.f32 %v808, %v1603
    %v1605 = vpop.f32.mrb[0].mxu0
    %v1606 = vadd.f32 %v812, %v1605
    %1607 = vmatprep.mubr.bf16.mxu0 %v464
    %1608 = vmatmul.mubr.bf16.gmra.mrb[0].mxu0 %v463
    %v1609 = vpop.f32.mrb[0].mxu0
    %v1610 = vadd.f32 %v808, %v1609
    %v1611 = vpop.f32.mrb[0].mxu0
    %v1612 = vadd.f32 %v812, %v1611
    %v1613 = vpop.f32.mrb[0].mxu0
    %v1614 = vadd.f32 %v808, %v1613
    %v1615 = vpop.f32.mrb[0].mxu0
    %v1616 = vadd.f32 %v812, %v1615
    %1617 = vmatprep.mubr.bf16.mxu0 %v468
    %1618 = vmatmul.mubr.bf16.gmra.mrb[0].mxu0 %v467
    %v1619 = vpop.f32.mrb[0].mxu0
    %v1620 = vadd.f32 %v808, %v1619
    %v1621 = vpop.f32.mrb[0].mxu0
    %v1622 = vadd.f32 %v812, %v1621
    %v1623 = vpop.f32.mrb[0].mxu0
    %v1624 = vadd.f32 %v808, %v1623
    %v1625 = vpop.f32.mrb[0].mxu0
    %v1626 = vadd.f32 %v812, %v1625
    %1627 = vmatprep.mubr.bf16.mxu0 %v472
    %1628 = vmatmul.mubr.bf16.gmra.mrb[0].mxu0 %v471
    %v1629 = vpop.f32.mrb[0].mxu0
    %v1630 = vadd.f32 %v808, %v1629
    %v1631 = vpop.f32.mrb[0].mxu0
    %v1632 = vadd.f32 %v812, %v1631
    %v1633 = vpop.f32.mrb[0].mxu0
    %v1634 = vadd.f32 %v808, %v1633
    %v1635 = vpop.f32.mrb[0].mxu0
    %v1636 = vadd.f32 %v812, %v1635
    %1637 = vmatprep.mubr.bf16.mxu0 %v476
    %1638 = vmatmul.mubr.bf16.gmra.mrb[0].mxu0 %v475
    %v1639 = vpop.f32.mrb[0].mxu0
    %v1640 = vadd.f32 %v808, %v1639
    %v1641 = vpop.f32.mrb[0].mxu0
    %v1642 = vadd.f32 %v812, %v1641
    %v1643 = vpop.f32.mrb[0].mxu0
    %v1644 = vadd.f32 %v808, %v1643
    %v1645 = vpop.f32.mrb[0].mxu0
    %v1646 = vadd.f32 %v812, %v1645
    %1647 = vmatprep.mubr.bf16.mxu0 %v480
    %1648 = vmatmul.mubr.bf16.gmra.mrb[0].mxu0 %v479
    %v1649 = vpop.f32.mrb[0].mxu0
    %v1650 = vadd.f32 %v808, %v1649
    %v1651 = vpop.f32.mrb[0].mxu0
    %v1652 = vadd.f32 %v812, %v1651
    %v1653 = vpop.f32.mrb[0].mxu0
    %v1654 = vadd.f32 %v808, %v1653
    %v1655 = vpop.f32.mrb[0].mxu0
    %v1656 = vadd.f32 %v812, %v1655
    %1657 = vmatprep.mubr.bf16.mxu0 %v612
    %1658 = vmatmul.mubr.bf16.gmra.mrb[0].mxu0 %v611
    %v1659 = vpop.f32.mrb[0].mxu0
    %v1660 = vadd.f32 %v808, %v1659
    %v1661 = vpop.f32.mrb[0].mxu0
    %v1662 = vadd.f32 %v812, %v1661
    %v1663 = vpop.f32.mrb[0].mxu0
    %v1664 = vadd.f32 %v808, %v1663
    %v1665 = vpop.f32.mrb[0].mxu0
    %v1666 = vadd.f32 %v812, %v1665
    %1667 = vmatprep.mubr.bf16.mxu0 %v616
    %1668 = vmatmul.mubr.bf16.gmra.mrb[0].mxu0 %v615
    %v1669 = vpop.f32.mrb[0].mxu0
    %v1670 = vadd.f32 %v808, %v1669
    %v1671 = vpop.f32.mrb[0].mxu0
    %v1672 = vadd.f32 %v812, %v1671
    %v1673 = vpop.f32.mrb[0].mxu0
    %v1674 = vadd.f32 %v808, %v1673
    %v1675 = vpop.f32.mrb[0].mxu0
    %v1676 = vadd.f32 %v812, %v1675
    %1677 = vmatprep.mubr.bf16.mxu0 %v620
    %1678 = vmatmul.mubr.bf16.gmra.mrb[0].mxu0 %v619
    %v1679 = vpop.f32.mrb[0].mxu0
    %v1680 = vadd.f32 %v808, %v1679
    %v1681 = vpop.f32.mrb[0].mxu0
    %v1682 = vadd.f32 %v812, %v1681
    %v1683 = vpop.f32.mrb[0].mxu0
    %v1684 = vadd.f32 %v808, %v1683
    %v1685 = vpop.f32.mrb[0].mxu0
    %v1686 = vadd.f32 %v812, %v1685
    %1687 = vmatprep.mubr.bf16.mxu0 %v624
    %1688 = vmatmul.mubr.bf16.gmra.mrb[0].mxu0 %v623
    %v1689 = vpop.f32.mrb[0].mxu0
    %v1690 = vadd.f32 %v808, %v1689
    %v1691 = vpop.f32.mrb[0].mxu0
    %v1692 = vadd.f32 %v812, %v1691
    %v1693 = vpop.f32.mrb[0].mxu0
    %v1694 = vadd.f32 %v808, %v1693
    %v1695 = vpop.f32.mrb[0].mxu0
    %v1696 = vadd.f32 %v812, %v1695
    %1697 = vmatprep.mubr.bf16.mxu0 %v628
    %1698 = vmatmul.mubr.bf16.gmra.mrb[0].mxu0 %v627
    %v1699 = vpop.f32.mrb[0].mxu0
    %v1700 = vadd.f32 %v808, %v1699
    %v1701 = vpop.f32.mrb[0].mxu0
    %v1702 = vadd.f32 %v812, %v1701
    %v1703 = vpop.f32.mrb[0].mxu0
    %v1704 = vadd.f32 %v808, %v1703
    %v1705 = vpop.f32.mrb[0].mxu0
    %v1706 = vadd.f32 %v812, %v1705
    %1707 = vmatprep.mubr.bf16.mxu0 %v632
    %1708 = vmatmul.mubr.bf16.gmra.mrb[0].mxu0 %v631
    %v1709 = vpop.f32.mrb[0].mxu0
    %v1710 = vadd.f32 %v808, %v1709
    %v1711 = vpop.f32.mrb[0].mxu0
    %v1712 = vadd.f32 %v812, %v1711
    %v1713 = vpop.f32.mrb[0].mxu0
    %v1714 = vadd.f32 %v808, %v1713
    %v1715 = vpop.f32.mrb[0].mxu0
    %v1716 = vadd.f32 %v812, %v1715
    %1717 = vmatprep.mubr.bf16.mxu0 %v636
    %1718 = vmatmul.mubr.bf16.gmra.mrb[0].mxu0 %v635
    %v1719 = vpop.f32.mrb[0].mxu0
    %v1720 = vadd.f32 %v808, %v1719
    %v1721 = vpop.f32.mrb[0].mxu0
    %v1722 = vadd.f32 %v812, %v1721
    %v1723 = vpop.f32.mrb[0].mxu0
    %v1724 = vadd.f32 %v808, %v1723
    %v1725 = vpop.f32.mrb[0].mxu0
    %v1726 = vadd.f32 %v812, %v1725
    %1727 = vmatprep.mubr.bf16.mxu0 %v640
    %1728 = vmatmul.mubr.bf16.gmra.mrb[0].mxu0 %v639
    %v1729 = vpop.f32.mrb[0].mxu0
    %v1730 = vadd.f32 %v808, %v1729
    %v1731 = vpop.f32.mrb[0].mxu0
    %v1732 = vadd.f32 %v812, %v1731
    %v1733 = vpop.f32.mrb[0].mxu0
    %v1734 = vadd.f32 %v808, %v1733
    %v1735 = vpop.f32.mrb[0].mxu0
    %v1736 = vadd.f32 %v812, %v1735
    %1737 = vdwg.mxu0
    %1738 = vmatprep.subr.bf16.mxu0 %v1274
    %1739 = vmatpush1.bf16.msra.mxu0 %v1273
    %1740 = vmatprep.subr.bf16.mxu0 %v1278
    %1741 = vmatpush1.bf16.msra.mxu0 %v1277
    %1742 = vmatprep.subr.bf16.mxu0 %v1282
    %1743 = vmatpush1.bf16.msra.mxu0 %v1281
    %1744 = vmatprep.subr.bf16.mxu0 %v1286
    %1745 = vmatpush1.bf16.msra.mxu0 %v1285
    %1746 = vmatprep.subr.bf16.mxu0 %v1290
    %1747 = vmatpush1.bf16.msra.mxu0 %v1289
    %1748 = vmatprep.subr.bf16.mxu0 %v1294
    %1749 = vmatpush1.bf16.msra.mxu0 %v1293
    %1750 = vmatprep.subr.bf16.mxu0 %v1298
    %1751 = vmatpush1.bf16.msra.mxu0 %v1297
    %1752 = vmatprep.subr.bf16.mxu0 %v1302
    %1753 = vmatpush1.bf16.msra.mxu0 %v1301
    %1754 = vmatprep.subr.bf16.mxu0 %v1306
    %1755 = vmatpush1.bf16.msra.mxu0 %v1305
    %1756 = vmatprep.subr.bf16.mxu0 %v1310
    %1757 = vmatpush1.bf16.msra.mxu0 %v1309
    %1758 = vmatprep.subr.bf16.mxu0 %v1314
    %1759 = vmatpush1.bf16.msra.mxu0 %v1313
    %1760 = vmatprep.subr.bf16.mxu0 %v1318
    %1761 = vmatpush1.bf16.msra.mxu0 %v1317
    %1762 = vmatprep.subr.bf16.mxu0 %v1322
    %1763 = vmatpush1.bf16.msra.mxu0 %v1321
    %1764 = vmatprep.subr.bf16.mxu0 %v1326
    %1765 = vmatpush1.bf16.msra.mxu0 %v1325
    %1766 = vmatprep.subr.bf16.mxu0 %v1330
    %1767 = vmatpush1.bf16.msra.mxu0 %v1329
    %1768 = vmatprep.subr.bf16.mxu0 %v1334
    %1769 = vmatpush1.bf16.msra.mxu0 %v1333
    %1770 = vmatprep.mubr.bf16.mxu0 %v294
    %1771 = vmatmul.mubr.bf16.gmra.mrb[0].mxu0 %v293
    %v1772 = vpop.f32.mrb[0].mxu0
    %v1773 = vadd.f32 %v1500, %v1772
    %v1774 = vpop.f32.mrb[0].mxu0
    %v1775 = vadd.f32 %v1502, %v1774
    %v1776 = vpop.f32.mrb[0].mxu0
    %v1777 = vadd.f32 %v1504, %v1776
    %v1778 = vpop.f32.mrb[0].mxu0
    %v1779 = vadd.f32 %v1506, %v1778
    %1780 = vmatprep.mubr.bf16.mxu0 %v298
    %1781 = vmatmul.mubr.bf16.gmra.mrb[0].mxu0 %v297
    %v1782 = vpop.f32.mrb[0].mxu0
    %v1783 = vadd.f32 %v1510, %v1782
    %v1784 = vpop.f32.mrb[0].mxu0
    %v1785 = vadd.f32 %v1512, %v1784
    %v1786 = vpop.f32.mrb[0].mxu0
    %v1787 = vadd.f32 %v1514, %v1786
    %v1788 = vpop.f32.mrb[0].mxu0
    %v1789 = vadd.f32 %v1516, %v1788
    %1790 = vmatprep.mubr.bf16.mxu0 %v302
    %1791 = vmatmul.mubr.bf16.gmra.mrb[0].mxu0 %v301
    %v1792 = vpop.f32.mrb[0].mxu0
    %v1793 = vadd.f32 %v1520, %v1792
    %v1794 = vpop.f32.mrb[0].mxu0
    %v1795 = vadd.f32 %v1522, %v1794
    %v1796 = vpop.f32.mrb[0].mxu0
    %v1797 = vadd.f32 %v1524, %v1796
    %v1798 = vpop.f32.mrb[0].mxu0
    %v1799 = vadd.f32 %v1526, %v1798
    %1800 = vmatprep.mubr.bf16.mxu0 %v306
    %1801 = vmatmul.mubr.bf16.gmra.mrb[0].mxu0 %v305
    %v1802 = vpop.f32.mrb[0].mxu0
    %v1803 = vadd.f32 %v1530, %v1802
    %v1804 = vpop.f32.mrb[0].mxu0
    %v1805 = vadd.f32 %v1532, %v1804
    %v1806 = vpop.f32.mrb[0].mxu0
    %v1807 = vadd.f32 %v1534, %v1806
    %v1808 = vpop.f32.mrb[0].mxu0
    %v1809 = vadd.f32 %v1536, %v1808
    %1810 = vmatprep.mubr.bf16.mxu0 %v310
    %1811 = vmatmul.mubr.bf16.gmra.mrb[0].mxu0 %v309
    %v1812 = vpop.f32.mrb[0].mxu0
    %v1813 = vadd.f32 %v1540, %v1812
    %v1814 = vpop.f32.mrb[0].mxu0
    %v1815 = vadd.f32 %v1542, %v1814
    %v1816 = vpop.f32.mrb[0].mxu0
    %v1817 = vadd.f32 %v1544, %v1816
    %v1818 = vpop.f32.mrb[0].mxu0
    %v1819 = vadd.f32 %v1546, %v1818
    %1820 = vmatprep.mubr.bf16.mxu0 %v314
    %1821 = vmatmul.mubr.bf16.gmra.mrb[0].mxu0 %v313
    %v1822 = vpop.f32.mrb[0].mxu0
    %v1823 = vadd.f32 %v1550, %v1822
    %v1824 = vpop.f32.mrb[0].mxu0
    %v1825 = vadd.f32 %v1552, %v1824
    %v1826 = vpop.f32.mrb[0].mxu0
    %v1827 = vadd.f32 %v1554, %v1826
    %v1828 = vpop.f32.mrb[0].mxu0
    %v1829 = vadd.f32 %v1556, %v1828
    %1830 = vmatprep.mubr.bf16.mxu0 %v318
    %1831 = vmatmul.mubr.bf16.gmra.mrb[0].mxu0 %v317
    %v1832 = vpop.f32.mrb[0].mxu0
    %v1833 = vadd.f32 %v1560, %v1832
    %v1834 = vpop.f32.mrb[0].mxu0
    %v1835 = vadd.f32 %v1562, %v1834
    %v1836 = vpop.f32.mrb[0].mxu0
    %v1837 = vadd.f32 %v1564, %v1836
    %v1838 = vpop.f32.mrb[0].mxu0
    %v1839 = vadd.f32 %v1566, %v1838
    %1840 = vmatprep.mubr.bf16.mxu0 %v322
    %1841 = vmatmul.mubr.bf16.gmra.mrb[0].mxu0 %v321
    %v1842 = vpop.f32.mrb[0].mxu0
    %v1843 = vadd.f32 %v1570, %v1842
    %v1844 = vpop.f32.mrb[0].mxu0
    %v1845 = vadd.f32 %v1572, %v1844
    %v1846 = vpop.f32.mrb[0].mxu0
    %v1847 = vadd.f32 %v1574, %v1846
    %v1848 = vpop.f32.mrb[0].mxu0
    %v1849 = vadd.f32 %v1576, %v1848
    %1850 = vmatprep.mubr.bf16.mxu0 %v454
    %1851 = vmatmul.mubr.bf16.gmra.mrb[0].mxu0 %v453
    %v1852 = vpop.f32.mrb[0].mxu0
    %v1853 = vadd.f32 %v1580, %v1852
    %v1854 = vpop.f32.mrb[0].mxu0
    %v1855 = vadd.f32 %v1582, %v1854
    %v1856 = vpop.f32.mrb[0].mxu0
    %v1857 = vadd.f32 %v1584, %v1856
    %v1858 = vpop.f32.mrb[0].mxu0
    %v1859 = vadd.f32 %v1586, %v1858
    %1860 = vmatprep.mubr.bf16.mxu0 %v458
    %1861 = vmatmul.mubr.bf16.gmra.mrb[0].mxu0 %v457
    %v1862 = vpop.f32.mrb[0].mxu0
    %v1863 = vadd.f32 %v1590, %v1862
    %v1864 = vpop.f32.mrb[0].mxu0
    %v1865 = vadd.f32 %v1592, %v1864
    %v1866 = vpop.f32.mrb[0].mxu0
    %v1867 = vadd.f32 %v1594, %v1866
    %v1868 = vpop.f32.mrb[0].mxu0
    %v1869 = vadd.f32 %v1596, %v1868
    %1870 = vmatprep.mubr.bf16.mxu0 %v462
    %1871 = vmatmul.mubr.bf16.gmra.mrb[0].mxu0 %v461
    %v1872 = vpop.f32.mrb[0].mxu0
    %v1873 = vadd.f32 %v1600, %v1872
    %v1874 = vpop.f32.mrb[0].mxu0
    %v1875 = vadd.f32 %v1602, %v1874
    %v1876 = vpop.f32.mrb[0].mxu0
    %v1877 = vadd.f32 %v1604, %v1876
    %v1878 = vpop.f32.mrb[0].mxu0
    %v1879 = vadd.f32 %v1606, %v1878
    %1880 = vmatprep.mubr.bf16.mxu0 %v466
    %1881 = vmatmul.mubr.bf16.gmra.mrb[0].mxu0 %v465
    %v1882 = vpop.f32.mrb[0].mxu0
    %v1883 = vadd.f32 %v1610, %v1882
    %v1884 = vpop.f32.mrb[0].mxu0
    %v1885 = vadd.f32 %v1612, %v1884
    %v1886 = vpop.f32.mrb[0].mxu0
    %v1887 = vadd.f32 %v1614, %v1886
    %v1888 = vpop.f32.mrb[0].mxu0
    %v1889 = vadd.f32 %v1616, %v1888
    %1890 = vmatprep.mubr.bf16.mxu0 %v470
    %1891 = vmatmul.mubr.bf16.gmra.mrb[0].mxu0 %v469
    %v1892 = vpop.f32.mrb[0].mxu0
    %v1893 = vadd.f32 %v1620, %v1892
    %v1894 = vpop.f32.mrb[0].mxu0
    %v1895 = vadd.f32 %v1622, %v1894
    %v1896 = vpop.f32.mrb[0].mxu0
    %v1897 = vadd.f32 %v1624, %v1896
    %v1898 = vpop.f32.mrb[0].mxu0
    %v1899 = vadd.f32 %v1626, %v1898
    %1900 = vmatprep.mubr.bf16.mxu0 %v474
    %1901 = vmatmul.mubr.bf16.gmra.mrb[0].mxu0 %v473
    %v1902 = vpop.f32.mrb[0].mxu0
    %v1903 = vadd.f32 %v1630, %v1902
    %v1904 = vpop.f32.mrb[0].mxu0
    %v1905 = vadd.f32 %v1632, %v1904
    %v1906 = vpop.f32.mrb[0].mxu0
    %v1907 = vadd.f32 %v1634, %v1906
    %v1908 = vpop.f32.mrb[0].mxu0
    %v1909 = vadd.f32 %v1636, %v1908
    %1910 = vmatprep.mubr.bf16.mxu0 %v478
    %1911 = vmatmul.mubr.bf16.gmra.mrb[0].mxu0 %v477
    %v1912 = vpop.f32.mrb[0].mxu0
    %v1913 = vadd.f32 %v1640, %v1912
    %v1914 = vpop.f32.mrb[0].mxu0
    %v1915 = vadd.f32 %v1642, %v1914
    %v1916 = vpop.f32.mrb[0].mxu0
    %v1917 = vadd.f32 %v1644, %v1916
    %v1918 = vpop.f32.mrb[0].mxu0
    %v1919 = vadd.f32 %v1646, %v1918
    %1920 = vmatprep.mubr.bf16.mxu0 %v482
    %1921 = vmatmul.mubr.bf16.gmra.mrb[0].mxu0 %v481
    %v1922 = vpop.f32.mrb[0].mxu0
    %v1923 = vadd.f32 %v1650, %v1922
    %v1924 = vpop.f32.mrb[0].mxu0
    %v1925 = vadd.f32 %v1652, %v1924
    %v1926 = vpop.f32.mrb[0].mxu0
    %v1927 = vadd.f32 %v1654, %v1926
    %v1928 = vpop.f32.mrb[0].mxu0
    %v1929 = vadd.f32 %v1656, %v1928
    %1930 = vmatprep.mubr.bf16.mxu0 %v614
    %1931 = vmatmul.mubr.bf16.gmra.mrb[0].mxu0 %v613
    %v1932 = vpop.f32.mrb[0].mxu0
    %v1933 = vadd.f32 %v1660, %v1932
    %v1934 = vpop.f32.mrb[0].mxu0
    %v1935 = vadd.f32 %v1662, %v1934
    %v1936 = vpop.f32.mrb[0].mxu0
    %v1937 = vadd.f32 %v1664, %v1936
    %v1938 = vpop.f32.mrb[0].mxu0
    %v1939 = vadd.f32 %v1666, %v1938
    %1940 = vmatprep.mubr.bf16.mxu0 %v618
    %1941 = vmatmul.mubr.bf16.gmra.mrb[0].mxu0 %v617
    %v1942 = vpop.f32.mrb[0].mxu0
    %v1943 = vadd.f32 %v1670, %v1942
    %v1944 = vpop.f32.mrb[0].mxu0
    %v1945 = vadd.f32 %v1672, %v1944
    %v1946 = vpop.f32.mrb[0].mxu0
    %v1947 = vadd.f32 %v1674, %v1946
    %v1948 = vpop.f32.mrb[0].mxu0
    %v1949 = vadd.f32 %v1676, %v1948
    %1950 = vmatprep.mubr.bf16.mxu0 %v622
    %1951 = vmatmul.mubr.bf16.gmra.mrb[0].mxu0 %v621
    %v1952 = vpop.f32.mrb[0].mxu0
    %v1953 = vadd.f32 %v1680, %v1952
    %v1954 = vpop.f32.mrb[0].mxu0
    %v1955 = vadd.f32 %v1682, %v1954
    %v1956 = vpop.f32.mrb[0].mxu0
    %v1957 = vadd.f32 %v1684, %v1956
    %v1958 = vpop.f32.mrb[0].mxu0
    %v1959 = vadd.f32 %v1686, %v1958
    %1960 = vmatprep.mubr.bf16.mxu0 %v626
    %1961 = vmatmul.mubr.bf16.gmra.mrb[0].mxu0 %v625
    %v1962 = vpop.f32.mrb[0].mxu0
    %v1963 = vadd.f32 %v1690, %v1962
    %v1964 = vpop.f32.mrb[0].mxu0
    %v1965 = vadd.f32 %v1692, %v1964
    %v1966 = vpop.f32.mrb[0].mxu0
    %v1967 = vadd.f32 %v1694, %v1966
    %v1968 = vpop.f32.mrb[0].mxu0
    %v1969 = vadd.f32 %v1696, %v1968
    %1970 = vmatprep.mubr.bf16.mxu0 %v630
    %1971 = vmatmul.mubr.bf16.gmra.mrb[0].mxu0 %v629
    %v1972 = vpop.f32.mrb[0].mxu0
    %v1973 = vadd.f32 %v1700, %v1972
    %v1974 = vpop.f32.mrb[0].mxu0
    %v1975 = vadd.f32 %v1702, %v1974
    %v1976 = vpop.f32.mrb[0].mxu0
    %v1977 = vadd.f32 %v1704, %v1976
    %v1978 = vpop.f32.mrb[0].mxu0
    %v1979 = vadd.f32 %v1706, %v1978
    %1980 = vmatprep.mubr.bf16.mxu0 %v634
    %1981 = vmatmul.mubr.bf16.gmra.mrb[0].mxu0 %v633
    %v1982 = vpop.f32.mrb[0].mxu0
    %v1983 = vadd.f32 %v1710, %v1982
    %v1984 = vpop.f32.mrb[0].mxu0
    %v1985 = vadd.f32 %v1712, %v1984
    %v1986 = vpop.f32.mrb[0].mxu0
    %v1987 = vadd.f32 %v1714, %v1986
    %v1988 = vpop.f32.mrb[0].mxu0
    %v1989 = vadd.f32 %v1716, %v1988
    %1990 = vmatprep.mubr.bf16.mxu0 %v638
    %1991 = vmatmul.mubr.bf16.gmra.mrb[0].mxu0 %v637
    %v1992 = vpop.f32.mrb[0].mxu0
    %v1993 = vadd.f32 %v1720, %v1992
    %v1994 = vpop.f32.mrb[0].mxu0
    %v1995 = vadd.f32 %v1722, %v1994
    %v1996 = vpop.f32.mrb[0].mxu0
    %v1997 = vadd.f32 %v1724, %v1996
    %v1998 = vpop.f32.mrb[0].mxu0
    %v1999 = vadd.f32 %v1726, %v1998
    %2000 = vmatprep.mubr.bf16.mxu0 %v642
    %2001 = vmatmul.mubr.bf16.gmra.mrb[0].mxu0 %v641
    %v2002 = vpop.f32.mrb[0].mxu0
    %v2003 = vadd.f32 %v1730, %v2002
    %v2004 = vpop.f32.mrb[0].mxu0
    %v2005 = vadd.f32 %v1732, %v2004
    %v2006 = vpop.f32.mrb[0].mxu0
    %v2007 = vadd.f32 %v1734, %v2006
    %v2008 = vpop.f32.mrb[0].mxu0
    %v2009 = vadd.f32 %v1736, %v2008
    %2010 = vdwg.mxu0
    %2011 = vmatprep.subr.bf16.mxu0 %v1212
    %2012 = vmatpush1.bf16.msra.mxu0 %v1211
    %2013 = vmatprep.subr.bf16.mxu0 %v1216
    %2014 = vmatpush1.bf16.msra.mxu0 %v1215
    %2015 = vmatprep.subr.bf16.mxu0 %v1220
    %2016 = vmatpush1.bf16.msra.mxu0 %v1219
    %2017 = vmatprep.subr.bf16.mxu0 %v1224
    %2018 = vmatpush1.bf16.msra.mxu0 %v1223
    %2019 = vmatprep.subr.bf16.mxu0 %v1228
    %2020 = vmatpush1.bf16.msra.mxu0 %v1227
    %2021 = vmatprep.subr.bf16.mxu0 %v1232
    %2022 = vmatpush1.bf16.msra.mxu0 %v1231
    %2023 = vmatprep.subr.bf16.mxu0 %v1236
    %2024 = vmatpush1.bf16.msra.mxu0 %v1235
    %2025 = vmatprep.subr.bf16.mxu0 %v1240
    %2026 = vmatpush1.bf16.msra.mxu0 %v1239
    %2027 = vmatprep.subr.bf16.mxu0 %v1244
    %2028 = vmatpush1.bf16.msra.mxu0 %v1243
    %2029 = vmatprep.subr.bf16.mxu0 %v1248
    %2030 = vmatpush1.bf16.msra.mxu0 %v1247
    %2031 = vmatprep.subr.bf16.mxu0 %v1252
    %2032 = vmatpush1.bf16.msra.mxu0 %v1251
    %2033 = vmatprep.subr.bf16.mxu0 %v1256
    %2034 = vmatpush1.bf16.msra.mxu0 %v1255
    %2035 = vmatprep.subr.bf16.mxu0 %v1260
    %2036 = vmatpush1.bf16.msra.mxu0 %v1259
    %2037 = vmatprep.subr.bf16.mxu0 %v1264
    %2038 = vmatpush1.bf16.msra.mxu0 %v1263
    %2039 = vmatprep.subr.bf16.mxu0 %v1268
    %2040 = vmatpush1.bf16.msra.mxu0 %v1267
    %2041 = vmatprep.subr.bf16.mxu0 %v1272
    %2042 = vmatpush1.bf16.msra.mxu0 %v1271
    %2043 = vmatprep.mubr.bf16.mxu0 %v292
    %2044 = vmatmul.mubr.bf16.gmra.mrb[0].mxu0 %v291
    %v2045 = vpop.f32.mrb[0].mxu0
    %v2046 = vadd.f32 %v816, %v2045
    %v2047 = vpop.f32.mrb[0].mxu0
    %v2048 = vadd.f32 %v820, %v2047
    %v2049 = vpop.f32.mrb[0].mxu0
    %v2050 = vadd.f32 %v816, %v2049
    %v2051 = vpop.f32.mrb[0].mxu0
    %v2052 = vadd.f32 %v820, %v2051
    %2053 = vmatprep.mubr.bf16.mxu0 %v296
    %2054 = vmatmul.mubr.bf16.gmra.mrb[0].mxu0 %v295
    %v2055 = vpop.f32.mrb[0].mxu0
    %v2056 = vadd.f32 %v816, %v2055
    %v2057 = vpop.f32.mrb[0].mxu0
    %v2058 = vadd.f32 %v820, %v2057
    %v2059 = vpop.f32.mrb[0].mxu0
    %v2060 = vadd.f32 %v816, %v2059
    %v2061 = vpop.f32.mrb[0].mxu0
    %v2062 = vadd.f32 %v820, %v2061
    %2063 = vmatprep.mubr.bf16.mxu0 %v300
    %2064 = vmatmul.mubr.bf16.gmra.mrb[0].mxu0 %v299
    %v2065 = vpop.f32.mrb[0].mxu0
    %v2066 = vadd.f32 %v816, %v2065
    %v2067 = vpop.f32.mrb[0].mxu0
    %v2068 = vadd.f32 %v820, %v2067
    %v2069 = vpop.f32.mrb[0].mxu0
    %v2070 = vadd.f32 %v816, %v2069
    %v2071 = vpop.f32.mrb[0].mxu0
    %v2072 = vadd.f32 %v820, %v2071
    %2073 = vmatprep.mubr.bf16.mxu0 %v304
    %2074 = vmatmul.mubr.bf16.gmra.mrb[0].mxu0 %v303
    %v2075 = vpop.f32.mrb[0].mxu0
    %v2076 = vadd.f32 %v816, %v2075
    %v2077 = vpop.f32.mrb[0].mxu0
    %v2078 = vadd.f32 %v820, %v2077
    %v2079 = vpop.f32.mrb[0].mxu0
    %v2080 = vadd.f32 %v816, %v2079
    %v2081 = vpop.f32.mrb[0].mxu0
    %v2082 = vadd.f32 %v820, %v2081
    %2083 = vmatprep.mubr.bf16.mxu0 %v308
    %2084 = vmatmul.mubr.bf16.gmra.mrb[0].mxu0 %v307
    %v2085 = vpop.f32.mrb[0].mxu0
    %v2086 = vadd.f32 %v816, %v2085
    %v2087 = vpop.f32.mrb[0].mxu0
    %v2088 = vadd.f32 %v820, %v2087
    %v2089 = vpop.f32.mrb[0].mxu0
    %v2090 = vadd.f32 %v816, %v2089
    %v2091 = vpop.f32.mrb[0].mxu0
    %v2092 = vadd.f32 %v820, %v2091
    %2093 = vmatprep.mubr.bf16.mxu0 %v312
    %2094 = vmatmul.mubr.bf16.gmra.mrb[0].mxu0 %v311
    %v2095 = vpop.f32.mrb[0].mxu0
    %v2096 = vadd.f32 %v816, %v2095
    %v2097 = vpop.f32.mrb[0].mxu0
    %v2098 = vadd.f32 %v820, %v2097
    %v2099 = vpop.f32.mrb[0].mxu0
    %v2100 = vadd.f32 %v816, %v2099
    %v2101 = vpop.f32.mrb[0].mxu0
    %v2102 = vadd.f32 %v820, %v2101
    %2103 = vmatprep.mubr.bf16.mxu0 %v316
    %2104 = vmatmul.mubr.bf16.gmra.mrb[0].mxu0 %v315
    %v2105 = vpop.f32.mrb[0].mxu0
    %v2106 = vadd.f32 %v816, %v2105
    %v2107 = vpop.f32.mrb[0].mxu0
    %v2108 = vadd.f32 %v820, %v2107
    %v2109 = vpop.f32.mrb[0].mxu0
    %v2110 = vadd.f32 %v816, %v2109
    %v2111 = vpop.f32.mrb[0].mxu0
    %v2112 = vadd.f32 %v820, %v2111
    %2113 = vmatprep.mubr.bf16.mxu0 %v320
    %2114 = vmatmul.mubr.bf16.gmra.mrb[0].mxu0 %v319
    %v2115 = vpop.f32.mrb[0].mxu0
    %v2116 = vadd.f32 %v816, %v2115
    %v2117 = vpop.f32.mrb[0].mxu0
    %v2118 = vadd.f32 %v820, %v2117
    %v2119 = vpop.f32.mrb[0].mxu0
    %v2120 = vadd.f32 %v816, %v2119
    %v2121 = vpop.f32.mrb[0].mxu0
    %v2122 = vadd.f32 %v820, %v2121
    %2123 = vmatprep.mubr.bf16.mxu0 %v452
    %2124 = vmatmul.mubr.bf16.gmra.mrb[0].mxu0 %v451
    %v2125 = vpop.f32.mrb[0].mxu0
    %v2126 = vadd.f32 %v816, %v2125
    %v2127 = vpop.f32.mrb[0].mxu0
    %v2128 = vadd.f32 %v820, %v2127
    %v2129 = vpop.f32.mrb[0].mxu0
    %v2130 = vadd.f32 %v816, %v2129
    %v2131 = vpop.f32.mrb[0].mxu0
    %v2132 = vadd.f32 %v820, %v2131
    %2133 = vmatprep.mubr.bf16.mxu0 %v456
    %2134 = vmatmul.mubr.bf16.gmra.mrb[0].mxu0 %v455
    %v2135 = vpop.f32.mrb[0].mxu0
    %v2136 = vadd.f32 %v816, %v2135
    %v2137 = vpop.f32.mrb[0].mxu0
    %v2138 = vadd.f32 %v820, %v2137
    %v2139 = vpop.f32.mrb[0].mxu0
    %v2140 = vadd.f32 %v816, %v2139
    %v2141 = vpop.f32.mrb[0].mxu0
    %v2142 = vadd.f32 %v820, %v2141
    %2143 = vmatprep.mubr.bf16.mxu0 %v460
    %2144 = vmatmul.mubr.bf16.gmra.mrb[0].mxu0 %v459
    %v2145 = vpop.f32.mrb[0].mxu0
    %v2146 = vadd.f32 %v816, %v2145
    %v2147 = vpop.f32.mrb[0].mxu0
    %v2148 = vadd.f32 %v820, %v2147
    %v2149 = vpop.f32.mrb[0].mxu0
    %v2150 = vadd.f32 %v816, %v2149
    %v2151 = vpop.f32.mrb[0].mxu0
    %v2152 = vadd.f32 %v820, %v2151
    %2153 = vmatprep.mubr.bf16.mxu0 %v464
    %2154 = vmatmul.mubr.bf16.gmra.mrb[0].mxu0 %v463
    %v2155 = vpop.f32.mrb[0].mxu0
    %v2156 = vadd.f32 %v816, %v2155
    %v2157 = vpop.f32.mrb[0].mxu0
    %v2158 = vadd.f32 %v820, %v2157
    %v2159 = vpop.f32.mrb[0].mxu0
    %v2160 = vadd.f32 %v816, %v2159
    %v2161 = vpop.f32.mrb[0].mxu0
    %v2162 = vadd.f32 %v820, %v2161
    %2163 = vmatprep.mubr.bf16.mxu0 %v468
    %2164 = vmatmul.mubr.bf16.gmra.mrb[0].mxu0 %v467
    %v2165 = vpop.f32.mrb[0].mxu0
    %v2166 = vadd.f32 %v816, %v2165
    %v2167 = vpop.f32.mrb[0].mxu0
    %v2168 = vadd.f32 %v820, %v2167
    %v2169 = vpop.f32.mrb[0].mxu0
    %v2170 = vadd.f32 %v816, %v2169
    %v2171 = vpop.f32.mrb[0].mxu0
    %v2172 = vadd.f32 %v820, %v2171
    %2173 = vmatprep.mubr.bf16.mxu0 %v472
    %2174 = vmatmul.mubr.bf16.gmra.mrb[0].mxu0 %v471
    %v2175 = vpop.f32.mrb[0].mxu0
    %v2176 = vadd.f32 %v816, %v2175
    %v2177 = vpop.f32.mrb[0].mxu0
    %v2178 = vadd.f32 %v820, %v2177
    %v2179 = vpop.f32.mrb[0].mxu0
    %v2180 = vadd.f32 %v816, %v2179
    %v2181 = vpop.f32.mrb[0].mxu0
    %v2182 = vadd.f32 %v820, %v2181
    %2183 = vmatprep.mubr.bf16.mxu0 %v476
    %2184 = vmatmul.mubr.bf16.gmra.mrb[0].mxu0 %v475
    %v2185 = vpop.f32.mrb[0].mxu0
    %v2186 = vadd.f32 %v816, %v2185
    %v2187 = vpop.f32.mrb[0].mxu0
    %v2188 = vadd.f32 %v820, %v2187
    %v2189 = vpop.f32.mrb[0].mxu0
    %v2190 = vadd.f32 %v816, %v2189
    %v2191 = vpop.f32.mrb[0].mxu0
    %v2192 = vadd.f32 %v820, %v2191
    %2193 = vmatprep.mubr.bf16.mxu0 %v480
    %2194 = vmatmul.mubr.bf16.gmra.mrb[0].mxu0 %v479
    %v2195 = vpop.f32.mrb[0].mxu0
    %v2196 = vadd.f32 %v816, %v2195
    %v2197 = vpop.f32.mrb[0].mxu0
    %v2198 = vadd.f32 %v820, %v2197
    %v2199 = vpop.f32.mrb[0].mxu0
    %v2200 = vadd.f32 %v816, %v2199
    %v2201 = vpop.f32.mrb[0].mxu0
    %v2202 = vadd.f32 %v820, %v2201
    %2203 = vmatprep.mubr.bf16.mxu0 %v612
    %2204 = vmatmul.mubr.bf16.gmra.mrb[0].mxu0 %v611
    %v2205 = vpop.f32.mrb[0].mxu0
    %v2206 = vadd.f32 %v816, %v2205
    %v2207 = vpop.f32.mrb[0].mxu0
    %v2208 = vadd.f32 %v820, %v2207
    %v2209 = vpop.f32.mrb[0].mxu0
    %v2210 = vadd.f32 %v816, %v2209
    %v2211 = vpop.f32.mrb[0].mxu0
    %v2212 = vadd.f32 %v820, %v2211
    %2213 = vmatprep.mubr.bf16.mxu0 %v616
    %2214 = vmatmul.mubr.bf16.gmra.mrb[0].mxu0 %v615
    %v2215 = vpop.f32.mrb[0].mxu0
    %v2216 = vadd.f32 %v816, %v2215
    %v2217 = vpop.f32.mrb[0].mxu0
    %v2218 = vadd.f32 %v820, %v2217
    %v2219 = vpop.f32.mrb[0].mxu0
    %v2220 = vadd.f32 %v816, %v2219
    %v2221 = vpop.f32.mrb[0].mxu0
    %v2222 = vadd.f32 %v820, %v2221
    %2223 = vmatprep.mubr.bf16.mxu0 %v620
    %2224 = vmatmul.mubr.bf16.gmra.mrb[0].mxu0 %v619
    %v2225 = vpop.f32.mrb[0].mxu0
    %v2226 = vadd.f32 %v816, %v2225
    %v2227 = vpop.f32.mrb[0].mxu0
    %v2228 = vadd.f32 %v820, %v2227
    %v2229 = vpop.f32.mrb[0].mxu0
    %v2230 = vadd.f32 %v816, %v2229
    %v2231 = vpop.f32.mrb[0].mxu0
    %v2232 = vadd.f32 %v820, %v2231
    %2233 = vmatprep.mubr.bf16.mxu0 %v624
    %2234 = vmatmul.mubr.bf16.gmra.mrb[0].mxu0 %v623
    %v2235 = vpop.f32.mrb[0].mxu0
    %v2236 = vadd.f32 %v816, %v2235
    %v2237 = vpop.f32.mrb[0].mxu0
    %v2238 = vadd.f32 %v820, %v2237
    %v2239 = vpop.f32.mrb[0].mxu0
    %v2240 = vadd.f32 %v816, %v2239
    %v2241 = vpop.f32.mrb[0].mxu0
    %v2242 = vadd.f32 %v820, %v2241
    %2243 = vmatprep.mubr.bf16.mxu0 %v628
    %2244 = vmatmul.mubr.bf16.gmra.mrb[0].mxu0 %v627
    %v2245 = vpop.f32.mrb[0].mxu0
    %v2246 = vadd.f32 %v816, %v2245
    %v2247 = vpop.f32.mrb[0].mxu0
    %v2248 = vadd.f32 %v820, %v2247
    %v2249 = vpop.f32.mrb[0].mxu0
    %v2250 = vadd.f32 %v816, %v2249
    %v2251 = vpop.f32.mrb[0].mxu0
    %v2252 = vadd.f32 %v820, %v2251
    %2253 = vmatprep.mubr.bf16.mxu0 %v632
    %2254 = vmatmul.mubr.bf16.gmra.mrb[0].mxu0 %v631
    %v2255 = vpop.f32.mrb[0].mxu0
    %v2256 = vadd.f32 %v816, %v2255
    %v2257 = vpop.f32.mrb[0].mxu0
    %v2258 = vadd.f32 %v820, %v2257
    %v2259 = vpop.f32.mrb[0].mxu0
    %v2260 = vadd.f32 %v816, %v2259
    %v2261 = vpop.f32.mrb[0].mxu0
    %v2262 = vadd.f32 %v820, %v2261
    %2263 = vmatprep.mubr.bf16.mxu0 %v636
    %2264 = vmatmul.mubr.bf16.gmra.mrb[0].mxu0 %v635
    %v2265 = vpop.f32.mrb[0].mxu0
    %v2266 = vadd.f32 %v816, %v2265
    %v2267 = vpop.f32.mrb[0].mxu0
    %v2268 = vadd.f32 %v820, %v2267
    %v2269 = vpop.f32.mrb[0].mxu0
    %v2270 = vadd.f32 %v816, %v2269
    %v2271 = vpop.f32.mrb[0].mxu0
    %v2272 = vadd.f32 %v820, %v2271
    %2273 = vmatprep.mubr.bf16.mxu0 %v640
    %2274 = vmatmul.mubr.bf16.gmra.mrb[0].mxu0 %v639
    %v2275 = vpop.f32.mrb[0].mxu0
    %v2276 = vadd.f32 %v816, %v2275
    %v2277 = vpop.f32.mrb[0].mxu0
    %v2278 = vadd.f32 %v820, %v2277
    %v2279 = vpop.f32.mrb[0].mxu0
    %v2280 = vadd.f32 %v816, %v2279
    %v2281 = vpop.f32.mrb[0].mxu0
    %v2282 = vadd.f32 %v820, %v2281
    %2283 = vdwg.mxu0
    %2284 = vmatprep.subr.bf16.mxu0 %v1276
    %2285 = vmatpush1.bf16.msra.mxu0 %v1275
    %2286 = vmatprep.subr.bf16.mxu0 %v1280
    %2287 = vmatpush1.bf16.msra.mxu0 %v1279
    %2288 = vmatprep.subr.bf16.mxu0 %v1284
    %2289 = vmatpush1.bf16.msra.mxu0 %v1283
    %2290 = vmatprep.subr.bf16.mxu0 %v1288
    %2291 = vmatpush1.bf16.msra.mxu0 %v1287
    %2292 = vmatprep.subr.bf16.mxu0 %v1292
    %2293 = vmatpush1.bf16.msra.mxu0 %v1291
    %2294 = vmatprep.subr.bf16.mxu0 %v1296
    %2295 = vmatpush1.bf16.msra.mxu0 %v1295
    %2296 = vmatprep.subr.bf16.mxu0 %v1300
    %2297 = vmatpush1.bf16.msra.mxu0 %v1299
    %2298 = vmatprep.subr.bf16.mxu0 %v1304
    %2299 = vmatpush1.bf16.msra.mxu0 %v1303
    %2300 = vmatprep.subr.bf16.mxu0 %v1308
    %2301 = vmatpush1.bf16.msra.mxu0 %v1307
    %2302 = vmatprep.subr.bf16.mxu0 %v1312
    %2303 = vmatpush1.bf16.msra.mxu0 %v1311
    %2304 = vmatprep.subr.bf16.mxu0 %v1316
    %2305 = vmatpush1.bf16.msra.mxu0 %v1315
    %2306 = vmatprep.subr.bf16.mxu0 %v1320
    %2307 = vmatpush1.bf16.msra.mxu0 %v1319
    %2308 = vmatprep.subr.bf16.mxu0 %v1324
    %2309 = vmatpush1.bf16.msra.mxu0 %v1323
    %2310 = vmatprep.subr.bf16.mxu0 %v1328
    %2311 = vmatpush1.bf16.msra.mxu0 %v1327
    %2312 = vmatprep.subr.bf16.mxu0 %v1332
    %2313 = vmatpush1.bf16.msra.mxu0 %v1331
    %2314 = vmatprep.subr.bf16.mxu0 %v1336
    %2315 = vmatpush1.bf16.msra.mxu0 %v1335
    %2316 = vmatprep.mubr.bf16.mxu0 %v294
    %2317 = vmatmul.mubr.bf16.gmra.mrb[0].mxu0 %v293
    %v2318 = vpop.f32.mrb[0].mxu0
    %v2319 = vadd.f32 %v2046, %v2318
    %v2320 = vpop.f32.mrb[0].mxu0
    %v2321 = vadd.f32 %v2048, %v2320
    %v2322 = vpop.f32.mrb[0].mxu0
    %v2323 = vadd.f32 %v2050, %v2322
    %v2324 = vpop.f32.mrb[0].mxu0
    %v2325 = vadd.f32 %v2052, %v2324
    %2326 = vmatprep.mubr.bf16.mxu0 %v298
    %2327 = vmatmul.mubr.bf16.gmra.mrb[0].mxu0 %v297
    %v2328 = vpop.f32.mrb[0].mxu0
    %v2329 = vadd.f32 %v2056, %v2328
    %v2330 = vpop.f32.mrb[0].mxu0
    %v2331 = vadd.f32 %v2058, %v2330
    %v2332 = vpop.f32.mrb[0].mxu0
    %v2333 = vadd.f32 %v2060, %v2332
    %v2334 = vpop.f32.mrb[0].mxu0
    %v2335 = vadd.f32 %v2062, %v2334
    %2336 = vmatprep.mubr.bf16.mxu0 %v302
    %2337 = vmatmul.mubr.bf16.gmra.mrb[0].mxu0 %v301
    %v2338 = vpop.f32.mrb[0].mxu0
    %v2339 = vadd.f32 %v2066, %v2338
    %v2340 = vpop.f32.mrb[0].mxu0
    %v2341 = vadd.f32 %v2068, %v2340
    %v2342 = vpop.f32.mrb[0].mxu0
    %v2343 = vadd.f32 %v2070, %v2342
    %v2344 = vpop.f32.mrb[0].mxu0
    %v2345 = vadd.f32 %v2072, %v2344
    %2346 = vmatprep.mubr.bf16.mxu0 %v306
    %2347 = vmatmul.mubr.bf16.gmra.mrb[0].mxu0 %v305
    %v2348 = vpop.f32.mrb[0].mxu0
    %v2349 = vadd.f32 %v2076, %v2348
    %v2350 = vpop.f32.mrb[0].mxu0
    %v2351 = vadd.f32 %v2078, %v2350
    %v2352 = vpop.f32.mrb[0].mxu0
    %v2353 = vadd.f32 %v2080, %v2352
    %v2354 = vpop.f32.mrb[0].mxu0
    %v2355 = vadd.f32 %v2082, %v2354
    %2356 = vmatprep.mubr.bf16.mxu0 %v310
    %2357 = vmatmul.mubr.bf16.gmra.mrb[0].mxu0 %v309
    %v2358 = vpop.f32.mrb[0].mxu0
    %v2359 = vadd.f32 %v2086, %v2358
    %v2360 = vpop.f32.mrb[0].mxu0
    %v2361 = vadd.f32 %v2088, %v2360
    %v2362 = vpop.f32.mrb[0].mxu0
    %v2363 = vadd.f32 %v2090, %v2362
    %v2364 = vpop.f32.mrb[0].mxu0
    %v2365 = vadd.f32 %v2092, %v2364
    %2366 = vmatprep.mubr.bf16.mxu0 %v314
    %2367 = vmatmul.mubr.bf16.gmra.mrb[0].mxu0 %v313
    %v2368 = vpop.f32.mrb[0].mxu0
    %v2369 = vadd.f32 %v2096, %v2368
    %v2370 = vpop.f32.mrb[0].mxu0
    %v2371 = vadd.f32 %v2098, %v2370
    %v2372 = vpop.f32.mrb[0].mxu0
    %v2373 = vadd.f32 %v2100, %v2372
    %v2374 = vpop.f32.mrb[0].mxu0
    %v2375 = vadd.f32 %v2102, %v2374
    %2376 = vmatprep.mubr.bf16.mxu0 %v318
    %2377 = vmatmul.mubr.bf16.gmra.mrb[0].mxu0 %v317
    %v2378 = vpop.f32.mrb[0].mxu0
    %v2379 = vadd.f32 %v2106, %v2378
    %v2380 = vpop.f32.mrb[0].mxu0
    %v2381 = vadd.f32 %v2108, %v2380
    %v2382 = vpop.f32.mrb[0].mxu0
    %v2383 = vadd.f32 %v2110, %v2382
    %v2384 = vpop.f32.mrb[0].mxu0
    %v2385 = vadd.f32 %v2112, %v2384
    %2386 = vmatprep.mubr.bf16.mxu0 %v322
    %2387 = vmatmul.mubr.bf16.gmra.mrb[0].mxu0 %v321
    %v2388 = vpop.f32.mrb[0].mxu0
    %v2389 = vadd.f32 %v2116, %v2388
    %v2390 = vpop.f32.mrb[0].mxu0
    %v2391 = vadd.f32 %v2118, %v2390
    %v2392 = vpop.f32.mrb[0].mxu0
    %v2393 = vadd.f32 %v2120, %v2392
    %v2394 = vpop.f32.mrb[0].mxu0
    %v2395 = vadd.f32 %v2122, %v2394
    %2396 = vmatprep.mubr.bf16.mxu0 %v454
    %2397 = vmatmul.mubr.bf16.gmra.mrb[0].mxu0 %v453
    %v2398 = vpop.f32.mrb[0].mxu0
    %v2399 = vadd.f32 %v2126, %v2398
    %v2400 = vpop.f32.mrb[0].mxu0
    %v2401 = vadd.f32 %v2128, %v2400
    %v2402 = vpop.f32.mrb[0].mxu0
    %v2403 = vadd.f32 %v2130, %v2402
    %v2404 = vpop.f32.mrb[0].mxu0
    %v2405 = vadd.f32 %v2132, %v2404
    %2406 = vmatprep.mubr.bf16.mxu0 %v458
    %2407 = vmatmul.mubr.bf16.gmra.mrb[0].mxu0 %v457
    %v2408 = vpop.f32.mrb[0].mxu0
    %v2409 = vadd.f32 %v2136, %v2408
    %v2410 = vpop.f32.mrb[0].mxu0
    %v2411 = vadd.f32 %v2138, %v2410
    %v2412 = vpop.f32.mrb[0].mxu0
    %v2413 = vadd.f32 %v2140, %v2412
    %v2414 = vpop.f32.mrb[0].mxu0
    %v2415 = vadd.f32 %v2142, %v2414
    %2416 = vmatprep.mubr.bf16.mxu0 %v462
    %2417 = vmatmul.mubr.bf16.gmra.mrb[0].mxu0 %v461
    %v2418 = vpop.f32.mrb[0].mxu0
    %v2419 = vadd.f32 %v2146, %v2418
    %v2420 = vpop.f32.mrb[0].mxu0
    %v2421 = vadd.f32 %v2148, %v2420
    %v2422 = vpop.f32.mrb[0].mxu0
    %v2423 = vadd.f32 %v2150, %v2422
    %v2424 = vpop.f32.mrb[0].mxu0
    %v2425 = vadd.f32 %v2152, %v2424
    %2426 = vmatprep.mubr.bf16.mxu0 %v466
    %2427 = vmatmul.mubr.bf16.gmra.mrb[0].mxu0 %v465
    %v2428 = vpop.f32.mrb[0].mxu0
    %v2429 = vadd.f32 %v2156, %v2428
    %v2430 = vpop.f32.mrb[0].mxu0
    %v2431 = vadd.f32 %v2158, %v2430
    %v2432 = vpop.f32.mrb[0].mxu0
    %v2433 = vadd.f32 %v2160, %v2432
    %v2434 = vpop.f32.mrb[0].mxu0
    %v2435 = vadd.f32 %v2162, %v2434
    %2436 = vmatprep.mubr.bf16.mxu0 %v470
    %2437 = vmatmul.mubr.bf16.gmra.mrb[0].mxu0 %v469
    %v2438 = vpop.f32.mrb[0].mxu0
    %v2439 = vadd.f32 %v2166, %v2438
    %v2440 = vpop.f32.mrb[0].mxu0
    %v2441 = vadd.f32 %v2168, %v2440
    %v2442 = vpop.f32.mrb[0].mxu0
    %v2443 = vadd.f32 %v2170, %v2442
    %v2444 = vpop.f32.mrb[0].mxu0
    %v2445 = vadd.f32 %v2172, %v2444
    %2446 = vmatprep.mubr.bf16.mxu0 %v474
    %2447 = vmatmul.mubr.bf16.gmra.mrb[0].mxu0 %v473
    %v2448 = vpop.f32.mrb[0].mxu0
    %v2449 = vadd.f32 %v2176, %v2448
    %v2450 = vpop.f32.mrb[0].mxu0
    %v2451 = vadd.f32 %v2178, %v2450
    %v2452 = vpop.f32.mrb[0].mxu0
    %v2453 = vadd.f32 %v2180, %v2452
    %v2454 = vpop.f32.mrb[0].mxu0
    %v2455 = vadd.f32 %v2182, %v2454
    %2456 = vmatprep.mubr.bf16.mxu0 %v478
    %2457 = vmatmul.mubr.bf16.gmra.mrb[0].mxu0 %v477
    %v2458 = vpop.f32.mrb[0].mxu0
    %v2459 = vadd.f32 %v2186, %v2458
    %v2460 = vpop.f32.mrb[0].mxu0
    %v2461 = vadd.f32 %v2188, %v2460
    %v2462 = vpop.f32.mrb[0].mxu0
    %v2463 = vadd.f32 %v2190, %v2462
    %v2464 = vpop.f32.mrb[0].mxu0
    %v2465 = vadd.f32 %v2192, %v2464
    %2466 = vmatprep.mubr.bf16.mxu0 %v482
    %2467 = vmatmul.mubr.bf16.gmra.mrb[0].mxu0 %v481
    %v2468 = vpop.f32.mrb[0].mxu0
    %v2469 = vadd.f32 %v2196, %v2468
    %v2470 = vpop.f32.mrb[0].mxu0
    %v2471 = vadd.f32 %v2198, %v2470
    %v2472 = vpop.f32.mrb[0].mxu0
    %v2473 = vadd.f32 %v2200, %v2472
    %v2474 = vpop.f32.mrb[0].mxu0
    %v2475 = vadd.f32 %v2202, %v2474
    %2476 = vmatprep.mubr.bf16.mxu0 %v614
    %2477 = vmatmul.mubr.bf16.gmra.mrb[0].mxu0 %v613
    %v2478 = vpop.f32.mrb[0].mxu0
    %v2479 = vadd.f32 %v2206, %v2478
    %v2480 = vpop.f32.mrb[0].mxu0
    %v2481 = vadd.f32 %v2208, %v2480
    %v2482 = vpop.f32.mrb[0].mxu0
    %v2483 = vadd.f32 %v2210, %v2482
    %v2484 = vpop.f32.mrb[0].mxu0
    %v2485 = vadd.f32 %v2212, %v2484
    %2486 = vmatprep.mubr.bf16.mxu0 %v618
    %2487 = vmatmul.mubr.bf16.gmra.mrb[0].mxu0 %v617
    %v2488 = vpop.f32.mrb[0].mxu0
    %v2489 = vadd.f32 %v2216, %v2488
    %v2490 = vpop.f32.mrb[0].mxu0
    %v2491 = vadd.f32 %v2218, %v2490
    %v2492 = vpop.f32.mrb[0].mxu0
    %v2493 = vadd.f32 %v2220, %v2492
    %v2494 = vpop.f32.mrb[0].mxu0
    %v2495 = vadd.f32 %v2222, %v2494
    %2496 = vmatprep.mubr.bf16.mxu0 %v622
    %2497 = vmatmul.mubr.bf16.gmra.mrb[0].mxu0 %v621
    %v2498 = vpop.f32.mrb[0].mxu0
    %v2499 = vadd.f32 %v2226, %v2498
    %v2500 = vpop.f32.mrb[0].mxu0
    %v2501 = vadd.f32 %v2228, %v2500
    %v2502 = vpop.f32.mrb[0].mxu0
    %v2503 = vadd.f32 %v2230, %v2502
    %v2504 = vpop.f32.mrb[0].mxu0
    %v2505 = vadd.f32 %v2232, %v2504
    %2506 = vmatprep.mubr.bf16.mxu0 %v626
    %2507 = vmatmul.mubr.bf16.gmra.mrb[0].mxu0 %v625
    %v2508 = vpop.f32.mrb[0].mxu0
    %v2509 = vadd.f32 %v2236, %v2508
    %v2510 = vpop.f32.mrb[0].mxu0
    %v2511 = vadd.f32 %v2238, %v2510
    %v2512 = vpop.f32.mrb[0].mxu0
    %v2513 = vadd.f32 %v2240, %v2512
    %v2514 = vpop.f32.mrb[0].mxu0
    %v2515 = vadd.f32 %v2242, %v2514
    %2516 = vmatprep.mubr.bf16.mxu0 %v630
    %2517 = vmatmul.mubr.bf16.gmra.mrb[0].mxu0 %v629
    %v2518 = vpop.f32.mrb[0].mxu0
    %v2519 = vadd.f32 %v2246, %v2518
    %v2520 = vpop.f32.mrb[0].mxu0
    %v2521 = vadd.f32 %v2248, %v2520
    %v2522 = vpop.f32.mrb[0].mxu0
    %v2523 = vadd.f32 %v2250, %v2522
    %v2524 = vpop.f32.mrb[0].mxu0
    %v2525 = vadd.f32 %v2252, %v2524
    %2526 = vmatprep.mubr.bf16.mxu0 %v634
    %2527 = vmatmul.mubr.bf16.gmra.mrb[0].mxu0 %v633
    %v2528 = vpop.f32.mrb[0].mxu0
    %v2529 = vadd.f32 %v2256, %v2528
    %v2530 = vpop.f32.mrb[0].mxu0
    %v2531 = vadd.f32 %v2258, %v2530
    %v2532 = vpop.f32.mrb[0].mxu0
    %v2533 = vadd.f32 %v2260, %v2532
    %v2534 = vpop.f32.mrb[0].mxu0
    %v2535 = vadd.f32 %v2262, %v2534
    %2536 = vmatprep.mubr.bf16.mxu0 %v638
    %2537 = vmatmul.mubr.bf16.gmra.mrb[0].mxu0 %v637
    %v2538 = vpop.f32.mrb[0].mxu0
    %v2539 = vadd.f32 %v2266, %v2538
    %v2540 = vpop.f32.mrb[0].mxu0
    %v2541 = vadd.f32 %v2268, %v2540
    %v2542 = vpop.f32.mrb[0].mxu0
    %v2543 = vadd.f32 %v2270, %v2542
    %v2544 = vpop.f32.mrb[0].mxu0
    %v2545 = vadd.f32 %v2272, %v2544
    %2546 = vmatprep.mubr.bf16.mxu0 %v642
    %2547 = vmatmul.mubr.bf16.gmra.mrb[0].mxu0 %v641
    %v2548 = vpop.f32.mrb[0].mxu0
    %v2549 = vadd.f32 %v2276, %v2548
    %v2550 = vpop.f32.mrb[0].mxu0
    %v2551 = vadd.f32 %v2278, %v2550
    %v2552 = vpop.f32.mrb[0].mxu0
    %v2553 = vadd.f32 %v2280, %v2552
    %v2554 = vpop.f32.mrb[0].mxu0
    %v2555 = vadd.f32 %v2282, %v2554
    %2556 = vdwg.mxu0
    %v2557 = vmax.f32 %v1773, 0.0
    %v2558 = vmax.f32 %v1775, 0.0
    %v2559 = vmax.f32 %v2319, 0.0
    %v2560 = vmax.f32 %v2321, 0.0
    %v2561 = vmax.f32 %v1777, 0.0
    %v2562 = vmax.f32 %v1779, 0.0
    %v2563 = vmax.f32 %v2323, 0.0
    %v2564 = vmax.f32 %v2325, 0.0
    %v2565 = vmax.f32 %v1783, 0.0
    %v2566 = vmax.f32 %v1785, 0.0
    %v2567 = vmax.f32 %v2329, 0.0
    %v2568 = vmax.f32 %v2331, 0.0
    %v2569 = vmax.f32 %v1787, 0.0
    %v2570 = vmax.f32 %v1789, 0.0
    %v2571 = vmax.f32 %v2333, 0.0
    %v2572 = vmax.f32 %v2335, 0.0
    %v2573 = vmax.f32 %v1793, 0.0
    %v2574 = vmax.f32 %v1795, 0.0
    %v2575 = vmax.f32 %v2339, 0.0
    %v2576 = vmax.f32 %v2341, 0.0
    %v2577 = vmax.f32 %v1797, 0.0
    %v2578 = vmax.f32 %v1799, 0.0
    %v2579 = vmax.f32 %v2343, 0.0
    %v2580 = vmax.f32 %v2345, 0.0
    %v2581 = vmax.f32 %v1803, 0.0
    %v2582 = vmax.f32 %v1805, 0.0
    %v2583 = vmax.f32 %v2349, 0.0
    %v2584 = vmax.f32 %v2351, 0.0
    %v2585 = vmax.f32 %v1807, 0.0
    %v2586 = vmax.f32 %v1809, 0.0
    %v2587 = vmax.f32 %v2353, 0.0
    %v2588 = vmax.f32 %v2355, 0.0
    %v2589 = vmax.f32 %v1813, 0.0
    %v2590 = vmax.f32 %v1815, 0.0
    %v2591 = vmax.f32 %v2359, 0.0
    %v2592 = vmax.f32 %v2361, 0.0
    %v2593 = vmax.f32 %v1817, 0.0
    %v2594 = vmax.f32 %v1819, 0.0
    %v2595 = vmax.f32 %v2363, 0.0
    %v2596 = vmax.f32 %v2365, 0.0
    %v2597 = vmax.f32 %v1823, 0.0
    %v2598 = vmax.f32 %v1825, 0.0
    %v2599 = vmax.f32 %v2369, 0.0
    %v2600 = vmax.f32 %v2371, 0.0
    %v2601 = vmax.f32 %v1827, 0.0
    %v2602 = vmax.f32 %v1829, 0.0
    %v2603 = vmax.f32 %v2373, 0.0
    %v2604 = vmax.f32 %v2375, 0.0
    %v2605 = vmax.f32 %v1833, 0.0
    %v2606 = vmax.f32 %v1835, 0.0
    %v2607 = vmax.f32 %v2379, 0.0
    %v2608 = vmax.f32 %v2381, 0.0
    %v2609 = vmax.f32 %v1837, 0.0
    %v2610 = vmax.f32 %v1839, 0.0
    %v2611 = vmax.f32 %v2383, 0.0
    %v2612 = vmax.f32 %v2385, 0.0
    %v2613 = vmax.f32 %v1843, 0.0
    %v2614 = vmax.f32 %v1845, 0.0
    %v2615 = vmax.f32 %v2389, 0.0
    %v2616 = vmax.f32 %v2391, 0.0
    %v2617 = vmax.f32 %v1847, 0.0
    %v2618 = vmax.f32 %v1849, 0.0
    %v2619 = vmax.f32 %v2393, 0.0
    %v2620 = vmax.f32 %v2395, 0.0
    %v2621 = vmax.f32 %v1853, 0.0
    %v2622 = vmax.f32 %v1855, 0.0
    %v2623 = vmax.f32 %v2399, 0.0
    %v2624 = vmax.f32 %v2401, 0.0
    %v2625 = vmax.f32 %v1857, 0.0
    %v2626 = vmax.f32 %v1859, 0.0
    %v2627 = vmax.f32 %v2403, 0.0
    %v2628 = vmax.f32 %v2405, 0.0
    %v2629 = vmax.f32 %v1863, 0.0
    %v2630 = vmax.f32 %v1865, 0.0
    %v2631 = vmax.f32 %v2409, 0.0
    %v2632 = vmax.f32 %v2411, 0.0
    %v2633 = vmax.f32 %v1867, 0.0
    %v2634 = vmax.f32 %v1869, 0.0
    %v2635 = vmax.f32 %v2413, 0.0
    %v2636 = vmax.f32 %v2415, 0.0
    %v2637 = vmax.f32 %v1873, 0.0
    %v2638 = vmax.f32 %v1875, 0.0
    %v2639 = vmax.f32 %v2419, 0.0
    %v2640 = vmax.f32 %v2421, 0.0
    %v2641 = vmax.f32 %v1877, 0.0
    %v2642 = vmax.f32 %v1879, 0.0
    %v2643 = vmax.f32 %v2423, 0.0
    %v2644 = vmax.f32 %v2425, 0.0
    %v2645 = vmax.f32 %v1883, 0.0
    %v2646 = vmax.f32 %v1885, 0.0
    %v2647 = vmax.f32 %v2429, 0.0
    %v2648 = vmax.f32 %v2431, 0.0
    %v2649 = vmax.f32 %v1887, 0.0
    %v2650 = vmax.f32 %v1889, 0.0
    %v2651 = vmax.f32 %v2433, 0.0
    %v2652 = vmax.f32 %v2435, 0.0
    %v2653 = vmax.f32 %v1893, 0.0
    %v2654 = vmax.f32 %v1895, 0.0
    %v2655 = vmax.f32 %v2439, 0.0
    %v2656 = vmax.f32 %v2441, 0.0
    %v2657 = vmax.f32 %v1897, 0.0
    %v2658 = vmax.f32 %v1899, 0.0
    %v2659 = vmax.f32 %v2443, 0.0
    %v2660 = vmax.f32 %v2445, 0.0
    %v2661 = vmax.f32 %v1903, 0.0
    %v2662 = vmax.f32 %v1905, 0.0
    %v2663 = vmax.f32 %v2449, 0.0
    %v2664 = vmax.f32 %v2451, 0.0
    %v2665 = vmax.f32 %v1907, 0.0
    %v2666 = vmax.f32 %v1909, 0.0
    %v2667 = vmax.f32 %v2453, 0.0
    %v2668 = vmax.f32 %v2455, 0.0
    %v2669 = vmax.f32 %v1913, 0.0
    %v2670 = vmax.f32 %v1915, 0.0
    %v2671 = vmax.f32 %v2459, 0.0
    %v2672 = vmax.f32 %v2461, 0.0
    %v2673 = vmax.f32 %v1917, 0.0
    %v2674 = vmax.f32 %v1919, 0.0
    %v2675 = vmax.f32 %v2463, 0.0
    %v2676 = vmax.f32 %v2465, 0.0
    %v2677 = vmax.f32 %v1923, 0.0
    %v2678 = vmax.f32 %v1925, 0.0
    %v2679 = vmax.f32 %v2469, 0.0
    %v2680 = vmax.f32 %v2471, 0.0
    %v2681 = vmax.f32 %v1927, 0.0
    %v2682 = vmax.f32 %v1929, 0.0
    %v2683 = vmax.f32 %v2473, 0.0
    %v2684 = vmax.f32 %v2475, 0.0
    %v2685 = vmax.f32 %v1933, 0.0
    %v2686 = vmax.f32 %v1935, 0.0
    %v2687 = vmax.f32 %v2479, 0.0
    %v2688 = vmax.f32 %v2481, 0.0
    %v2689 = vmax.f32 %v1937, 0.0
    %v2690 = vmax.f32 %v1939, 0.0
    %v2691 = vmax.f32 %v2483, 0.0
    %v2692 = vmax.f32 %v2485, 0.0
    %v2693 = vmax.f32 %v1943, 0.0
    %v2694 = vmax.f32 %v1945, 0.0
    %v2695 = vmax.f32 %v2489, 0.0
    %v2696 = vmax.f32 %v2491, 0.0
    %v2697 = vmax.f32 %v1947, 0.0
    %v2698 = vmax.f32 %v1949, 0.0
    %v2699 = vmax.f32 %v2493, 0.0
    %v2700 = vmax.f32 %v2495, 0.0
    %v2701 = vmax.f32 %v1953, 0.0
    %v2702 = vmax.f32 %v1955, 0.0
    %v2703 = vmax.f32 %v2499, 0.0
    %v2704 = vmax.f32 %v2501, 0.0
    %v2705 = vmax.f32 %v1957, 0.0
    %v2706 = vmax.f32 %v1959, 0.0
    %v2707 = vmax.f32 %v2503, 0.0
    %v2708 = vmax.f32 %v2505, 0.0
    %v2709 = vmax.f32 %v1963, 0.0
    %v2710 = vmax.f32 %v1965, 0.0
    %v2711 = vmax.f32 %v2509, 0.0
    %v2712 = vmax.f32 %v2511, 0.0
    %v2713 = vmax.f32 %v1967, 0.0
    %v2714 = vmax.f32 %v1969, 0.0
    %v2715 = vmax.f32 %v2513, 0.0
    %v2716 = vmax.f32 %v2515, 0.0
    %v2717 = vmax.f32 %v1973, 0.0
    %v2718 = vmax.f32 %v1975, 0.0
    %v2719 = vmax.f32 %v2519, 0.0
    %v2720 = vmax.f32 %v2521, 0.0
    %v2721 = vmax.f32 %v1977, 0.0
    %v2722 = vmax.f32 %v1979, 0.0
    %v2723 = vmax.f32 %v2523, 0.0
    %v2724 = vmax.f32 %v2525, 0.0
    %v2725 = vmax.f32 %v1983, 0.0
    %v2726 = vmax.f32 %v1985, 0.0
    %v2727 = vmax.f32 %v2529, 0.0
    %v2728 = vmax.f32 %v2531, 0.0
    %v2729 = vmax.f32 %v1987, 0.0
    %v2730 = vmax.f32 %v1989, 0.0
    %v2731 = vmax.f32 %v2533, 0.0
    %v2732 = vmax.f32 %v2535, 0.0
    %v2733 = vmax.f32 %v1993, 0.0
    %v2734 = vmax.f32 %v1995, 0.0
    %v2735 = vmax.f32 %v2539, 0.0
    %v2736 = vmax.f32 %v2541, 0.0
    %v2737 = vmax.f32 %v1997, 0.0
    %v2738 = vmax.f32 %v1999, 0.0
    %v2739 = vmax.f32 %v2543, 0.0
    %v2740 = vmax.f32 %v2545, 0.0
    %v2741 = vmax.f32 %v2003, 0.0
    %v2742 = vmax.f32 %v2005, 0.0
    %v2743 = vmax.f32 %v2549, 0.0
    %v2744 = vmax.f32 %v2551, 0.0
    %v2745 = vmax.f32 %v2007, 0.0
    %v2746 = vmax.f32 %v2009, 0.0
    %v2747 = vmax.f32 %v2553, 0.0
    %v2748 = vmax.f32 %v2555, 0.0
    %v2749 = vpack.c.bf16 %v2561, %v2557
    %v2750 = vpack.c.bf16 %v2562, %v2558
    %v2751 = vpack.c.bf16 %v2563, %v2559
    %v2752 = vpack.c.bf16 %v2564, %v2560
    %v2753 = vpack.c.bf16 %v2569, %v2565
    %v2754 = vpack.c.bf16 %v2570, %v2566
    %v2755 = vpack.c.bf16 %v2571, %v2567
    %v2756 = vpack.c.bf16 %v2572, %v2568
    %v2757 = vpack.c.bf16 %v2577, %v2573
    %v2758 = vpack.c.bf16 %v2578, %v2574
    %v2759 = vpack.c.bf16 %v2579, %v2575
    %v2760 = vpack.c.bf16 %v2580, %v2576
    %v2761 = vpack.c.bf16 %v2585, %v2581
    %v2762 = vpack.c.bf16 %v2586, %v2582
    %v2763 = vpack.c.bf16 %v2587, %v2583
    %v2764 = vpack.c.bf16 %v2588, %v2584
    %v2765 = vpack.c.bf16 %v2593, %v2589
    %v2766 = vpack.c.bf16 %v2594, %v2590
    %v2767 = vpack.c.bf16 %v2595, %v2591
    %v2768 = vpack.c.bf16 %v2596, %v2592
    %v2769 = vpack.c.bf16 %v2601, %v2597
    %v2770 = vpack.c.bf16 %v2602, %v2598
    %v2771 = vpack.c.bf16 %v2603, %v2599
    %v2772 = vpack.c.bf16 %v2604, %v2600
    %v2773 = vpack.c.bf16 %v2609, %v2605
    %v2774 = vpack.c.bf16 %v2610, %v2606
    %v2775 = vpack.c.bf16 %v2611, %v2607
    %v2776 = vpack.c.bf16 %v2612, %v2608
    %v2777 = vpack.c.bf16 %v2617, %v2613
    %v2778 = vpack.c.bf16 %v2618, %v2614
    %v2779 = vpack.c.bf16 %v2619, %v2615
    %v2780 = vpack.c.bf16 %v2620, %v2616
    %v2781 = vpack.c.bf16 %v2625, %v2621
    %v2782 = vpack.c.bf16 %v2626, %v2622
    %v2783 = vpack.c.bf16 %v2627, %v2623
    %v2784 = vpack.c.bf16 %v2628, %v2624
    %v2785 = vpack.c.bf16 %v2633, %v2629
    %v2786 = vpack.c.bf16 %v2634, %v2630
    %v2787 = vpack.c.bf16 %v2635, %v2631
    %v2788 = vpack.c.bf16 %v2636, %v2632
    %v2789 = vpack.c.bf16 %v2641, %v2637
    %v2790 = vpack.c.bf16 %v2642, %v2638
    %v2791 = vpack.c.bf16 %v2643, %v2639
    %v2792 = vpack.c.bf16 %v2644, %v2640
    %v2793 = vpack.c.bf16 %v2649, %v2645
    %v2794 = vpack.c.bf16 %v2650, %v2646
    %v2795 = vpack.c.bf16 %v2651, %v2647
    %v2796 = vpack.c.bf16 %v2652, %v2648
    %v2797 = vpack.c.bf16 %v2657, %v2653
    %v2798 = vpack.c.bf16 %v2658, %v2654
    %v2799 = vpack.c.bf16 %v2659, %v2655
    %v2800 = vpack.c.bf16 %v2660, %v2656
    %v2801 = vpack.c.bf16 %v2665, %v2661
    %v2802 = vpack.c.bf16 %v2666, %v2662
    %v2803 = vpack.c.bf16 %v2667, %v2663
    %v2804 = vpack.c.bf16 %v2668, %v2664
    %v2805 = vpack.c.bf16 %v2673, %v2669
    %v2806 = vpack.c.bf16 %v2674, %v2670
    %v2807 = vpack.c.bf16 %v2675, %v2671
    %v2808 = vpack.c.bf16 %v2676, %v2672
    %v2809 = vpack.c.bf16 %v2681, %v2677
    %v2810 = vpack.c.bf16 %v2682, %v2678
    %v2811 = vpack.c.bf16 %v2683, %v2679
    %v2812 = vpack.c.bf16 %v2684, %v2680
    %v2813 = vpack.c.bf16 %v2689, %v2685
    %v2814 = vpack.c.bf16 %v2690, %v2686
    %v2815 = vpack.c.bf16 %v2691, %v2687
    %v2816 = vpack.c.bf16 %v2692, %v2688
    %v2817 = vpack.c.bf16 %v2697, %v2693
    %v2818 = vpack.c.bf16 %v2698, %v2694
    %v2819 = vpack.c.bf16 %v2699, %v2695
    %v2820 = vpack.c.bf16 %v2700, %v2696
    %v2821 = vpack.c.bf16 %v2705, %v2701
    %v2822 = vpack.c.bf16 %v2706, %v2702
    %v2823 = vpack.c.bf16 %v2707, %v2703
    %v2824 = vpack.c.bf16 %v2708, %v2704
    %v2825 = vpack.c.bf16 %v2713, %v2709
    %v2826 = vpack.c.bf16 %v2714, %v2710
    %v2827 = vpack.c.bf16 %v2715, %v2711
    %v2828 = vpack.c.bf16 %v2716, %v2712
    %v2829 = vpack.c.bf16 %v2721, %v2717
    %v2830 = vpack.c.bf16 %v2722, %v2718
    %v2831 = vpack.c.bf16 %v2723, %v2719
    %v2832 = vpack.c.bf16 %v2724, %v2720
    %v2833 = vpack.c.bf16 %v2729, %v2725
    %v2834 = vpack.c.bf16 %v2730, %v2726
    %v2835 = vpack.c.bf16 %v2731, %v2727
    %v2836 = vpack.c.bf16 %v2732, %v2728
    %v2837 = vpack.c.bf16 %v2737, %v2733
    %v2838 = vpack.c.bf16 %v2738, %v2734
    %v2839 = vpack.c.bf16 %v2739, %v2735
    %v2840 = vpack.c.bf16 %v2740, %v2736
    %v2841 = vpack.c.bf16 %v2745, %v2741
    %v2842 = vpack.c.bf16 %v2746, %v2742
    %v2843 = vpack.c.bf16 %v2747, %v2743
    %v2844 = vpack.c.bf16 %v2748, %v2744
    %v2845 = vld [vmem:[#allocation10] sm:$0xff]
    %v2846 = vld [vmem:[#allocation10 + $0x8] sm:$0xff]
    %v2847 = vld [vmem:[#allocation10 + $0x10] sm:$0xff]
    %v2848 = vld [vmem:[#allocation10 + $0x18] sm:$0xff]
    %v2849 = vld [vmem:[#allocation10 + $0x20] sm:$0xff]
    %v2850 = vld [vmem:[#allocation10 + $0x28] sm:$0xff]
    %v2851 = vld [vmem:[#allocation10 + $0x30] sm:$0xff]
    %v2852 = vld [vmem:[#allocation10 + $0x38] sm:$0xff]
    %v2853 = vld [vmem:[#allocation10 + $0x40] sm:$0xff]
    %v2854 = vld [vmem:[#allocation10 + $0x48] sm:$0xff]
    %v2855 = vld [vmem:[#allocation10 + $0x50] sm:$0xff]
    %v2856 = vld [vmem:[#allocation10 + $0x58] sm:$0xff]
    %v2857 = vld [vmem:[#allocation10 + $0x60] sm:$0xff]
    %v2858 = vld [vmem:[#allocation10 + $0x68] sm:$0xff]
    %v2859 = vld [vmem:[#allocation10 + $0x70] sm:$0xff]
    %v2860 = vld [vmem:[#allocation10 + $0x78] sm:$0xff]
    %v2861 = vld [vmem:[#allocation10 + $0x80] sm:$0xff]
    %v2862 = vld [vmem:[#allocation10 + $0x88] sm:$0xff]
    %v2863 = vld [vmem:[#allocation10 + $0x90] sm:$0xff]
    %v2864 = vld [vmem:[#allocation10 + $0x98] sm:$0xff]
    %v2865 = vld [vmem:[#allocation10 + $0xa0] sm:$0xff]
    %v2866 = vld [vmem:[#allocation10 + $0xa8] sm:$0xff]
    %v2867 = vld [vmem:[#allocation10 + $0xb0] sm:$0xff]
    %v2868 = vld [vmem:[#allocation10 + $0xb8] sm:$0xff]
    %v2869 = vld [vmem:[#allocation10 + $0xc0] sm:$0xff]
    %v2870 = vld [vmem:[#allocation10 + $0xc8] sm:$0xff]
    %v2871 = vld [vmem:[#allocation10 + $0xd0] sm:$0xff]
    %v2872 = vld [vmem:[#allocation10 + $0xd8] sm:$0xff]
    %v2873 = vld [vmem:[#allocation10 + $0xe0] sm:$0xff]
    %v2874 = vld [vmem:[#allocation10 + $0xe8] sm:$0xff]
    %v2875 = vld [vmem:[#allocation10 + $0xf0] sm:$0xff]
    %v2876 = vld [vmem:[#allocation10 + $0xf8] sm:$0xff]
    %v2877 = vld [vmem:[#allocation10 + $0x100] sm:$0xff]
    %v2878 = vld [vmem:[#allocation10 + $0x108] sm:$0xff]
    %v2879 = vld [vmem:[#allocation10 + $0x110] sm:$0xff]
    %v2880 = vld [vmem:[#allocation10 + $0x118] sm:$0xff]
    %v2881 = vld [vmem:[#allocation10 + $0x120] sm:$0xff]
    %v2882 = vld [vmem:[#allocation10 + $0x128] sm:$0xff]
    %v2883 = vld [vmem:[#allocation10 + $0x130] sm:$0xff]
    %v2884 = vld [vmem:[#allocation10 + $0x138] sm:$0xff]
    %v2885 = vld [vmem:[#allocation10 + $0x140] sm:$0xff]
    %v2886 = vld [vmem:[#allocation10 + $0x148] sm:$0xff]
    %v2887 = vld [vmem:[#allocation10 + $0x150] sm:$0xff]
    %v2888 = vld [vmem:[#allocation10 + $0x158] sm:$0xff]
    %v2889 = vld [vmem:[#allocation10 + $0x160] sm:$0xff]
    %v2890 = vld [vmem:[#allocation10 + $0x168] sm:$0xff]
    %v2891 = vld [vmem:[#allocation10 + $0x170] sm:$0xff]
    %v2892 = vld [vmem:[#allocation10 + $0x178] sm:$0xff]
    %v2893 = vld [vmem:[#allocation10 + $0x180] sm:$0xff]
    %v2894 = vld [vmem:[#allocation10 + $0x188] sm:$0xff]
    %v2895 = vld [vmem:[#allocation10 + $0x190] sm:$0xff]
    %v2896 = vld [vmem:[#allocation10 + $0x198] sm:$0xff]
    %v2897 = vld [vmem:[#allocation10 + $0x1a0] sm:$0xff]
    %v2898 = vld [vmem:[#allocation10 + $0x1a8] sm:$0xff]
    %v2899 = vld [vmem:[#allocation10 + $0x1b0] sm:$0xff]
    %v2900 = vld [vmem:[#allocation10 + $0x1b8] sm:$0xff]
    %v2901 = vld [vmem:[#allocation10 + $0x1c0] sm:$0xff]
    %v2902 = vld [vmem:[#allocation10 + $0x1c8] sm:$0xff]
    %v2903 = vld [vmem:[#allocation10 + $0x1d0] sm:$0xff]
    %v2904 = vld [vmem:[#allocation10 + $0x1d8] sm:$0xff]
    %v2905 = vld [vmem:[#allocation10 + $0x1e0] sm:$0xff]
    %v2906 = vld [vmem:[#allocation10 + $0x1e8] sm:$0xff]
    %v2907 = vld [vmem:[#allocation10 + $0x1f0] sm:$0xff]
    %v2908 = vld [vmem:[#allocation10 + $0x1f8] sm:$0xff]
    %v2909 = vld [vmem:[%s6] sm:$0x3]
    %v2911 = vlaneseq
    %v2912 = vshrl.u32 %v2911, 7
    %v2913 = vsub.s32 0, %v2912
    %v2914 = vrot.slane %v2909, %v2913
    %v2915 = vlaneseq
    %v2916 = vshrl.u32 %v2915, 7
    %v2917 = vsub.s32 1, %v2916
    %v2918 = vrot.slane %v2909, %v2917
    %v2985 = vunpack.c.l.b16 %v2845
    %v2986 = vunpack.c.h.b16 %v2845
    %v2987 = vunpack.c.l.b16 %v2846
    %v2988 = vunpack.c.h.b16 %v2846
    %v2989 = vunpack.c.l.b16 %v2847
    %v2990 = vunpack.c.h.b16 %v2847
    %v2991 = vunpack.c.l.b16 %v2848
    %v2992 = vunpack.c.h.b16 %v2848
    %v2993 = vunpack.c.l.b16 %v2849
    %v2994 = vunpack.c.h.b16 %v2849
    %v2995 = vunpack.c.l.b16 %v2850
    %v2996 = vunpack.c.h.b16 %v2850
    %v2997 = vunpack.c.l.b16 %v2851
    %v2998 = vunpack.c.h.b16 %v2851
    %v2999 = vunpack.c.l.b16 %v2852
    %v3000 = vunpack.c.h.b16 %v2852
    %v3001 = vunpack.c.l.b16 %v2853
    %v3002 = vunpack.c.h.b16 %v2853
    %v3003 = vunpack.c.l.b16 %v2854
    %v3004 = vunpack.c.h.b16 %v2854
    %v3005 = vunpack.c.l.b16 %v2855
    %v3006 = vunpack.c.h.b16 %v2855
    %v3007 = vunpack.c.l.b16 %v2856
    %v3008 = vunpack.c.h.b16 %v2856
    %v3009 = vunpack.c.l.b16 %v2857
    %v3010 = vunpack.c.h.b16 %v2857
    %v3011 = vunpack.c.l.b16 %v2858
    %v3012 = vunpack.c.h.b16 %v2858
    %v3013 = vunpack.c.l.b16 %v2859
    %v3014 = vunpack.c.h.b16 %v2859
    %v3015 = vunpack.c.l.b16 %v2860
    %v3016 = vunpack.c.h.b16 %v2860
    %v3017 = vunpack.c.l.b16 %v2861
    %v3018 = vunpack.c.h.b16 %v2861
    %v3019 = vunpack.c.l.b16 %v2862
    %v3020 = vunpack.c.h.b16 %v2862
    %v3021 = vunpack.c.l.b16 %v2863
    %v3022 = vunpack.c.h.b16 %v2863
    %v3023 = vunpack.c.l.b16 %v2864
    %v3024 = vunpack.c.h.b16 %v2864
    %v3025 = vunpack.c.l.b16 %v2865
    %v3026 = vunpack.c.h.b16 %v2865
    %v3027 = vunpack.c.l.b16 %v2866
    %v3028 = vunpack.c.h.b16 %v2866
    %v3029 = vunpack.c.l.b16 %v2867
    %v3030 = vunpack.c.h.b16 %v2867
    %v3031 = vunpack.c.l.b16 %v2868
    %v3032 = vunpack.c.h.b16 %v2868
    %v3033 = vunpack.c.l.b16 %v2869
    %v3034 = vunpack.c.h.b16 %v2869
    %v3035 = vunpack.c.l.b16 %v2870
    %v3036 = vunpack.c.h.b16 %v2870
    %v3037 = vunpack.c.l.b16 %v2871
    %v3038 = vunpack.c.h.b16 %v2871
    %v3039 = vunpack.c.l.b16 %v2872
    %v3040 = vunpack.c.h.b16 %v2872
    %v3041 = vunpack.c.l.b16 %v2873
    %v3042 = vunpack.c.h.b16 %v2873
    %v3043 = vunpack.c.l.b16 %v2874
    %v3044 = vunpack.c.h.b16 %v2874
    %v3045 = vunpack.c.l.b16 %v2875
    %v3046 = vunpack.c.h.b16 %v2875
    %v3047 = vunpack.c.l.b16 %v2876
    %v3048 = vunpack.c.h.b16 %v2876
    %v3049 = vunpack.c.l.b16 %v2877
    %v3050 = vunpack.c.h.b16 %v2877
    %v3051 = vunpack.c.l.b16 %v2878
    %v3052 = vunpack.c.h.b16 %v2878
    %v3053 = vunpack.c.l.b16 %v2879
    %v3054 = vunpack.c.h.b16 %v2879
    %v3055 = vunpack.c.l.b16 %v2880
    %v3056 = vunpack.c.h.b16 %v2880
    %v3057 = vunpack.c.l.b16 %v2881
    %v3058 = vunpack.c.h.b16 %v2881
    %v3059 = vunpack.c.l.b16 %v2882
    %v3060 = vunpack.c.h.b16 %v2882
    %v3061 = vunpack.c.l.b16 %v2883
    %v3062 = vunpack.c.h.b16 %v2883
    %v3063 = vunpack.c.l.b16 %v2884
    %v3064 = vunpack.c.h.b16 %v2884
    %v3065 = vunpack.c.l.b16 %v2885
    %v3066 = vunpack.c.h.b16 %v2885
    %v3067 = vunpack.c.l.b16 %v2886
    %v3068 = vunpack.c.h.b16 %v2886
    %v3069 = vunpack.c.l.b16 %v2887
    %v3070 = vunpack.c.h.b16 %v2887
    %v3071 = vunpack.c.l.b16 %v2888
    %v3072 = vunpack.c.h.b16 %v2888
    %v3073 = vunpack.c.l.b16 %v2889
    %v3074 = vunpack.c.h.b16 %v2889
    %v3075 = vunpack.c.l.b16 %v2890
    %v3076 = vunpack.c.h.b16 %v2890
    %v3077 = vunpack.c.l.b16 %v2891
    %v3078 = vunpack.c.h.b16 %v2891
    %v3079 = vunpack.c.l.b16 %v2892
    %v3080 = vunpack.c.h.b16 %v2892
    %v3081 = vunpack.c.l.b16 %v2893
    %v3082 = vunpack.c.h.b16 %v2893
    %v3083 = vunpack.c.l.b16 %v2894
    %v3084 = vunpack.c.h.b16 %v2894
    %v3085 = vunpack.c.l.b16 %v2895
    %v3086 = vunpack.c.h.b16 %v2895
    %v3087 = vunpack.c.l.b16 %v2896
    %v3088 = vunpack.c.h.b16 %v2896
    %v3089 = vunpack.c.l.b16 %v2897
    %v3090 = vunpack.c.h.b16 %v2897
    %v3091 = vunpack.c.l.b16 %v2898
    %v3092 = vunpack.c.h.b16 %v2898
    %v3093 = vunpack.c.l.b16 %v2899
    %v3094 = vunpack.c.h.b16 %v2899
    %v3095 = vunpack.c.l.b16 %v2900
    %v3096 = vunpack.c.h.b16 %v2900
    %v3097 = vunpack.c.l.b16 %v2901
    %v3098 = vunpack.c.h.b16 %v2901
    %v3099 = vunpack.c.l.b16 %v2902
    %v3100 = vunpack.c.h.b16 %v2902
    %v3101 = vunpack.c.l.b16 %v2903
    %v3102 = vunpack.c.h.b16 %v2903
    %v3103 = vunpack.c.l.b16 %v2904
    %v3104 = vunpack.c.h.b16 %v2904
    %v3105 = vunpack.c.l.b16 %v2905
    %v3106 = vunpack.c.h.b16 %v2905
    %v3107 = vunpack.c.l.b16 %v2906
    %v3108 = vunpack.c.h.b16 %v2906
    %v3109 = vunpack.c.l.b16 %v2907
    %v3110 = vunpack.c.h.b16 %v2907
    %v3111 = vunpack.c.l.b16 %v2908
    %v3112 = vunpack.c.h.b16 %v2908
    %v3113 = vpack.c.b16 %v2987, %v2985
    %v3114 = vpack.c.b16 %v2988, %v2986
    %v3115 = vpack.c.b16 %v2991, %v2989
    %v3116 = vpack.c.b16 %v2992, %v2990
    %v3117 = vpack.c.b16 %v2995, %v2993
    %v3118 = vpack.c.b16 %v2996, %v2994
    %v3119 = vpack.c.b16 %v2999, %v2997
    %v3120 = vpack.c.b16 %v3000, %v2998
    %v3121 = vpack.c.b16 %v3003, %v3001
    %v3122 = vpack.c.b16 %v3004, %v3002
    %v3123 = vpack.c.b16 %v3007, %v3005
    %v3124 = vpack.c.b16 %v3008, %v3006
    %v3125 = vpack.c.b16 %v3011, %v3009
    %v3126 = vpack.c.b16 %v3012, %v3010
    %v3127 = vpack.c.b16 %v3015, %v3013
    %v3128 = vpack.c.b16 %v3016, %v3014
    %v3129 = vpack.c.b16 %v3019, %v3017
    %v3130 = vpack.c.b16 %v3020, %v3018
    %v3131 = vpack.c.b16 %v3023, %v3021
    %v3132 = vpack.c.b16 %v3024, %v3022
    %v3133 = vpack.c.b16 %v3027, %v3025
    %v3134 = vpack.c.b16 %v3028, %v3026
    %v3135 = vpack.c.b16 %v3031, %v3029
    %v3136 = vpack.c.b16 %v3032, %v3030
    %v3137 = vpack.c.b16 %v3035, %v3033
    %v3138 = vpack.c.b16 %v3036, %v3034
    %v3139 = vpack.c.b16 %v3039, %v3037
    %v3140 = vpack.c.b16 %v3040, %v3038
    %v3141 = vpack.c.b16 %v3043, %v3041
    %v3142 = vpack.c.b16 %v3044, %v3042
    %v3143 = vpack.c.b16 %v3047, %v3045
    %v3144 = vpack.c.b16 %v3048, %v3046
    %v3145 = vpack.c.b16 %v3051, %v3049
    %v3146 = vpack.c.b16 %v3052, %v3050
    %v3147 = vpack.c.b16 %v3055, %v3053
    %v3148 = vpack.c.b16 %v3056, %v3054
    %v3149 = vpack.c.b16 %v3059, %v3057
    %v3150 = vpack.c.b16 %v3060, %v3058
    %v3151 = vpack.c.b16 %v3063, %v3061
    %v3152 = vpack.c.b16 %v3064, %v3062
    %v3153 = vpack.c.b16 %v3067, %v3065
    %v3154 = vpack.c.b16 %v3068, %v3066
    %v3155 = vpack.c.b16 %v3071, %v3069
    %v3156 = vpack.c.b16 %v3072, %v3070
    %v3157 = vpack.c.b16 %v3075, %v3073
    %v3158 = vpack.c.b16 %v3076, %v3074
    %v3159 = vpack.c.b16 %v3079, %v3077
    %v3160 = vpack.c.b16 %v3080, %v3078
    %v3161 = vpack.c.b16 %v3083, %v3081
    %v3162 = vpack.c.b16 %v3084, %v3082
    %v3163 = vpack.c.b16 %v3087, %v3085
    %v3164 = vpack.c.b16 %v3088, %v3086
    %v3165 = vpack.c.b16 %v3091, %v3089
    %v3166 = vpack.c.b16 %v3092, %v3090
    %v3167 = vpack.c.b16 %v3095, %v3093
    %v3168 = vpack.c.b16 %v3096, %v3094
    %v3169 = vpack.c.b16 %v3099, %v3097
    %v3170 = vpack.c.b16 %v3100, %v3098
    %v3171 = vpack.c.b16 %v3103, %v3101
    %v3172 = vpack.c.b16 %v3104, %v3102
    %v3173 = vpack.c.b16 %v3107, %v3105
    %v3174 = vpack.c.b16 %v3108, %v3106
    %v3175 = vpack.c.b16 %v3111, %v3109
    %v3176 = vpack.c.b16 %v3112, %v3110
    %3241 = vmatprep.subr.bf16.mxu0 %v3114
    %3242 = vmatpush1.bf16.msra.mxu0 %v3113
    %3243 = vmatprep.subr.bf16.mxu0 %v3116
    %3244 = vmatpush1.bf16.msra.mxu0 %v3115
    %3245 = vmatprep.subr.bf16.mxu0 %v3118
    %3246 = vmatpush1.bf16.msra.mxu0 %v3117
    %3247 = vmatprep.subr.bf16.mxu0 %v3120
    %3248 = vmatpush1.bf16.msra.mxu0 %v3119
    %3249 = vmatprep.subr.bf16.mxu0 %v3122
    %3250 = vmatpush1.bf16.msra.mxu0 %v3121
    %3251 = vmatprep.subr.bf16.mxu0 %v3124
    %3252 = vmatpush1.bf16.msra.mxu0 %v3123
    %3253 = vmatprep.subr.bf16.mxu0 %v3126
    %3254 = vmatpush1.bf16.msra.mxu0 %v3125
    %3255 = vmatprep.subr.bf16.mxu0 %v3128
    %3256 = vmatpush1.bf16.msra.mxu0 %v3127
    %3257 = vmatprep.subr.bf16.mxu0 %v3130
    %3258 = vmatpush1.bf16.msra.mxu0 %v3129
    %3259 = vmatprep.subr.bf16.mxu0 %v3132
    %3260 = vmatpush1.bf16.msra.mxu0 %v3131
    %3261 = vmatprep.subr.bf16.mxu0 %v3134
    %3262 = vmatpush1.bf16.msra.mxu0 %v3133
    %3263 = vmatprep.subr.bf16.mxu0 %v3136
    %3264 = vmatpush1.bf16.msra.mxu0 %v3135
    %3265 = vmatprep.subr.bf16.mxu0 %v3138
    %3266 = vmatpush1.bf16.msra.mxu0 %v3137
    %3267 = vmatprep.subr.bf16.mxu0 %v3140
    %3268 = vmatpush1.bf16.msra.mxu0 %v3139
    %3269 = vmatprep.subr.bf16.mxu0 %v3142
    %3270 = vmatpush1.bf16.msra.mxu0 %v3141
    %3271 = vmatprep.subr.bf16.mxu0 %v3144
    %3272 = vmatpush1.bf16.msra.mxu0 %v3143
    %3273 = vmatprep.mubr.bf16.mxu0 %v2750
    %3274 = vmatmul.mubr.bf16.gmra.mrb[0].mxu0 %v2749
    %v3275 = vpop.f32.mrb[0].mxu0
    %v3276 = vadd.f32 %v2914, %v3275
    %v3277 = vpop.f32.mrb[0].mxu0
    %v3278 = vadd.f32 %v2918, %v3277
    %v3279 = vpop.f32.mrb[0].mxu0
    %v3280 = vadd.f32 %v2914, %v3279
    %v3281 = vpop.f32.mrb[0].mxu0
    %v3282 = vadd.f32 %v2918, %v3281
    %3283 = vmatprep.mubr.bf16.mxu0 %v2754
    %3284 = vmatmul.mubr.bf16.gmra.mrb[0].mxu0 %v2753
    %v3285 = vpop.f32.mrb[0].mxu0
    %v3286 = vadd.f32 %v2914, %v3285
    %v3287 = vpop.f32.mrb[0].mxu0
    %v3288 = vadd.f32 %v2918, %v3287
    %v3289 = vpop.f32.mrb[0].mxu0
    %v3290 = vadd.f32 %v2914, %v3289
    %v3291 = vpop.f32.mrb[0].mxu0
    %v3292 = vadd.f32 %v2918, %v3291
    %3293 = vmatprep.mubr.bf16.mxu0 %v2758
    %3294 = vmatmul.mubr.bf16.gmra.mrb[0].mxu0 %v2757
    %v3295 = vpop.f32.mrb[0].mxu0
    %v3296 = vadd.f32 %v2914, %v3295
    %v3297 = vpop.f32.mrb[0].mxu0
    %v3298 = vadd.f32 %v2918, %v3297
    %v3299 = vpop.f32.mrb[0].mxu0
    %v3300 = vadd.f32 %v2914, %v3299
    %v3301 = vpop.f32.mrb[0].mxu0
    %v3302 = vadd.f32 %v2918, %v3301
    %3303 = vmatprep.mubr.bf16.mxu0 %v2762
    %3304 = vmatmul.mubr.bf16.gmra.mrb[0].mxu0 %v2761
    %v3305 = vpop.f32.mrb[0].mxu0
    %v3306 = vadd.f32 %v2914, %v3305
    %v3307 = vpop.f32.mrb[0].mxu0
    %v3308 = vadd.f32 %v2918, %v3307
    %v3309 = vpop.f32.mrb[0].mxu0
    %v3310 = vadd.f32 %v2914, %v3309
    %v3311 = vpop.f32.mrb[0].mxu0
    %v3312 = vadd.f32 %v2918, %v3311
    %3313 = vmatprep.mubr.bf16.mxu0 %v2766
    %3314 = vmatmul.mubr.bf16.gmra.mrb[0].mxu0 %v2765
    %v3315 = vpop.f32.mrb[0].mxu0
    %v3316 = vadd.f32 %v2914, %v3315
    %v3317 = vpop.f32.mrb[0].mxu0
    %v3318 = vadd.f32 %v2918, %v3317
    %v3319 = vpop.f32.mrb[0].mxu0
    %v3320 = vadd.f32 %v2914, %v3319
    %v3321 = vpop.f32.mrb[0].mxu0
    %v3322 = vadd.f32 %v2918, %v3321
    %3323 = vmatprep.mubr.bf16.mxu0 %v2770
    %3324 = vmatmul.mubr.bf16.gmra.mrb[0].mxu0 %v2769
    %v3325 = vpop.f32.mrb[0].mxu0
    %v3326 = vadd.f32 %v2914, %v3325
    %v3327 = vpop.f32.mrb[0].mxu0
    %v3328 = vadd.f32 %v2918, %v3327
    %v3329 = vpop.f32.mrb[0].mxu0
    %v3330 = vadd.f32 %v2914, %v3329
    %v3331 = vpop.f32.mrb[0].mxu0
    %v3332 = vadd.f32 %v2918, %v3331
    %3333 = vmatprep.mubr.bf16.mxu0 %v2774
    %3334 = vmatmul.mubr.bf16.gmra.mrb[0].mxu0 %v2773
    %v3335 = vpop.f32.mrb[0].mxu0
    %v3336 = vadd.f32 %v2914, %v3335
    %v3337 = vpop.f32.mrb[0].mxu0
    %v3338 = vadd.f32 %v2918, %v3337
    %v3339 = vpop.f32.mrb[0].mxu0
    %v3340 = vadd.f32 %v2914, %v3339
    %v3341 = vpop.f32.mrb[0].mxu0
    %v3342 = vadd.f32 %v2918, %v3341
    %3343 = vmatprep.mubr.bf16.mxu0 %v2778
    %3344 = vmatmul.mubr.bf16.gmra.mrb[0].mxu0 %v2777
    %v3345 = vpop.f32.mrb[0].mxu0
    %v3346 = vadd.f32 %v2914, %v3345
    %v3347 = vpop.f32.mrb[0].mxu0
    %v3348 = vadd.f32 %v2918, %v3347
    %v3349 = vpop.f32.mrb[0].mxu0
    %v3350 = vadd.f32 %v2914, %v3349
    %v3351 = vpop.f32.mrb[0].mxu0
    %v3352 = vadd.f32 %v2918, %v3351
    %3353 = vmatprep.mubr.bf16.mxu0 %v2782
    %3354 = vmatmul.mubr.bf16.gmra.mrb[0].mxu0 %v2781
    %v3355 = vpop.f32.mrb[0].mxu0
    %v3356 = vadd.f32 %v2914, %v3355
    %v3357 = vpop.f32.mrb[0].mxu0
    %v3358 = vadd.f32 %v2918, %v3357
    %v3359 = vpop.f32.mrb[0].mxu0
    %v3360 = vadd.f32 %v2914, %v3359
    %v3361 = vpop.f32.mrb[0].mxu0
    %v3362 = vadd.f32 %v2918, %v3361
    %3363 = vmatprep.mubr.bf16.mxu0 %v2786
    %3364 = vmatmul.mubr.bf16.gmra.mrb[0].mxu0 %v2785
    %v3365 = vpop.f32.mrb[0].mxu0
    %v3366 = vadd.f32 %v2914, %v3365
    %v3367 = vpop.f32.mrb[0].mxu0
    %v3368 = vadd.f32 %v2918, %v3367
    %v3369 = vpop.f32.mrb[0].mxu0
    %v3370 = vadd.f32 %v2914, %v3369
    %v3371 = vpop.f32.mrb[0].mxu0
    %v3372 = vadd.f32 %v2918, %v3371
    %3373 = vmatprep.mubr.bf16.mxu0 %v2790
    %3374 = vmatmul.mubr.bf16.gmra.mrb[0].mxu0 %v2789
    %v3375 = vpop.f32.mrb[0].mxu0
    %v3376 = vadd.f32 %v2914, %v3375
    %v3377 = vpop.f32.mrb[0].mxu0
    %v3378 = vadd.f32 %v2918, %v3377
    %v3379 = vpop.f32.mrb[0].mxu0
    %v3380 = vadd.f32 %v2914, %v3379
    %v3381 = vpop.f32.mrb[0].mxu0
    %v3382 = vadd.f32 %v2918, %v3381
    %3383 = vmatprep.mubr.bf16.mxu0 %v2794
    %3384 = vmatmul.mubr.bf16.gmra.mrb[0].mxu0 %v2793
    %v3385 = vpop.f32.mrb[0].mxu0
    %v3386 = vadd.f32 %v2914, %v3385
    %v3387 = vpop.f32.mrb[0].mxu0
    %v3388 = vadd.f32 %v2918, %v3387
    %v3389 = vpop.f32.mrb[0].mxu0
    %v3390 = vadd.f32 %v2914, %v3389
    %v3391 = vpop.f32.mrb[0].mxu0
    %v3392 = vadd.f32 %v2918, %v3391
    %3393 = vmatprep.mubr.bf16.mxu0 %v2798
    %3394 = vmatmul.mubr.bf16.gmra.mrb[0].mxu0 %v2797
    %v3395 = vpop.f32.mrb[0].mxu0
    %v3396 = vadd.f32 %v2914, %v3395
    %v3397 = vpop.f32.mrb[0].mxu0
    %v3398 = vadd.f32 %v2918, %v3397
    %v3399 = vpop.f32.mrb[0].mxu0
    %v3400 = vadd.f32 %v2914, %v3399
    %v3401 = vpop.f32.mrb[0].mxu0
    %v3402 = vadd.f32 %v2918, %v3401
    %3403 = vmatprep.mubr.bf16.mxu0 %v2802
    %3404 = vmatmul.mubr.bf16.gmra.mrb[0].mxu0 %v2801
    %v3405 = vpop.f32.mrb[0].mxu0
    %v3406 = vadd.f32 %v2914, %v3405
    %v3407 = vpop.f32.mrb[0].mxu0
    %v3408 = vadd.f32 %v2918, %v3407
    %v3409 = vpop.f32.mrb[0].mxu0
    %v3410 = vadd.f32 %v2914, %v3409
    %v3411 = vpop.f32.mrb[0].mxu0
    %v3412 = vadd.f32 %v2918, %v3411
    %3413 = vmatprep.mubr.bf16.mxu0 %v2806
    %3414 = vmatmul.mubr.bf16.gmra.mrb[0].mxu0 %v2805
    %v3415 = vpop.f32.mrb[0].mxu0
    %v3416 = vadd.f32 %v2914, %v3415
    %v3417 = vpop.f32.mrb[0].mxu0
    %v3418 = vadd.f32 %v2918, %v3417
    %v3419 = vpop.f32.mrb[0].mxu0
    %v3420 = vadd.f32 %v2914, %v3419
    %v3421 = vpop.f32.mrb[0].mxu0
    %v3422 = vadd.f32 %v2918, %v3421
    %3423 = vmatprep.mubr.bf16.mxu0 %v2810
    %3424 = vmatmul.mubr.bf16.gmra.mrb[0].mxu0 %v2809
    %v3425 = vpop.f32.mrb[0].mxu0
    %v3426 = vadd.f32 %v2914, %v3425
    %v3427 = vpop.f32.mrb[0].mxu0
    %v3428 = vadd.f32 %v2918, %v3427
    %v3429 = vpop.f32.mrb[0].mxu0
    %v3430 = vadd.f32 %v2914, %v3429
    %v3431 = vpop.f32.mrb[0].mxu0
    %v3432 = vadd.f32 %v2918, %v3431
    %3433 = vmatprep.mubr.bf16.mxu0 %v2814
    %3434 = vmatmul.mubr.bf16.gmra.mrb[0].mxu0 %v2813
    %v3435 = vpop.f32.mrb[0].mxu0
    %v3436 = vadd.f32 %v2914, %v3435
    %v3437 = vpop.f32.mrb[0].mxu0
    %v3438 = vadd.f32 %v2918, %v3437
    %v3439 = vpop.f32.mrb[0].mxu0
    %v3440 = vadd.f32 %v2914, %v3439
    %v3441 = vpop.f32.mrb[0].mxu0
    %v3442 = vadd.f32 %v2918, %v3441
    %3443 = vmatprep.mubr.bf16.mxu0 %v2818
    %3444 = vmatmul.mubr.bf16.gmra.mrb[0].mxu0 %v2817
    %v3445 = vpop.f32.mrb[0].mxu0
    %v3446 = vadd.f32 %v2914, %v3445
    %v3447 = vpop.f32.mrb[0].mxu0
    %v3448 = vadd.f32 %v2918, %v3447
    %v3449 = vpop.f32.mrb[0].mxu0
    %v3450 = vadd.f32 %v2914, %v3449
    %v3451 = vpop.f32.mrb[0].mxu0
    %v3452 = vadd.f32 %v2918, %v3451
    %3453 = vmatprep.mubr.bf16.mxu0 %v2822
    %3454 = vmatmul.mubr.bf16.gmra.mrb[0].mxu0 %v2821
    %v3455 = vpop.f32.mrb[0].mxu0
    %v3456 = vadd.f32 %v2914, %v3455
    %v3457 = vpop.f32.mrb[0].mxu0
    %v3458 = vadd.f32 %v2918, %v3457
    %v3459 = vpop.f32.mrb[0].mxu0
    %v3460 = vadd.f32 %v2914, %v3459
    %v3461 = vpop.f32.mrb[0].mxu0
    %v3462 = vadd.f32 %v2918, %v3461
    %3463 = vmatprep.mubr.bf16.mxu0 %v2826
    %3464 = vmatmul.mubr.bf16.gmra.mrb[0].mxu0 %v2825
    %v3465 = vpop.f32.mrb[0].mxu0
    %v3466 = vadd.f32 %v2914, %v3465
    %v3467 = vpop.f32.mrb[0].mxu0
    %v3468 = vadd.f32 %v2918, %v3467
    %v3469 = vpop.f32.mrb[0].mxu0
    %v3470 = vadd.f32 %v2914, %v3469
    %v3471 = vpop.f32.mrb[0].mxu0
    %v3472 = vadd.f32 %v2918, %v3471
    %3473 = vmatprep.mubr.bf16.mxu0 %v2830
    %3474 = vmatmul.mubr.bf16.gmra.mrb[0].mxu0 %v2829
    %v3475 = vpop.f32.mrb[0].mxu0
    %v3476 = vadd.f32 %v2914, %v3475
    %v3477 = vpop.f32.mrb[0].mxu0
    %v3478 = vadd.f32 %v2918, %v3477
    %v3479 = vpop.f32.mrb[0].mxu0
    %v3480 = vadd.f32 %v2914, %v3479
    %v3481 = vpop.f32.mrb[0].mxu0
    %v3482 = vadd.f32 %v2918, %v3481
    %3483 = vmatprep.mubr.bf16.mxu0 %v2834
    %3484 = vmatmul.mubr.bf16.gmra.mrb[0].mxu0 %v2833
    %v3485 = vpop.f32.mrb[0].mxu0
    %v3486 = vadd.f32 %v2914, %v3485
    %v3487 = vpop.f32.mrb[0].mxu0
    %v3488 = vadd.f32 %v2918, %v3487
    %v3489 = vpop.f32.mrb[0].mxu0
    %v3490 = vadd.f32 %v2914, %v3489
    %v3491 = vpop.f32.mrb[0].mxu0
    %v3492 = vadd.f32 %v2918, %v3491
    %3493 = vmatprep.mubr.bf16.mxu0 %v2838
    %3494 = vmatmul.mubr.bf16.gmra.mrb[0].mxu0 %v2837
    %v3495 = vpop.f32.mrb[0].mxu0
    %v3496 = vadd.f32 %v2914, %v3495
    %v3497 = vpop.f32.mrb[0].mxu0
    %v3498 = vadd.f32 %v2918, %v3497
    %v3499 = vpop.f32.mrb[0].mxu0
    %v3500 = vadd.f32 %v2914, %v3499
    %v3501 = vpop.f32.mrb[0].mxu0
    %v3502 = vadd.f32 %v2918, %v3501
    %3503 = vmatprep.mubr.bf16.mxu0 %v2842
    %3504 = vmatmul.mubr.bf16.gmra.mrb[0].mxu0 %v2841
    %v3505 = vpop.f32.mrb[0].mxu0
    %v3506 = vadd.f32 %v2914, %v3505
    %v3507 = vpop.f32.mrb[0].mxu0
    %v3508 = vadd.f32 %v2918, %v3507
    %v3509 = vpop.f32.mrb[0].mxu0
    %v3510 = vadd.f32 %v2914, %v3509
    %v3511 = vpop.f32.mrb[0].mxu0
    %v3512 = vadd.f32 %v2918, %v3511
    %3513 = vdwg.mxu0
    %3514 = vmatprep.subr.bf16.mxu0 %v3146
    %3515 = vmatpush1.bf16.msra.mxu0 %v3145
    %3516 = vmatprep.subr.bf16.mxu0 %v3148
    %3517 = vmatpush1.bf16.msra.mxu0 %v3147
    %3518 = vmatprep.subr.bf16.mxu0 %v3150
    %3519 = vmatpush1.bf16.msra.mxu0 %v3149
    %3520 = vmatprep.subr.bf16.mxu0 %v3152
    %3521 = vmatpush1.bf16.msra.mxu0 %v3151
    %3522 = vmatprep.subr.bf16.mxu0 %v3154
    %3523 = vmatpush1.bf16.msra.mxu0 %v3153
    %3524 = vmatprep.subr.bf16.mxu0 %v3156
    %3525 = vmatpush1.bf16.msra.mxu0 %v3155
    %3526 = vmatprep.subr.bf16.mxu0 %v3158
    %3527 = vmatpush1.bf16.msra.mxu0 %v3157
    %3528 = vmatprep.subr.bf16.mxu0 %v3160
    %3529 = vmatpush1.bf16.msra.mxu0 %v3159
    %3530 = vmatprep.subr.bf16.mxu0 %v3162
    %3531 = vmatpush1.bf16.msra.mxu0 %v3161
    %3532 = vmatprep.subr.bf16.mxu0 %v3164
    %3533 = vmatpush1.bf16.msra.mxu0 %v3163
    %3534 = vmatprep.subr.bf16.mxu0 %v3166
    %3535 = vmatpush1.bf16.msra.mxu0 %v3165
    %3536 = vmatprep.subr.bf16.mxu0 %v3168
    %3537 = vmatpush1.bf16.msra.mxu0 %v3167
    %3538 = vmatprep.subr.bf16.mxu0 %v3170
    %3539 = vmatpush1.bf16.msra.mxu0 %v3169
    %3540 = vmatprep.subr.bf16.mxu0 %v3172
    %3541 = vmatpush1.bf16.msra.mxu0 %v3171
    %3542 = vmatprep.subr.bf16.mxu0 %v3174
    %3543 = vmatpush1.bf16.msra.mxu0 %v3173
    %3544 = vmatprep.subr.bf16.mxu0 %v3176
    %3545 = vmatpush1.bf16.msra.mxu0 %v3175
    %3546 = vmatprep.mubr.bf16.mxu0 %v2752
    %3547 = vmatmul.mubr.bf16.gmra.mrb[0].mxu0 %v2751
    %v3548 = vpop.f32.mrb[0].mxu0
    %v3549 = vadd.f32 %v3276, %v3548
    %v3550 = vpop.f32.mrb[0].mxu0
    %v3551 = vadd.f32 %v3278, %v3550
    %v3552 = vpop.f32.mrb[0].mxu0
    %v3553 = vadd.f32 %v3280, %v3552
    %v3554 = vpop.f32.mrb[0].mxu0
    %v3555 = vadd.f32 %v3282, %v3554
    %3556 = vmatprep.mubr.bf16.mxu0 %v2756
    %3557 = vmatmul.mubr.bf16.gmra.mrb[0].mxu0 %v2755
    %v3558 = vpop.f32.mrb[0].mxu0
    %v3559 = vadd.f32 %v3286, %v3558
    %v3560 = vpop.f32.mrb[0].mxu0
    %v3561 = vadd.f32 %v3288, %v3560
    %v3562 = vpop.f32.mrb[0].mxu0
    %v3563 = vadd.f32 %v3290, %v3562
    %v3564 = vpop.f32.mrb[0].mxu0
    %v3565 = vadd.f32 %v3292, %v3564
    %3566 = vmatprep.mubr.bf16.mxu0 %v2760
    %3567 = vmatmul.mubr.bf16.gmra.mrb[0].mxu0 %v2759
    %v3568 = vpop.f32.mrb[0].mxu0
    %v3569 = vadd.f32 %v3296, %v3568
    %v3570 = vpop.f32.mrb[0].mxu0
    %v3571 = vadd.f32 %v3298, %v3570
    %v3572 = vpop.f32.mrb[0].mxu0
    %v3573 = vadd.f32 %v3300, %v3572
    %v3574 = vpop.f32.mrb[0].mxu0
    %v3575 = vadd.f32 %v3302, %v3574
    %3576 = vmatprep.mubr.bf16.mxu0 %v2764
    %3577 = vmatmul.mubr.bf16.gmra.mrb[0].mxu0 %v2763
    %v3578 = vpop.f32.mrb[0].mxu0
    %v3579 = vadd.f32 %v3306, %v3578
    %v3580 = vpop.f32.mrb[0].mxu0
    %v3581 = vadd.f32 %v3308, %v3580
    %v3582 = vpop.f32.mrb[0].mxu0
    %v3583 = vadd.f32 %v3310, %v3582
    %v3584 = vpop.f32.mrb[0].mxu0
    %v3585 = vadd.f32 %v3312, %v3584
    %3586 = vmatprep.mubr.bf16.mxu0 %v2768
    %3587 = vmatmul.mubr.bf16.gmra.mrb[0].mxu0 %v2767
    %v3588 = vpop.f32.mrb[0].mxu0
    %v3589 = vadd.f32 %v3316, %v3588
    %v3590 = vpop.f32.mrb[0].mxu0
    %v3591 = vadd.f32 %v3318, %v3590
    %v3592 = vpop.f32.mrb[0].mxu0
    %v3593 = vadd.f32 %v3320, %v3592
    %v3594 = vpop.f32.mrb[0].mxu0
    %v3595 = vadd.f32 %v3322, %v3594
    %3596 = vmatprep.mubr.bf16.mxu0 %v2772
    %3597 = vmatmul.mubr.bf16.gmra.mrb[0].mxu0 %v2771
    %v3598 = vpop.f32.mrb[0].mxu0
    %v3599 = vadd.f32 %v3326, %v3598
    %v3600 = vpop.f32.mrb[0].mxu0
    %v3601 = vadd.f32 %v3328, %v3600
    %v3602 = vpop.f32.mrb[0].mxu0
    %v3603 = vadd.f32 %v3330, %v3602
    %v3604 = vpop.f32.mrb[0].mxu0
    %v3605 = vadd.f32 %v3332, %v3604
    %3606 = vmatprep.mubr.bf16.mxu0 %v2776
    %3607 = vmatmul.mubr.bf16.gmra.mrb[0].mxu0 %v2775
    %v3608 = vpop.f32.mrb[0].mxu0
    %v3609 = vadd.f32 %v3336, %v3608
    %v3610 = vpop.f32.mrb[0].mxu0
    %v3611 = vadd.f32 %v3338, %v3610
    %v3612 = vpop.f32.mrb[0].mxu0
    %v3613 = vadd.f32 %v3340, %v3612
    %v3614 = vpop.f32.mrb[0].mxu0
    %v3615 = vadd.f32 %v3342, %v3614
    %3616 = vmatprep.mubr.bf16.mxu0 %v2780
    %3617 = vmatmul.mubr.bf16.gmra.mrb[0].mxu0 %v2779
    %v3618 = vpop.f32.mrb[0].mxu0
    %v3619 = vadd.f32 %v3346, %v3618
    %v3620 = vpop.f32.mrb[0].mxu0
    %v3621 = vadd.f32 %v3348, %v3620
    %v3622 = vpop.f32.mrb[0].mxu0
    %v3623 = vadd.f32 %v3350, %v3622
    %v3624 = vpop.f32.mrb[0].mxu0
    %v3625 = vadd.f32 %v3352, %v3624
    %3626 = vmatprep.mubr.bf16.mxu0 %v2784
    %3627 = vmatmul.mubr.bf16.gmra.mrb[0].mxu0 %v2783
    %v3628 = vpop.f32.mrb[0].mxu0
    %v3629 = vadd.f32 %v3356, %v3628
    %v3630 = vpop.f32.mrb[0].mxu0
    %v3631 = vadd.f32 %v3358, %v3630
    %v3632 = vpop.f32.mrb[0].mxu0
    %v3633 = vadd.f32 %v3360, %v3632
    %v3634 = vpop.f32.mrb[0].mxu0
    %v3635 = vadd.f32 %v3362, %v3634
    %3636 = vmatprep.mubr.bf16.mxu0 %v2788
    %3637 = vmatmul.mubr.bf16.gmra.mrb[0].mxu0 %v2787
    %v3638 = vpop.f32.mrb[0].mxu0
    %v3639 = vadd.f32 %v3366, %v3638
    %v3640 = vpop.f32.mrb[0].mxu0
    %v3641 = vadd.f32 %v3368, %v3640
    %v3642 = vpop.f32.mrb[0].mxu0
    %v3643 = vadd.f32 %v3370, %v3642
    %v3644 = vpop.f32.mrb[0].mxu0
    %v3645 = vadd.f32 %v3372, %v3644
    %3646 = vmatprep.mubr.bf16.mxu0 %v2792
    %3647 = vmatmul.mubr.bf16.gmra.mrb[0].mxu0 %v2791
    %v3648 = vpop.f32.mrb[0].mxu0
    %v3649 = vadd.f32 %v3376, %v3648
    %v3650 = vpop.f32.mrb[0].mxu0
    %v3651 = vadd.f32 %v3378, %v3650
    %v3652 = vpop.f32.mrb[0].mxu0
    %v3653 = vadd.f32 %v3380, %v3652
    %v3654 = vpop.f32.mrb[0].mxu0
    %v3655 = vadd.f32 %v3382, %v3654
    %3656 = vmatprep.mubr.bf16.mxu0 %v2796
    %3657 = vmatmul.mubr.bf16.gmra.mrb[0].mxu0 %v2795
    %v3658 = vpop.f32.mrb[0].mxu0
    %v3659 = vadd.f32 %v3386, %v3658
    %v3660 = vpop.f32.mrb[0].mxu0
    %v3661 = vadd.f32 %v3388, %v3660
    %v3662 = vpop.f32.mrb[0].mxu0
    %v3663 = vadd.f32 %v3390, %v3662
    %v3664 = vpop.f32.mrb[0].mxu0
    %v3665 = vadd.f32 %v3392, %v3664
    %3666 = vmatprep.mubr.bf16.mxu0 %v2800
    %3667 = vmatmul.mubr.bf16.gmra.mrb[0].mxu0 %v2799
    %v3668 = vpop.f32.mrb[0].mxu0
    %v3669 = vadd.f32 %v3396, %v3668
    %v3670 = vpop.f32.mrb[0].mxu0
    %v3671 = vadd.f32 %v3398, %v3670
    %v3672 = vpop.f32.mrb[0].mxu0
    %v3673 = vadd.f32 %v3400, %v3672
    %v3674 = vpop.f32.mrb[0].mxu0
    %v3675 = vadd.f32 %v3402, %v3674
    %3676 = vmatprep.mubr.bf16.mxu0 %v2804
    %3677 = vmatmul.mubr.bf16.gmra.mrb[0].mxu0 %v2803
    %v3678 = vpop.f32.mrb[0].mxu0
    %v3679 = vadd.f32 %v3406, %v3678
    %v3680 = vpop.f32.mrb[0].mxu0
    %v3681 = vadd.f32 %v3408, %v3680
    %v3682 = vpop.f32.mrb[0].mxu0
    %v3683 = vadd.f32 %v3410, %v3682
    %v3684 = vpop.f32.mrb[0].mxu0
    %v3685 = vadd.f32 %v3412, %v3684
    %3686 = vmatprep.mubr.bf16.mxu0 %v2808
    %3687 = vmatmul.mubr.bf16.gmra.mrb[0].mxu0 %v2807
    %v3688 = vpop.f32.mrb[0].mxu0
    %v3689 = vadd.f32 %v3416, %v3688
    %v3690 = vpop.f32.mrb[0].mxu0
    %v3691 = vadd.f32 %v3418, %v3690
    %v3692 = vpop.f32.mrb[0].mxu0
    %v3693 = vadd.f32 %v3420, %v3692
    %v3694 = vpop.f32.mrb[0].mxu0
    %v3695 = vadd.f32 %v3422, %v3694
    %3696 = vmatprep.mubr.bf16.mxu0 %v2812
    %3697 = vmatmul.mubr.bf16.gmra.mrb[0].mxu0 %v2811
    %v3698 = vpop.f32.mrb[0].mxu0
    %v3699 = vadd.f32 %v3426, %v3698
    %v3700 = vpop.f32.mrb[0].mxu0
    %v3701 = vadd.f32 %v3428, %v3700
    %v3702 = vpop.f32.mrb[0].mxu0
    %v3703 = vadd.f32 %v3430, %v3702
    %v3704 = vpop.f32.mrb[0].mxu0
    %v3705 = vadd.f32 %v3432, %v3704
    %3706 = vmatprep.mubr.bf16.mxu0 %v2816
    %3707 = vmatmul.mubr.bf16.gmra.mrb[0].mxu0 %v2815
    %v3708 = vpop.f32.mrb[0].mxu0
    %v3709 = vadd.f32 %v3436, %v3708
    %v3710 = vpop.f32.mrb[0].mxu0
    %v3711 = vadd.f32 %v3438, %v3710
    %v3712 = vpop.f32.mrb[0].mxu0
    %v3713 = vadd.f32 %v3440, %v3712
    %v3714 = vpop.f32.mrb[0].mxu0
    %v3715 = vadd.f32 %v3442, %v3714
    %3716 = vmatprep.mubr.bf16.mxu0 %v2820
    %3717 = vmatmul.mubr.bf16.gmra.mrb[0].mxu0 %v2819
    %v3718 = vpop.f32.mrb[0].mxu0
    %v3719 = vadd.f32 %v3446, %v3718
    %v3720 = vpop.f32.mrb[0].mxu0
    %v3721 = vadd.f32 %v3448, %v3720
    %v3722 = vpop.f32.mrb[0].mxu0
    %v3723 = vadd.f32 %v3450, %v3722
    %v3724 = vpop.f32.mrb[0].mxu0
    %v3725 = vadd.f32 %v3452, %v3724
    %3726 = vmatprep.mubr.bf16.mxu0 %v2824
    %3727 = vmatmul.mubr.bf16.gmra.mrb[0].mxu0 %v2823
    %v3728 = vpop.f32.mrb[0].mxu0
    %v3729 = vadd.f32 %v3456, %v3728
    %v3730 = vpop.f32.mrb[0].mxu0
    %v3731 = vadd.f32 %v3458, %v3730
    %v3732 = vpop.f32.mrb[0].mxu0
    %v3733 = vadd.f32 %v3460, %v3732
    %v3734 = vpop.f32.mrb[0].mxu0
    %v3735 = vadd.f32 %v3462, %v3734
    %3736 = vmatprep.mubr.bf16.mxu0 %v2828
    %3737 = vmatmul.mubr.bf16.gmra.mrb[0].mxu0 %v2827
    %v3738 = vpop.f32.mrb[0].mxu0
    %v3739 = vadd.f32 %v3466, %v3738
    %v3740 = vpop.f32.mrb[0].mxu0
    %v3741 = vadd.f32 %v3468, %v3740
    %v3742 = vpop.f32.mrb[0].mxu0
    %v3743 = vadd.f32 %v3470, %v3742
    %v3744 = vpop.f32.mrb[0].mxu0
    %v3745 = vadd.f32 %v3472, %v3744
    %3746 = vmatprep.mubr.bf16.mxu0 %v2832
    %3747 = vmatmul.mubr.bf16.gmra.mrb[0].mxu0 %v2831
    %v3748 = vpop.f32.mrb[0].mxu0
    %v3749 = vadd.f32 %v3476, %v3748
    %v3750 = vpop.f32.mrb[0].mxu0
    %v3751 = vadd.f32 %v3478, %v3750
    %v3752 = vpop.f32.mrb[0].mxu0
    %v3753 = vadd.f32 %v3480, %v3752
    %v3754 = vpop.f32.mrb[0].mxu0
    %v3755 = vadd.f32 %v3482, %v3754
    %3756 = vmatprep.mubr.bf16.mxu0 %v2836
    %3757 = vmatmul.mubr.bf16.gmra.mrb[0].mxu0 %v2835
    %v3758 = vpop.f32.mrb[0].mxu0
    %v3759 = vadd.f32 %v3486, %v3758
    %v3760 = vpop.f32.mrb[0].mxu0
    %v3761 = vadd.f32 %v3488, %v3760
    %v3762 = vpop.f32.mrb[0].mxu0
    %v3763 = vadd.f32 %v3490, %v3762
    %v3764 = vpop.f32.mrb[0].mxu0
    %v3765 = vadd.f32 %v3492, %v3764
    %3766 = vmatprep.mubr.bf16.mxu0 %v2840
    %3767 = vmatmul.mubr.bf16.gmra.mrb[0].mxu0 %v2839
    %v3768 = vpop.f32.mrb[0].mxu0
    %v3769 = vadd.f32 %v3496, %v3768
    %v3770 = vpop.f32.mrb[0].mxu0
    %v3771 = vadd.f32 %v3498, %v3770
    %v3772 = vpop.f32.mrb[0].mxu0
    %v3773 = vadd.f32 %v3500, %v3772
    %v3774 = vpop.f32.mrb[0].mxu0
    %v3775 = vadd.f32 %v3502, %v3774
    %3776 = vmatprep.mubr.bf16.mxu0 %v2844
    %3777 = vmatmul.mubr.bf16.gmra.mrb[0].mxu0 %v2843
    %v3778 = vpop.f32.mrb[0].mxu0
    %v3779 = vadd.f32 %v3506, %v3778
    %v3780 = vpop.f32.mrb[0].mxu0
    %v3781 = vadd.f32 %v3508, %v3780
    %v3782 = vpop.f32.mrb[0].mxu0
    %v3783 = vadd.f32 %v3510, %v3782
    %v3784 = vpop.f32.mrb[0].mxu0
    %v3785 = vadd.f32 %v3512, %v3784
    %3786 = vdwg.mxu0
    %v3787 = vpack.c.bf16 %v3553, %v3549
    %v3788 = vpack.c.bf16 %v3555, %v3551
    %v3789 = vpack.c.bf16 %v3563, %v3559
    %v3790 = vpack.c.bf16 %v3565, %v3561
    %v3791 = vpack.c.bf16 %v3573, %v3569
    %v3792 = vpack.c.bf16 %v3575, %v3571
    %v3793 = vpack.c.bf16 %v3583, %v3579
    %v3794 = vpack.c.bf16 %v3585, %v3581
    %v3795 = vpack.c.bf16 %v3593, %v3589
    %v3796 = vpack.c.bf16 %v3595, %v3591
    %v3797 = vpack.c.bf16 %v3603, %v3599
    %v3798 = vpack.c.bf16 %v3605, %v3601
    %v3799 = vpack.c.bf16 %v3613, %v3609
    %v3800 = vpack.c.bf16 %v3615, %v3611
    %v3801 = vpack.c.bf16 %v3623, %v3619
    %v3802 = vpack.c.bf16 %v3625, %v3621
    %v3803 = vpack.c.bf16 %v3633, %v3629
    %v3804 = vpack.c.bf16 %v3635, %v3631
    %v3805 = vpack.c.bf16 %v3643, %v3639
    %v3806 = vpack.c.bf16 %v3645, %v3641
    %v3807 = vpack.c.bf16 %v3653, %v3649
    %v3808 = vpack.c.bf16 %v3655, %v3651
    %v3809 = vpack.c.bf16 %v3663, %v3659
    %v3810 = vpack.c.bf16 %v3665, %v3661
    %v3811 = vpack.c.bf16 %v3673, %v3669
    %v3812 = vpack.c.bf16 %v3675, %v3671
    %v3813 = vpack.c.bf16 %v3683, %v3679
    %v3814 = vpack.c.bf16 %v3685, %v3681
    %v3815 = vpack.c.bf16 %v3693, %v3689
    %v3816 = vpack.c.bf16 %v3695, %v3691
    %v3817 = vpack.c.bf16 %v3703, %v3699
    %v3818 = vpack.c.bf16 %v3705, %v3701
    %v3819 = vpack.c.bf16 %v3713, %v3709
    %v3820 = vpack.c.bf16 %v3715, %v3711
    %v3821 = vpack.c.bf16 %v3723, %v3719
    %v3822 = vpack.c.bf16 %v3725, %v3721
    %v3823 = vpack.c.bf16 %v3733, %v3729
    %v3824 = vpack.c.bf16 %v3735, %v3731
    %v3825 = vpack.c.bf16 %v3743, %v3739
    %v3826 = vpack.c.bf16 %v3745, %v3741
    %v3827 = vpack.c.bf16 %v3753, %v3749
    %v3828 = vpack.c.bf16 %v3755, %v3751
    %v3829 = vpack.c.bf16 %v3763, %v3759
    %v3830 = vpack.c.bf16 %v3765, %v3761
    %v3831 = vpack.c.bf16 %v3773, %v3769
    %v3832 = vpack.c.bf16 %v3775, %v3771
    %v3833 = vpack.c.bf16 %v3783, %v3779
    %v3834 = vpack.c.bf16 %v3785, %v3781
    %v3851 = vunpack.c.l.b16 %v3787
    %v3852 = vunpack.c.l.b16 %v3788
    %v3853 = vunpack.c.h.b16 %v3787
    %v3854 = vunpack.c.h.b16 %v3788
    %v3855 = vunpack.c.l.b16 %v3789
    %v3856 = vunpack.c.l.b16 %v3790
    %v3857 = vunpack.c.h.b16 %v3789
    %v3858 = vunpack.c.h.b16 %v3790
    %v3859 = vunpack.c.l.b16 %v3791
    %v3860 = vunpack.c.l.b16 %v3792
    %v3861 = vunpack.c.h.b16 %v3791
    %v3862 = vunpack.c.h.b16 %v3792
    %v3863 = vunpack.c.l.b16 %v3793
    %v3864 = vunpack.c.l.b16 %v3794
    %v3865 = vunpack.c.h.b16 %v3793
    %v3866 = vunpack.c.h.b16 %v3794
    %v3867 = vunpack.c.l.b16 %v3795
    %v3868 = vunpack.c.l.b16 %v3796
    %v3869 = vunpack.c.h.b16 %v3795
    %v3870 = vunpack.c.h.b16 %v3796
    %v3871 = vunpack.c.l.b16 %v3797
    %v3872 = vunpack.c.l.b16 %v3798
    %v3873 = vunpack.c.h.b16 %v3797
    %v3874 = vunpack.c.h.b16 %v3798
    %v3875 = vunpack.c.l.b16 %v3799
    %v3876 = vunpack.c.l.b16 %v3800
    %v3877 = vunpack.c.h.b16 %v3799
    %v3878 = vunpack.c.h.b16 %v3800
    %v3879 = vunpack.c.l.b16 %v3801
    %v3880 = vunpack.c.l.b16 %v3802
    %v3881 = vunpack.c.h.b16 %v3801
    %v3882 = vunpack.c.h.b16 %v3802
    %v3883 = vpack.c.b16 %v3852, %v3851
    %v3884 = vpack.c.b16 %v3854, %v3853
    %v3885 = vpack.c.b16 %v3856, %v3855
    %v3886 = vpack.c.b16 %v3858, %v3857
    %v3887 = vpack.c.b16 %v3860, %v3859
    %v3888 = vpack.c.b16 %v3862, %v3861
    %v3889 = vpack.c.b16 %v3864, %v3863
    %v3890 = vpack.c.b16 %v3866, %v3865
    %v3891 = vpack.c.b16 %v3868, %v3867
    %v3892 = vpack.c.b16 %v3870, %v3869
    %v3893 = vpack.c.b16 %v3872, %v3871
    %v3894 = vpack.c.b16 %v3874, %v3873
    %v3895 = vpack.c.b16 %v3876, %v3875
    %v3896 = vpack.c.b16 %v3878, %v3877
    %v3897 = vpack.c.b16 %v3880, %v3879
    %v3898 = vpack.c.b16 %v3882, %v3881
    %3915 = vst [vmem:[#allocation11] sm:$0xff] %v3883
    %3916 = vst [vmem:[#allocation11 + $0x8] sm:$0xff] %v3884
    %3917 = vst [vmem:[#allocation11 + $0x10] sm:$0xff] %v3885
    %3918 = vst [vmem:[#allocation11 + $0x18] sm:$0xff] %v3886
    %3919 = vst [vmem:[#allocation11 + $0x20] sm:$0xff] %v3887
    %3920 = vst [vmem:[#allocation11 + $0x28] sm:$0xff] %v3888
    %3921 = vst [vmem:[#allocation11 + $0x30] sm:$0xff] %v3889
    %3922 = vst [vmem:[#allocation11 + $0x38] sm:$0xff] %v3890
    %3923 = vst [vmem:[#allocation11 + $0x40] sm:$0xff] %v3891
    %3924 = vst [vmem:[#allocation11 + $0x48] sm:$0xff] %v3892
    %3925 = vst [vmem:[#allocation11 + $0x50] sm:$0xff] %v3893
    %3926 = vst [vmem:[#allocation11 + $0x58] sm:$0xff] %v3894
    %3927 = vst [vmem:[#allocation11 + $0x60] sm:$0xff] %v3895
    %3928 = vst [vmem:[#allocation11 + $0x68] sm:$0xff] %v3896
    %3929 = vst [vmem:[#allocation11 + $0x70] sm:$0xff] %v3897
    %3930 = vst [vmem:[#allocation11 + $0x78] sm:$0xff] %v3898
    %v3947 = vunpack.c.l.b16 %v3803
    %v3948 = vunpack.c.l.b16 %v3804
    %v3949 = vunpack.c.h.b16 %v3803
    %v3950 = vunpack.c.h.b16 %v3804
    %v3951 = vunpack.c.l.b16 %v3805
    %v3952 = vunpack.c.l.b16 %v3806
    %v3953 = vunpack.c.h.b16 %v3805
    %v3954 = vunpack.c.h.b16 %v3806
    %v3955 = vunpack.c.l.b16 %v3807
    %v3956 = vunpack.c.l.b16 %v3808
    %v3957 = vunpack.c.h.b16 %v3807
    %v3958 = vunpack.c.h.b16 %v3808
    %v3959 = vunpack.c.l.b16 %v3809
    %v3960 = vunpack.c.l.b16 %v3810
    %v3961 = vunpack.c.h.b16 %v3809
    %v3962 = vunpack.c.h.b16 %v3810
    %v3963 = vunpack.c.l.b16 %v3811
    %v3964 = vunpack.c.l.b16 %v3812
    %v3965 = vunpack.c.h.b16 %v3811
    %v3966 = vunpack.c.h.b16 %v3812
    %v3967 = vunpack.c.l.b16 %v3813
    %v3968 = vunpack.c.l.b16 %v3814
    %v3969 = vunpack.c.h.b16 %v3813
    %v3970 = vunpack.c.h.b16 %v3814
    %v3971 = vunpack.c.l.b16 %v3815
    %v3972 = vunpack.c.l.b16 %v3816
    %v3973 = vunpack.c.h.b16 %v3815
    %v3974 = vunpack.c.h.b16 %v3816
    %v3975 = vunpack.c.l.b16 %v3817
    %v3976 = vunpack.c.l.b16 %v3818
    %v3977 = vunpack.c.h.b16 %v3817
    %v3978 = vunpack.c.h.b16 %v3818
    %v3979 = vpack.c.b16 %v3948, %v3947
    %v3980 = vpack.c.b16 %v3950, %v3949
    %v3981 = vpack.c.b16 %v3952, %v3951
    %v3982 = vpack.c.b16 %v3954, %v3953
    %v3983 = vpack.c.b16 %v3956, %v3955
    %v3984 = vpack.c.b16 %v3958, %v3957
    %v3985 = vpack.c.b16 %v3960, %v3959
    %v3986 = vpack.c.b16 %v3962, %v3961
    %v3987 = vpack.c.b16 %v3964, %v3963
    %v3988 = vpack.c.b16 %v3966, %v3965
    %v3989 = vpack.c.b16 %v3968, %v3967
    %v3990 = vpack.c.b16 %v3970, %v3969
    %v3991 = vpack.c.b16 %v3972, %v3971
    %v3992 = vpack.c.b16 %v3974, %v3973
    %v3993 = vpack.c.b16 %v3976, %v3975
    %v3994 = vpack.c.b16 %v3978, %v3977
    %4011 = vst [vmem:[#allocation12] sm:$0xff] %v3979
    %4012 = vst [vmem:[#allocation12 + $0x8] sm:$0xff] %v3980
    %4013 = vst [vmem:[#allocation12 + $0x10] sm:$0xff] %v3981
    %4014 = vst [vmem:[#allocation12 + $0x18] sm:$0xff] %v3982
    %4015 = vst [vmem:[#allocation12 + $0x20] sm:$0xff] %v3983
    %4016 = vst [vmem:[#allocation12 + $0x28] sm:$0xff] %v3984
    %4017 = vst [vmem:[#allocation12 + $0x30] sm:$0xff] %v3985
    %4018 = vst [vmem:[#allocation12 + $0x38] sm:$0xff] %v3986
    %4019 = vst [vmem:[#allocation12 + $0x40] sm:$0xff] %v3987
    %4020 = vst [vmem:[#allocation12 + $0x48] sm:$0xff] %v3988
    %4021 = vst [vmem:[#allocation12 + $0x50] sm:$0xff] %v3989
    %4022 = vst [vmem:[#allocation12 + $0x58] sm:$0xff] %v3990
    %4023 = vst [vmem:[#allocation12 + $0x60] sm:$0xff] %v3991
    %4024 = vst [vmem:[#allocation12 + $0x68] sm:$0xff] %v3992
    %4025 = vst [vmem:[#allocation12 + $0x70] sm:$0xff] %v3993
    %4026 = vst [vmem:[#allocation12 + $0x78] sm:$0xff] %v3994
    %v4043 = vunpack.c.l.b16 %v3819
    %v4044 = vunpack.c.l.b16 %v3820
    %v4045 = vunpack.c.h.b16 %v3819
    %v4046 = vunpack.c.h.b16 %v3820
    %v4047 = vunpack.c.l.b16 %v3821
    %v4048 = vunpack.c.l.b16 %v3822
    %v4049 = vunpack.c.h.b16 %v3821
    %v4050 = vunpack.c.h.b16 %v3822
    %v4051 = vunpack.c.l.b16 %v3823
    %v4052 = vunpack.c.l.b16 %v3824
    %v4053 = vunpack.c.h.b16 %v3823
    %v4054 = vunpack.c.h.b16 %v3824
    %v4055 = vunpack.c.l.b16 %v3825
    %v4056 = vunpack.c.l.b16 %v3826
    %v4057 = vunpack.c.h.b16 %v3825
    %v4058 = vunpack.c.h.b16 %v3826
    %v4059 = vunpack.c.l.b16 %v3827
    %v4060 = vunpack.c.l.b16 %v3828
    %v4061 = vunpack.c.h.b16 %v3827
    %v4062 = vunpack.c.h.b16 %v3828
    %v4063 = vunpack.c.l.b16 %v3829
    %v4064 = vunpack.c.l.b16 %v3830
    %v4065 = vunpack.c.h.b16 %v3829
    %v4066 = vunpack.c.h.b16 %v3830
    %v4067 = vunpack.c.l.b16 %v3831
    %v4068 = vunpack.c.l.b16 %v3832
    %v4069 = vunpack.c.h.b16 %v3831
    %v4070 = vunpack.c.h.b16 %v3832
    %v4071 = vunpack.c.l.b16 %v3833
    %v4072 = vunpack.c.l.b16 %v3834
    %v4073 = vunpack.c.h.b16 %v3833
    %v4074 = vunpack.c.h.b16 %v3834
    %v4075 = vpack.c.b16 %v4044, %v4043
    %v4076 = vpack.c.b16 %v4046, %v4045
    %v4077 = vpack.c.b16 %v4048, %v4047
    %v4078 = vpack.c.b16 %v4050, %v4049
    %v4079 = vpack.c.b16 %v4052, %v4051
    %v4080 = vpack.c.b16 %v4054, %v4053
    %v4081 = vpack.c.b16 %v4056, %v4055
    %v4082 = vpack.c.b16 %v4058, %v4057
    %v4083 = vpack.c.b16 %v4060, %v4059
    %v4084 = vpack.c.b16 %v4062, %v4061
    %v4085 = vpack.c.b16 %v4064, %v4063
    %v4086 = vpack.c.b16 %v4066, %v4065
    %v4087 = vpack.c.b16 %v4068, %v4067
    %v4088 = vpack.c.b16 %v4070, %v4069
    %v4089 = vpack.c.b16 %v4072, %v4071
    %v4090 = vpack.c.b16 %v4074, %v4073
    %4107 = vst [vmem:[#allocation14] sm:$0xff] %v4075
    %4108 = vst [vmem:[#allocation14 + $0x8] sm:$0xff] %v4076
    %4109 = vst [vmem:[#allocation14 + $0x10] sm:$0xff] %v4077
    %4110 = vst [vmem:[#allocation14 + $0x18] sm:$0xff] %v4078
    %4111 = vst [vmem:[#allocation14 + $0x20] sm:$0xff] %v4079
    %4112 = vst [vmem:[#allocation14 + $0x28] sm:$0xff] %v4080
    %4113 = vst [vmem:[#allocation14 + $0x30] sm:$0xff] %v4081
    %4114 = vst [vmem:[#allocation14 + $0x38] sm:$0xff] %v4082
    %4115 = vst [vmem:[#allocation14 + $0x40] sm:$0xff] %v4083
    %4116 = vst [vmem:[#allocation14 + $0x48] sm:$0xff] %v4084
    %4117 = vst [vmem:[#allocation14 + $0x50] sm:$0xff] %v4085
    %4118 = vst [vmem:[#allocation14 + $0x58] sm:$0xff] %v4086
    %4119 = vst [vmem:[#allocation14 + $0x60] sm:$0xff] %v4087
    %4120 = vst [vmem:[#allocation14 + $0x68] sm:$0xff] %v4088
    %4121 = vst [vmem:[#allocation14 + $0x70] sm:$0xff] %v4089
    %4122 = vst [vmem:[#allocation14 + $0x78] sm:$0xff] %v4090
    // Predicated region
    $region50: #{tpu_custom_call.1} parent=1 // pred_check
      _
    $region51: #{tpu_custom_call.1} parent=1 // pred_check_branch
      %4124 = sbr.rel (0) target = $region53
    $region52: #{tpu_custom_call.1} parent=1 // pred_region
      %s4126 = ssub.s32 2048, 2048
      %4127 = vsyncadd [#allocation4], %s4126
      %s4128 = sshll.u32 [#allocation11], 4
      %s4129 = int_to_ptr.vmem [resolvable:$true] %s4128
      %4134 = dma.vmem_to_hbm [thread:$0]  %s4129, 2048, %s7, [#allocation4], 128, 128, 8
    $region53: #{tpu_custom_call.1} parent=1 // pred_fallthru
      _
    // Predicated region
    $region54: #{tpu_custom_call.1} parent=1 // pred_check
      _
    $region55: #{tpu_custom_call.1} parent=1 // pred_check_branch
      %4136 = sbr.rel (0) target = $region57
    $region56: #{tpu_custom_call.1} parent=1 // pred_region
      %s4138 = ssub.s32 2048, 2048
      %4139 = vsyncadd [#allocation13], %s4138
      %s4140 = sshll.u32 [#allocation12], 4
      %s4141 = int_to_ptr.vmem [resolvable:$true] %s4140
      %4146 = dma.vmem_to_hbm [thread:$0]  %s4141, 2048, %s8, [#allocation13], 128, 128, 8
    $region57: #{tpu_custom_call.1} parent=1 // pred_fallthru
      _
    // Predicated region
    $region58: #{tpu_custom_call.1} parent=1 // pred_check
      _
    $region59: #{tpu_custom_call.1} parent=1 // pred_check_branch
      %4148 = sbr.rel (0) target = $region61
    $region60: #{tpu_custom_call.1} parent=1 // pred_region
      %s4150 = ssub.s32 2048, 2048
      %4151 = vsyncadd [#allocation13], %s4150
      %s4152 = sshll.u32 [#allocation14], 4
      %s4153 = int_to_ptr.vmem [resolvable:$true] %s4152
      %4158 = dma.vmem_to_hbm [thread:$0]  %s4153, 2048, %s9, [#allocation13], 128, 128, 8
    $region61: #{tpu_custom_call.1} parent=1 // pred_fallthru
      _
    // Predicated region
    $region62: #{tpu_custom_call.1} parent=1 // pred_check
      _
    $region63: #{tpu_custom_call.1} parent=1 // pred_check_branch
      %4160 = sbr.rel (0) target = $region65
    $region64: #{tpu_custom_call.1} parent=1 // pred_region
      %4161 = dma.done [#allocation4], 2048
    $region65: #{tpu_custom_call.1} parent=1 // pred_fallthru
      _
    // Predicated region
    $region66: #{tpu_custom_call.1} parent=1 // pred_check
      _
    $region67: #{tpu_custom_call.1} parent=1 // pred_check_branch
      %4163 = sbr.rel (0) target = $region69
    $region68: #{tpu_custom_call.1} parent=1 // pred_region
      %4164 = dma.done [#allocation13], 2048
    $region69: #{tpu_custom_call.1} parent=1 // pred_fallthru
      _
    // Predicated region
    $region70: #{tpu_custom_call.1} parent=1 // pred_check
      _
    $region71: #{tpu_custom_call.1} parent=1 // pred_check_branch
      %4166 = sbr.rel (0) target = $region73
    $region72: #{tpu_custom_call.1} parent=1 // pred_region
      %4167 = dma.done [#allocation13], 2048
    $region73: #{tpu_custom_call.1} parent=1 // pred_fallthru
      _
    %4168 = vsyncpa [#allocation3], 1
    %4169 = vsyncpa [#allocation6], 1
    %4170 = vsyncpa [#allocation9], 1
    %4171 = vsyncpa [#allocation4], 1
    %4172 = vsyncpa [#allocation13], 1

</llo_original>
